<compile_context>
chip_gen: v5e
topology: v5e:2x2
jax: 0.10.0
libtpu: 0.0.40
codegen_flags: <defaults>
</compile_context>

<pallas_src>
import numpy as np
import jax
import jax.numpy as jnp
from jax import lax
from jax.experimental import pallas as pl
from jax.experimental.pallas import tpu as pltpu

# ------------------------- problem sizes -------------------------
B, T, F_IN = 2, 16, 8          # batch, timesteps, input features
C1, C2 = 16, 16                # conv out channels (C2 == lstm_input_size)
K = 3                          # conv kernel size, padding=1, stride=1 ("same" length)
PAD = (K - 1) // 2
HID = 32                       # LSTM hidden size
OUT = 10                       # linear1_output_size (N_LABELS)
OUT_PAD = 128                  # lane-dense output slab width (== 4*HID, convenient)
BN_EPS = 1e-5
NEG_BIG = -1e30                # logit pad value so padded lanes vanish in softmax

# small f32 parameter slab row layout
ROW_BLSTM = 0                  # (1, 4H)  gate-reordered combined LSTM bias
ROW_BLIN = 1                   # (1, 128) linear bias, NEG_BIG in padded lanes
ROW_G1, ROW_BE1 = 2, 3         # (1, C1)  bn1 gamma / beta in lanes [0:C1]
ROW_G2, ROW_BE2 = 4, 5         # (1, C2)  bn2 gamma / beta in lanes [0:C2]
ROW_H0 = 6                     # (B, H)   initial hidden in lanes [0:H]
ROW_C0 = ROW_H0 + B            # (B, H)   initial cell   in lanes [0:H]
SMALL_ROWS = ROW_C0 + B

VMEM_SPEC = pl.BlockSpec(memory_space=pltpu.MemorySpace.VMEM)


# ------------------------- fused kernel -------------------------
def _shift_time(v, offset):
    # v: (T, B, C); row t of the result equals v[t + offset], zero outside the range.
    if offset == 0:
        return v
    z = jnp.zeros((abs(offset),) + v.shape[1:], v.dtype)
    if offset > 0:
        return jnp.concatenate([v[offset:], z], axis=0)
    return jnp.concatenate([z, v[:offset]], axis=0)


def _conv_bn_relu(h_tm_bf16, w_bf16, gamma, beta):
    # In-register im2col over the time axis ("same" zero padding) -> one MXU matmul.
    # h_tm_bf16: (T, B, Cin) bf16; w_bf16: (K*Cin, Cout) bf16 (k-major rows).
    cols = jnp.concatenate([_shift_time(h_tm_bf16, k - PAD) for k in range(K)],
                           axis=-1)                                   # (T, B, K*Cin)
    acc = jnp.einsum("tbc,cd->tbd", cols, w_bf16,
                     preferred_element_type=jnp.float32)              # (T, B, Cout) f32
    # BatchNorm1d (training mode): biased batch stats over (T, B) per channel.
    # (conv bias omitted: exactly cancelled by the mean subtraction below)
    mean = jnp.mean(acc, axis=(0, 1), keepdims=True)
    var = jnp.mean((acc - mean) ** 2, axis=(0, 1), keepdims=True)
    y = (acc - mean) * lax.rsqrt(var + BN_EPS) * gamma + beta
    return jnp.maximum(y, 0.0)                                        # ReLU, f32


def cnn_lstm_kernel(x_ref, len_ref, w1_ref, w2_ref, mmw_ref, sp_ref, o_ref):
    # x_ref: (T, B, F_IN) f32 time-major; len_ref: (B, 1) int32
    # w1_ref: (K*F_IN, C1) bf16; w2_ref: (K*C1, C2) bf16
    # mmw_ref: (C2 + 2*HID, 128) bf16 = [wih_t ; whh_t ; wlin_pad] (gates reordered i,f,o,g)
    # sp_ref:  (SMALL_ROWS, 128) f32 small-parameter slab
    # o_ref:   (T*B, OUT_PAD) f32 lane-dense output slab

    sp = sp_ref[...]
    b_lstm = sp[ROW_BLSTM:ROW_BLSTM + 1, :]                 # (1, 4H)
    blin = sp[ROW_BLIN:ROW_BLIN + 1, :]                     # (1, 128)
    g1 = sp[ROW_G1:ROW_G1 + 1, 0:C1]
    be1 = sp[ROW_BE1:ROW_BE1 + 1, 0:C1]
    g2 = sp[ROW_G2:ROW_G2 + 1, 0:C2]
    be2 = sp[ROW_BE2:ROW_BE2 + 1, 0:C2]
    h = sp[ROW_H0:ROW_H0 + B, 0:HID]                        # (B, H) initial hidden
    c = sp[ROW_C0:ROW_C0 + B, 0:HID]                        # (B, H) initial cell

    mw = mmw_ref[...]                                       # (C2 + 2H, 128) bf16
    wih = mw[0:C2, :]                                       # (C2, 4H)
    whh = mw[C2:C2 + HID, :]                                # (H, 4H)
    wlin = mw[C2 + HID:C2 + 2 * HID, :]                     # (H, OUT_PAD)

    # ---- CNN stack (time-major, single im2col matmul per conv) ----
    h1 = _conv_bn_relu(x_ref[...].astype(jnp.bfloat16), w1_ref[...], g1, be1)   # (T,B,C1)
    h2 = _conv_bn_relu(h1.astype(jnp.bfloat16), w2_ref[...], g2, be2)           # (T,B,C2)

    # ---- hoisted LSTM input projection, time-major, bias folded in once ----
    gates_x = jnp.einsum("tbc,cg->tbg", h2.astype(jnp.bfloat16), wih,
                         preferred_element_type=jnp.float32) + b_lstm           # (T,B,4H)

    # ---- packed-sequence validity masks, precomputed off the serial path ----
    lens = len_ref[...]                                     # (B, 1) int32, loaded once
    valid = [lens > t for t in range(T)]

    # ---- LSTM recurrence, fully unrolled; gate order (i, f, o, g) ----
    outs = []
    for t in range(T):
        g = gates_x[t] + jnp.dot(h.astype(jnp.bfloat16), whh,
                                 preferred_element_type=jnp.float32)            # (B,4H)
        sg = jax.nn.sigmoid(g[:, 0:3 * HID])                # i, f, o in one pass
        i_g = sg[:, 0:HID]
        f_g = sg[:, HID:2 * HID]
        o_g = sg[:, 2 * HID:3 * HID]
        g_g = jnp.tanh(g[:, 3 * HID:4 * HID])               # cell candidate only
        c_new = f_g * c + i_g * g_g
        h_new = o_g * jnp.tanh(c_new)
        h = jnp.where(valid[t], h_new, h)
        c = jnp.where(valid[t], c_new, c)
        outs.append(jnp.where(valid[t], h_new, 0.0))        # pad_packed -> zeros

    # ---- linear + log_softmax: one (T*B, H) x (H, 128) matmul, lane-dense store ----
    hall = jnp.concatenate(outs, axis=0)                    # (T*B, H), register-resident
    y = jnp.dot(hall.astype(jnp.bfloat16), wlin,
                preferred_element_type=jnp.float32) + blin  # (T*B, 128)
    m = jnp.max(y, axis=-1, keepdims=True)                  # padded lanes hold -1e30
    e = jnp.exp(y - m)
    o_ref[...] = (y - m) - jnp.log(jnp.sum(e, axis=-1, keepdims=True))


# ------------------------- wrapper -------------------------
def cnn_lstm_forward(params, x, lengths_x):
    # x: (B, T, F_IN); lengths_x: (B,)  ->  ((T, B, OUT), lengths_x)
    x_tm = jnp.transpose(x, (1, 0, 2))                      # time-major (layout plumbing)
    out_pad = pl.pallas_call(
        cnn_lstm_kernel,
        out_shape=jax.ShapeDtypeStruct((T * B, OUT_PAD), jnp.float32),
        in_specs=[VMEM_SPEC] * 6,
        out_specs=VMEM_SPEC,
    )(x_tm,
      lengths_x.reshape(B, 1).astype(jnp.int32),
      params["w1_k"], params["w2_k"], params["mmw_k"], params["small_k"])
    out = out_pad.reshape(T, B, OUT_PAD)[:, :, :OUT]        # slice lane padding off
    return out, lengths_x


# ------------------------- deterministic parameter init -------------------------
def sample(shape, gain, rng):
    flat_shape = (shape[0], int(np.prod(shape[1:])))
    a = rng.normal(0.0, 1.0, flat_shape)
    u, _, v = np.linalg.svd(a, full_matrices=False)
    q = u if u.shape == flat_shape else v
    q = q.reshape(shape)
    return np.asarray(gain * q, dtype=np.float32)


def make_params():
    rng = np.random.default_rng(0)

    def kaiming_conv(c_out, c_in, k):
        std = np.sqrt(2.0 / (c_in * k))
        return rng.normal(0.0, std, (c_out, c_in, k)).astype(np.float32)

    def uniform(shape, bound):
        return rng.uniform(-bound, bound, shape).astype(np.float32)

    p = {}
    # Conv1 + BN1 (reference copies)
    w1 = kaiming_conv(C1, F_IN, K)                               # torch (Cout, Cin, K)
    w1_kco = np.transpose(w1, (2, 1, 0))                         # (K, Cin, Cout)
    p["w1"] = jnp.asarray(w1_kco)
    p["b1"] = jnp.asarray(uniform((1, C1), 1.0 / np.sqrt(F_IN * K)))
    g1 = np.ones(C1, np.float32); be1 = np.zeros(C1, np.float32)
    p["g1"] = jnp.asarray(g1.reshape(1, C1)); p["beta1"] = jnp.asarray(be1.reshape(1, C1))
    # Conv2 + BN2
    w2 = kaiming_conv(C2, C1, K)
    w2_kco = np.transpose(w2, (2, 1, 0))
    p["w2"] = jnp.asarray(w2_kco)
    p["b2"] = jnp.asarray(uniform((1, C2), 1.0 / np.sqrt(C1 * K)))
    g2 = np.ones(C2, np.float32); be2 = np.zeros(C2, np.float32)
    p["g2"] = jnp.asarray(g2.reshape(1, C2)); p["beta2"] = jnp.asarray(be2.reshape(1, C2))
    # LSTM (1 layer, unidirectional; torch gate order i,f,g,o; weights (4H, I))
    bnd = 1.0 / np.sqrt(HID)
    wih = uniform((4 * HID, C2), bnd)
    whh = uniform((4 * HID, HID), bnd)
    bih = uniform((4 * HID,), bnd)
    bhh = uniform((4 * HID,), bnd)
    b_lstm = bih + bhh
    p["wih_t"] = jnp.asarray(wih.T)                              # (I, 4H)
    p["whh_t"] = jnp.asarray(whh.T)                              # (H, 4H)
    p["b_lstm"] = jnp.asarray(b_lstm.reshape(1, -1))             # (1, 4H)
    # h_0 / c_0: orthogonal * sqrt(2)
    h0 = sample((1, B, HID), np.sqrt(2.0), rng)[0]
    c0 = sample((1, B, HID), np.sqrt(2.0), rng)[0]
    p["h0"] = jnp.asarray(h0); p["c0"] = jnp.asarray(c0)
    # Linear (xavier_uniform weight, torch-default uniform bias)
    xav = np.sqrt(6.0 / (HID + OUT))
    wlin = uniform((OUT, HID), xav)
    blin = uniform((OUT,), 1.0 / np.sqrt(HID))
    p["wlin_t"] = jnp.asarray(wlin.T)                            # (H, O)  (reference)
    p["blin"] = jnp.asarray(blin)                                # (O,)    (reference)

    # ---------------- kernel-packed params ----------------
    # im2col conv weights, bf16 MXU operands
    p["w1_k"] = jnp.asarray(w1_kco.reshape(K * F_IN, C1), dtype=jnp.bfloat16)
    p["w2_k"] = jnp.asarray(w2_kco.reshape(K * C1, C2), dtype=jnp.bfloat16)
    # gate reorder (i,f,g,o) -> (i,f,o,g): sigmoid covers a contiguous 3H slice
    perm = np.concatenate([np.arange(0, HID), np.arange(HID, 2 * HID),
                           np.arange(3 * HID, 4 * HID), np.arange(2 * HID, 3 * HID)])
    wih_r = wih.T[:, perm]                                       # (C2, 4H)
    whh_r = whh.T[:, perm]                                       # (H, 4H)
    wlin_pad = np.zeros((HID, OUT_PAD), np.float32)
    wlin_pad[:, :OUT] = wlin.T
    p["mmw_k"] = jnp.asarray(np.concatenate([wih_r, whh_r, wlin_pad], axis=0),
                             dtype=jnp.bfloat16)                 # (C2 + 2H, 128)
    # f32 small-parameter slab (biases, BN affine, initial state)
    small = np.zeros((SMALL_ROWS, OUT_PAD), np.float32)
    small[ROW_BLSTM, :] = b_lstm[perm]
    small[ROW_BLIN, :] = NEG_BIG
    small[ROW_BLIN, :OUT] = blin
    small[ROW_G1, :C1] = g1
    small[ROW_BE1, :C1] = be1
    small[ROW_G2, :C2] = g2
    small[ROW_BE2, :C2] = be2
    small[ROW_H0:ROW_H0 + B, :HID] = h0
    small[ROW_C0:ROW_C0 + B, :HID] = c0
    p["small_k"] = jnp.asarray(small)
    return p


# ------------------------- pure-JAX reference -------------------------
def reference_forward(p, x, lengths):
    def conv_ref(h, w_kco, bias, gamma, beta):
        xp = jnp.pad(h, ((0, 0), (PAD, PAD), (0, 0)))
        acc = sum(jnp.einsum("btc,co->bto", xp[:, k:k + T, :], w_kco[k]) for k in range(K))
        acc = acc + bias
        mean = jnp.mean(acc, axis=(0, 1), keepdims=True)
        var = jnp.mean((acc - mean) ** 2, axis=(0, 1), keepdims=True)
        y = (acc - mean) / jnp.sqrt(var + BN_EPS) * gamma + beta
        return jnp.maximum(y, 0.0)

    h = conv_ref(x, p["w1"], p["b1"], p["g1"], p["beta1"])
    h = conv_ref(h, p["w2"], p["b2"], p["g2"], p["beta2"])       # (B, T, C2)

    gates_x = jnp.einsum("btc,cg->btg", h, p["wih_t"]) + p["b_lstm"]   # (B, T, 4H)
    hs, cs = p["h0"], p["c0"]
    outs = []
    for t in range(T):
        g = gates_x[:, t, :] + hs @ p["whh_t"]
        i_g = jax.nn.sigmoid(g[:, 0:HID])
        f_g = jax.nn.sigmoid(g[:, HID:2 * HID])
        g_g = jnp.tanh(g[:, 2 * HID:3 * HID])
        o_g = jax.nn.sigmoid(g[:, 3 * HID:4 * HID])
        c_new = f_g * cs + i_g * g_g
        h_new = o_g * jnp.tanh(c_new)
        valid = (lengths > t)[:, None]
        hs = jnp.where(valid, h_new, hs)
        cs = jnp.where(valid, c_new, cs)
        outs.append(jnp.where(valid, h_new, 0.0))
    hseq = jnp.stack(outs, axis=0)                               # (T, B, H)

    y = hseq @ p["wlin_t"] + p["blin"]
    return jax.nn.log_softmax(y, axis=-1)                        # (T, B, OUT)


# ------------------------- main -------------------------
if __name__ == "__main__":
    key = jax.random.PRNGKey(0)
    x = jax.random.normal(key, (B, T, F_IN), dtype=jnp.float32)
    # enforce_sorted=True path: descending lengths, max length == T
    lengths_x = jnp.array([T, T - 3], dtype=jnp.int32)

    params = make_params()
    fwd = jax.jit(cnn_lstm_forward)
    out, lengths_out = fwd(params, x, lengths_x)
    out = jax.block_until_ready(out)

    ref = jax.block_until_ready(reference_forward(params, x, lengths_x))
    np.testing.assert_allclose(np.asarray(out), np.asarray(ref), rtol=3e-2, atol=3e-2)
    assert out.shape == (T, B, OUT)
    assert np.array_equal(np.asarray(lengths_out), np.asarray(lengths_x))

    print("KERNEL_OK")
</pallas_src>

<mosaic_0001>
module attributes {stable_mosaic.version = 11 : i64} {
  func.func @cnn_lstm_kernel(%arg0: memref<16x2x8xf32, #tpu.memory_space<vmem>>, %arg1: memref<2x1xi32, #tpu.memory_space<vmem>>, %arg2: memref<24x16xbf16, #tpu.memory_space<vmem>>, %arg3: memref<48x16xbf16, #tpu.memory_space<vmem>>, %arg4: memref<80x128xbf16, #tpu.memory_space<vmem>>, %arg5: memref<10x128xf32, #tpu.memory_space<vmem>>, %arg6: memref<32x128xf32, #tpu.memory_space<vmem>>) attributes {dimension_semantics = [], scalar_prefetch = 0 : i64, scratch_operands = 0 : i64, tpu.core_type = #tpu.core_type<tc>} {
    %c0 = arith.constant 0 : index
    %c0_0 = arith.constant 0 : index
    %0 = vector.load %arg5[%c0, %c0_0] : memref<10x128xf32, #tpu.memory_space<vmem>>, vector<10x128xf32>
    %1 = vector.extract_strided_slice %0 {offsets = [0, 0], sizes = [1, 128], strides = [1, 1]} : vector<10x128xf32> to vector<1x128xf32>
    %2 = vector.extract_strided_slice %0 {offsets = [1, 0], sizes = [1, 128], strides = [1, 1]} : vector<10x128xf32> to vector<1x128xf32>
    %3 = vector.extract_strided_slice %0 {offsets = [2, 0], sizes = [1, 16], strides = [1, 1]} : vector<10x128xf32> to vector<1x16xf32>
    %4 = vector.extract_strided_slice %0 {offsets = [3, 0], sizes = [1, 16], strides = [1, 1]} : vector<10x128xf32> to vector<1x16xf32>
    %5 = vector.extract_strided_slice %0 {offsets = [4, 0], sizes = [1, 16], strides = [1, 1]} : vector<10x128xf32> to vector<1x16xf32>
    %6 = vector.extract_strided_slice %0 {offsets = [5, 0], sizes = [1, 16], strides = [1, 1]} : vector<10x128xf32> to vector<1x16xf32>
    %7 = vector.extract_strided_slice %0 {offsets = [6, 0], sizes = [2, 32], strides = [1, 1]} : vector<10x128xf32> to vector<2x32xf32>
    %8 = vector.extract_strided_slice %0 {offsets = [8, 0], sizes = [2, 32], strides = [1, 1]} : vector<10x128xf32> to vector<2x32xf32>
    %c0_1 = arith.constant 0 : index
    %c0_2 = arith.constant 0 : index
    %9 = vector.load %arg4[%c0_1, %c0_2] : memref<80x128xbf16, #tpu.memory_space<vmem>>, vector<80x128xbf16>
    %10 = vector.extract_strided_slice %9 {offsets = [0, 0], sizes = [16, 128], strides = [1, 1]} : vector<80x128xbf16> to vector<16x128xbf16>
    %11 = vector.extract_strided_slice %9 {offsets = [16, 0], sizes = [32, 128], strides = [1, 1]} : vector<80x128xbf16> to vector<32x128xbf16>
    %12 = vector.extract_strided_slice %9 {offsets = [48, 0], sizes = [32, 128], strides = [1, 1]} : vector<80x128xbf16> to vector<32x128xbf16>
    %c0_3 = arith.constant 0 : index
    %c0_4 = arith.constant 0 : index
    %c0_5 = arith.constant 0 : index
    %13 = vector.load %arg0[%c0_3, %c0_4, %c0_5] : memref<16x2x8xf32, #tpu.memory_space<vmem>>, vector<16x2x8xf32>
    %14 = arith.truncf %13 : vector<16x2x8xf32> to vector<16x2x8xbf16>
    %c0_6 = arith.constant 0 : index
    %c0_7 = arith.constant 0 : index
    %15 = vector.load %arg2[%c0_6, %c0_7] : memref<24x16xbf16, #tpu.memory_space<vmem>>, vector<24x16xbf16>
    %cst = arith.constant 0.000000e+00 : bf16
    %16 = vector.broadcast %cst : bf16 to vector<1x2x8xbf16>
    %17 = vector.extract_strided_slice %14 {offsets = [0, 0, 0], sizes = [15, 2, 8], strides = [1, 1, 1]} : vector<16x2x8xbf16> to vector<15x2x8xbf16>
    %18 = tpu.concatenate %16, %17 in 0 : vector<1x2x8xbf16>, vector<15x2x8xbf16> -> vector<16x2x8xbf16>
    %cst_8 = arith.constant 0.000000e+00 : bf16
    %19 = vector.broadcast %cst_8 : bf16 to vector<1x2x8xbf16>
    %20 = vector.extract_strided_slice %14 {offsets = [1, 0, 0], sizes = [15, 2, 8], strides = [1, 1, 1]} : vector<16x2x8xbf16> to vector<15x2x8xbf16>
    %21 = tpu.concatenate %20, %19 in 0 : vector<15x2x8xbf16>, vector<1x2x8xbf16> -> vector<16x2x8xbf16>
    %22 = tpu.concatenate %18, %14, %21 in 2 : vector<16x2x8xbf16>, vector<16x2x8xbf16>, vector<16x2x8xbf16> -> vector<16x2x24xbf16>
    "tpu.trace_start"() <{level = 10 : i32, message = "tbc,cd->tbd"}> : () -> ()
    %cst_9 = arith.constant dense<0.000000e+00> : vector<16x2x16xf32>
    %23 = tpu.matmul %22, %15, %cst_9 {dimension_numbers = #tpu.dot_dimension_numbers<[2], [0], [0, 1], [1], [0, 0, 0, 1, 1, 1], [], []>} : vector<16x2x24xbf16>, vector<24x16xbf16>, vector<16x2x16xf32> -> vector<16x2x16xf32>
    "tpu.trace_stop"() : () -> ()
    %cst_10 = arith.constant dense<0.000000e+00> : vector<16xf32>
    %24 = vector.multi_reduction <add>, %23, %cst_10 [0, 1] : vector<16x2x16xf32> to vector<16xf32>
    %25 = vector.shape_cast %24 : vector<16xf32> to vector<1x1x16xf32>
    %cst_11 = arith.constant 3.200000e+01 : f32
    %26 = vector.broadcast %cst_11 : f32 to vector<1x1x16xf32>
    %27 = arith.divf %25, %26 : vector<1x1x16xf32>
    %28 = vector.broadcast %27 : vector<1x1x16xf32> to vector<16x2x16xf32>
    %29 = arith.subf %23, %28 : vector<16x2x16xf32>
    %30 = arith.mulf %29, %29 : vector<16x2x16xf32>
    %cst_12 = arith.constant dense<0.000000e+00> : vector<16xf32>
    %31 = vector.multi_reduction <add>, %30, %cst_12 [0, 1] : vector<16x2x16xf32> to vector<16xf32>
    %32 = vector.shape_cast %31 : vector<16xf32> to vector<1x1x16xf32>
    %cst_13 = arith.constant 3.200000e+01 : f32
    %33 = vector.broadcast %cst_13 : f32 to vector<1x1x16xf32>
    %34 = arith.divf %32, %33 : vector<1x1x16xf32>
    %35 = vector.broadcast %27 : vector<1x1x16xf32> to vector<16x2x16xf32>
    %36 = arith.subf %23, %35 : vector<16x2x16xf32>
    %cst_14 = arith.constant 9.99999974E-6 : f32
    %37 = vector.broadcast %cst_14 : f32 to vector<1x1x16xf32>
    %38 = arith.addf %34, %37 : vector<1x1x16xf32>
    %39 = math.rsqrt %38 : vector<1x1x16xf32>
    %40 = vector.broadcast %39 : vector<1x1x16xf32> to vector<16x2x16xf32>
    %41 = arith.mulf %36, %40 : vector<16x2x16xf32>
    %42 = vector.shape_cast %3 : vector<1x16xf32> to vector<1x1x16xf32>
    %43 = vector.broadcast %42 : vector<1x1x16xf32> to vector<16x2x16xf32>
    %44 = arith.mulf %41, %43 : vector<16x2x16xf32>
    %45 = vector.shape_cast %4 : vector<1x16xf32> to vector<1x1x16xf32>
    %46 = vector.broadcast %45 : vector<1x1x16xf32> to vector<16x2x16xf32>
    %47 = arith.addf %44, %46 : vector<16x2x16xf32>
    %cst_15 = arith.constant 0.000000e+00 : f32
    %48 = vector.broadcast %cst_15 : f32 to vector<16x2x16xf32>
    %49 = arith.maximumf %47, %48 : vector<16x2x16xf32>
    %50 = arith.truncf %49 : vector<16x2x16xf32> to vector<16x2x16xbf16>
    %c0_16 = arith.constant 0 : index
    %c0_17 = arith.constant 0 : index
    %51 = vector.load %arg3[%c0_16, %c0_17] : memref<48x16xbf16, #tpu.memory_space<vmem>>, vector<48x16xbf16>
    %cst_18 = arith.constant 0.000000e+00 : bf16
    %52 = vector.broadcast %cst_18 : bf16 to vector<1x2x16xbf16>
    %53 = vector.extract_strided_slice %50 {offsets = [0, 0, 0], sizes = [15, 2, 16], strides = [1, 1, 1]} : vector<16x2x16xbf16> to vector<15x2x16xbf16>
    %54 = tpu.concatenate %52, %53 in 0 : vector<1x2x16xbf16>, vector<15x2x16xbf16> -> vector<16x2x16xbf16>
    %cst_19 = arith.constant 0.000000e+00 : bf16
    %55 = vector.broadcast %cst_19 : bf16 to vector<1x2x16xbf16>
    %56 = vector.extract_strided_slice %50 {offsets = [1, 0, 0], sizes = [15, 2, 16], strides = [1, 1, 1]} : vector<16x2x16xbf16> to vector<15x2x16xbf16>
    %57 = tpu.concatenate %56, %55 in 0 : vector<15x2x16xbf16>, vector<1x2x16xbf16> -> vector<16x2x16xbf16>
    %58 = tpu.concatenate %54, %50, %57 in 2 : vector<16x2x16xbf16>, vector<16x2x16xbf16>, vector<16x2x16xbf16> -> vector<16x2x48xbf16>
    "tpu.trace_start"() <{level = 10 : i32, message = "tbc,cd->tbd"}> : () -> ()
    %cst_20 = arith.constant dense<0.000000e+00> : vector<16x2x16xf32>
    %59 = tpu.matmul %58, %51, %cst_20 {dimension_numbers = #tpu.dot_dimension_numbers<[2], [0], [0, 1], [1], [0, 0, 0, 1, 1, 1], [], []>} : vector<16x2x48xbf16>, vector<48x16xbf16>, vector<16x2x16xf32> -> vector<16x2x16xf32>
    "tpu.trace_stop"() : () -> ()
    %cst_21 = arith.constant dense<0.000000e+00> : vector<16xf32>
    %60 = vector.multi_reduction <add>, %59, %cst_21 [0, 1] : vector<16x2x16xf32> to vector<16xf32>
    %61 = vector.shape_cast %60 : vector<16xf32> to vector<1x1x16xf32>
    %cst_22 = arith.constant 3.200000e+01 : f32
    %62 = vector.broadcast %cst_22 : f32 to vector<1x1x16xf32>
    %63 = arith.divf %61, %62 : vector<1x1x16xf32>
    %64 = vector.broadcast %63 : vector<1x1x16xf32> to vector<16x2x16xf32>
    %65 = arith.subf %59, %64 : vector<16x2x16xf32>
    %66 = arith.mulf %65, %65 : vector<16x2x16xf32>
    %cst_23 = arith.constant dense<0.000000e+00> : vector<16xf32>
    %67 = vector.multi_reduction <add>, %66, %cst_23 [0, 1] : vector<16x2x16xf32> to vector<16xf32>
    %68 = vector.shape_cast %67 : vector<16xf32> to vector<1x1x16xf32>
    %cst_24 = arith.constant 3.200000e+01 : f32
    %69 = vector.broadcast %cst_24 : f32 to vector<1x1x16xf32>
    %70 = arith.divf %68, %69 : vector<1x1x16xf32>
    %71 = vector.broadcast %63 : vector<1x1x16xf32> to vector<16x2x16xf32>
    %72 = arith.subf %59, %71 : vector<16x2x16xf32>
    %cst_25 = arith.constant 9.99999974E-6 : f32
    %73 = vector.broadcast %cst_25 : f32 to vector<1x1x16xf32>
    %74 = arith.addf %70, %73 : vector<1x1x16xf32>
    %75 = math.rsqrt %74 : vector<1x1x16xf32>
    %76 = vector.broadcast %75 : vector<1x1x16xf32> to vector<16x2x16xf32>
    %77 = arith.mulf %72, %76 : vector<16x2x16xf32>
    %78 = vector.shape_cast %5 : vector<1x16xf32> to vector<1x1x16xf32>
    %79 = vector.broadcast %78 : vector<1x1x16xf32> to vector<16x2x16xf32>
    %80 = arith.mulf %77, %79 : vector<16x2x16xf32>
    %81 = vector.shape_cast %6 : vector<1x16xf32> to vector<1x1x16xf32>
    %82 = vector.broadcast %81 : vector<1x1x16xf32> to vector<16x2x16xf32>
    %83 = arith.addf %80, %82 : vector<16x2x16xf32>
    %cst_26 = arith.constant 0.000000e+00 : f32
    %84 = vector.broadcast %cst_26 : f32 to vector<16x2x16xf32>
    %85 = arith.maximumf %83, %84 : vector<16x2x16xf32>
    %86 = arith.truncf %85 : vector<16x2x16xf32> to vector<16x2x16xbf16>
    "tpu.trace_start"() <{level = 10 : i32, message = "tbc,cg->tbg"}> : () -> ()
    %cst_27 = arith.constant dense<0.000000e+00> : vector<16x2x128xf32>
    %87 = tpu.matmul %86, %10, %cst_27 {dimension_numbers = #tpu.dot_dimension_numbers<[2], [0], [0, 1], [1], [0, 0, 0, 1, 1, 1], [], []>} : vector<16x2x16xbf16>, vector<16x128xbf16>, vector<16x2x128xf32> -> vector<16x2x128xf32>
    "tpu.trace_stop"() : () -> ()
    %88 = vector.shape_cast %1 : vector<1x128xf32> to vector<1x1x128xf32>
    %89 = vector.broadcast %88 : vector<1x1x128xf32> to vector<16x2x128xf32>
    %90 = arith.addf %87, %89 : vector<16x2x128xf32>
    %c0_28 = arith.constant 0 : index
    %c0_29 = arith.constant 0 : index
    %91 = vector.load %arg1[%c0_28, %c0_29] : memref<2x1xi32, #tpu.memory_space<vmem>>, vector<2x1xi32>
    %c0_i32 = arith.constant 0 : i32
    %92 = vector.broadcast %c0_i32 : i32 to vector<2x1xi32>
    %93 = arith.cmpi sgt, %91, %92 : vector<2x1xi32>
    %c1_i32 = arith.constant 1 : i32
    %94 = vector.broadcast %c1_i32 : i32 to vector<2x1xi32>
    %95 = arith.cmpi sgt, %91, %94 : vector<2x1xi32>
    %c2_i32 = arith.constant 2 : i32
    %96 = vector.broadcast %c2_i32 : i32 to vector<2x1xi32>
    %97 = arith.cmpi sgt, %91, %96 : vector<2x1xi32>
    %c3_i32 = arith.constant 3 : i32
    %98 = vector.broadcast %c3_i32 : i32 to vector<2x1xi32>
    %99 = arith.cmpi sgt, %91, %98 : vector<2x1xi32>
    %c4_i32 = arith.constant 4 : i32
    %100 = vector.broadcast %c4_i32 : i32 to vector<2x1xi32>
    %101 = arith.cmpi sgt, %91, %100 : vector<2x1xi32>
    %c5_i32 = arith.constant 5 : i32
    %102 = vector.broadcast %c5_i32 : i32 to vector<2x1xi32>
    %103 = arith.cmpi sgt, %91, %102 : vector<2x1xi32>
    %c6_i32 = arith.constant 6 : i32
    %104 = vector.broadcast %c6_i32 : i32 to vector<2x1xi32>
    %105 = arith.cmpi sgt, %91, %104 : vector<2x1xi32>
    %c7_i32 = arith.constant 7 : i32
    %106 = vector.broadcast %c7_i32 : i32 to vector<2x1xi32>
    %107 = arith.cmpi sgt, %91, %106 : vector<2x1xi32>
    %c8_i32 = arith.constant 8 : i32
    %108 = vector.broadcast %c8_i32 : i32 to vector<2x1xi32>
    %109 = arith.cmpi sgt, %91, %108 : vector<2x1xi32>
    %c9_i32 = arith.constant 9 : i32
    %110 = vector.broadcast %c9_i32 : i32 to vector<2x1xi32>
    %111 = arith.cmpi sgt, %91, %110 : vector<2x1xi32>
    %c10_i32 = arith.constant 10 : i32
    %112 = vector.broadcast %c10_i32 : i32 to vector<2x1xi32>
    %113 = arith.cmpi sgt, %91, %112 : vector<2x1xi32>
    %c11_i32 = arith.constant 11 : i32
    %114 = vector.broadcast %c11_i32 : i32 to vector<2x1xi32>
    %115 = arith.cmpi sgt, %91, %114 : vector<2x1xi32>
    %c12_i32 = arith.constant 12 : i32
    %116 = vector.broadcast %c12_i32 : i32 to vector<2x1xi32>
    %117 = arith.cmpi sgt, %91, %116 : vector<2x1xi32>
    %c13_i32 = arith.constant 13 : i32
    %118 = vector.broadcast %c13_i32 : i32 to vector<2x1xi32>
    %119 = arith.cmpi sgt, %91, %118 : vector<2x1xi32>
    %c14_i32 = arith.constant 14 : i32
    %120 = vector.broadcast %c14_i32 : i32 to vector<2x1xi32>
    %121 = arith.cmpi sgt, %91, %120 : vector<2x1xi32>
    %c15_i32 = arith.constant 15 : i32
    %122 = vector.broadcast %c15_i32 : i32 to vector<2x1xi32>
    %123 = arith.cmpi sgt, %91, %122 : vector<2x1xi32>
    %124 = vector.extract_strided_slice %90 {offsets = [0, 0, 0], sizes = [1, 2, 128], strides = [1, 1, 1]} : vector<16x2x128xf32> to vector<1x2x128xf32>
    %125 = vector.shape_cast %124 : vector<1x2x128xf32> to vector<2x128xf32>
    %126 = arith.truncf %7 : vector<2x32xf32> to vector<2x32xbf16>
    %cst_30 = arith.constant dense<0.000000e+00> : vector<2x128xf32>
    %127 = tpu.matmul %126, %11, %cst_30 {dimension_numbers = #tpu.dot_dimension_numbers<[1], [0], [0], [1], [0, 0, 1, 1], [], []>} : vector<2x32xbf16>, vector<32x128xbf16>, vector<2x128xf32> -> vector<2x128xf32>
    %128 = arith.addf %125, %127 : vector<2x128xf32>
    %129 = vector.extract_strided_slice %128 {offsets = [0, 0], sizes = [2, 96], strides = [1, 1]} : vector<2x128xf32> to vector<2x96xf32>
    %130 = arith.negf %129 : vector<2x96xf32>
    %131 = math.exp %130 : vector<2x96xf32>
    %cst_31 = arith.constant 1.000000e+00 : f32
    %132 = vector.broadcast %cst_31 : f32 to vector<2x96xf32>
    %133 = arith.addf %132, %131 : vector<2x96xf32>
    %134 = arith.divf %132, %133 : vector<2x96xf32>
    %135 = vector.extract_strided_slice %134 {offsets = [0, 0], sizes = [2, 32], strides = [1, 1]} : vector<2x96xf32> to vector<2x32xf32>
    %136 = vector.extract_strided_slice %134 {offsets = [0, 32], sizes = [2, 32], strides = [1, 1]} : vector<2x96xf32> to vector<2x32xf32>
    %137 = vector.extract_strided_slice %134 {offsets = [0, 64], sizes = [2, 32], strides = [1, 1]} : vector<2x96xf32> to vector<2x32xf32>
    %138 = vector.extract_strided_slice %128 {offsets = [0, 96], sizes = [2, 32], strides = [1, 1]} : vector<2x128xf32> to vector<2x32xf32>
    %139 = math.tanh %138 : vector<2x32xf32>
    %140 = arith.mulf %136, %8 : vector<2x32xf32>
    %141 = arith.mulf %135, %139 : vector<2x32xf32>
    %142 = arith.addf %140, %141 : vector<2x32xf32>
    %143 = math.tanh %142 : vector<2x32xf32>
    %144 = arith.mulf %137, %143 : vector<2x32xf32>
    %145 = vector.shape_cast %93 : vector<2x1xi1> to vector<2x1xi1>
    %146 = vector.broadcast %145 : vector<2x1xi1> to vector<2x32xi1>
    %147 = arith.select %146, %144, %7 : vector<2x32xi1>, vector<2x32xf32>
    %148 = vector.shape_cast %93 : vector<2x1xi1> to vector<2x1xi1>
    %149 = vector.broadcast %148 : vector<2x1xi1> to vector<2x32xi1>
    %150 = arith.select %149, %142, %8 : vector<2x32xi1>, vector<2x32xf32>
    %cst_32 = arith.constant 0.000000e+00 : f32
    %151 = vector.shape_cast %93 : vector<2x1xi1> to vector<2x1xi1>
    %152 = vector.broadcast %151 : vector<2x1xi1> to vector<2x32xi1>
    %153 = vector.broadcast %cst_32 : f32 to vector<2x32xf32>
    %154 = arith.select %152, %144, %153 : vector<2x32xi1>, vector<2x32xf32>
    %155 = vector.extract_strided_slice %90 {offsets = [1, 0, 0], sizes = [1, 2, 128], strides = [1, 1, 1]} : vector<16x2x128xf32> to vector<1x2x128xf32>
    %156 = vector.shape_cast %155 : vector<1x2x128xf32> to vector<2x128xf32>
    %157 = arith.truncf %147 : vector<2x32xf32> to vector<2x32xbf16>
    %cst_33 = arith.constant dense<0.000000e+00> : vector<2x128xf32>
    %158 = tpu.matmul %157, %11, %cst_33 {dimension_numbers = #tpu.dot_dimension_numbers<[1], [0], [0], [1], [0, 0, 1, 1], [], []>} : vector<2x32xbf16>, vector<32x128xbf16>, vector<2x128xf32> -> vector<2x128xf32>
    %159 = arith.addf %156, %158 : vector<2x128xf32>
    %160 = vector.extract_strided_slice %159 {offsets = [0, 0], sizes = [2, 96], strides = [1, 1]} : vector<2x128xf32> to vector<2x96xf32>
    %161 = arith.negf %160 : vector<2x96xf32>
    %162 = math.exp %161 : vector<2x96xf32>
    %cst_34 = arith.constant 1.000000e+00 : f32
    %163 = vector.broadcast %cst_34 : f32 to vector<2x96xf32>
    %164 = arith.addf %163, %162 : vector<2x96xf32>
    %165 = arith.divf %163, %164 : vector<2x96xf32>
    %166 = vector.extract_strided_slice %165 {offsets = [0, 0], sizes = [2, 32], strides = [1, 1]} : vector<2x96xf32> to vector<2x32xf32>
    %167 = vector.extract_strided_slice %165 {offsets = [0, 32], sizes = [2, 32], strides = [1, 1]} : vector<2x96xf32> to vector<2x32xf32>
    %168 = vector.extract_strided_slice %165 {offsets = [0, 64], sizes = [2, 32], strides = [1, 1]} : vector<2x96xf32> to vector<2x32xf32>
    %169 = vector.extract_strided_slice %159 {offsets = [0, 96], sizes = [2, 32], strides = [1, 1]} : vector<2x128xf32> to vector<2x32xf32>
    %170 = math.tanh %169 : vector<2x32xf32>
    %171 = arith.mulf %167, %150 : vector<2x32xf32>
    %172 = arith.mulf %166, %170 : vector<2x32xf32>
    %173 = arith.addf %171, %172 : vector<2x32xf32>
    %174 = math.tanh %173 : vector<2x32xf32>
    %175 = arith.mulf %168, %174 : vector<2x32xf32>
    %176 = vector.shape_cast %95 : vector<2x1xi1> to vector<2x1xi1>
    %177 = vector.broadcast %176 : vector<2x1xi1> to vector<2x32xi1>
    %178 = arith.select %177, %175, %147 : vector<2x32xi1>, vector<2x32xf32>
    %179 = vector.shape_cast %95 : vector<2x1xi1> to vector<2x1xi1>
    %180 = vector.broadcast %179 : vector<2x1xi1> to vector<2x32xi1>
    %181 = arith.select %180, %173, %150 : vector<2x32xi1>, vector<2x32xf32>
    %cst_35 = arith.constant 0.000000e+00 : f32
    %182 = vector.shape_cast %95 : vector<2x1xi1> to vector<2x1xi1>
    %183 = vector.broadcast %182 : vector<2x1xi1> to vector<2x32xi1>
    %184 = vector.broadcast %cst_35 : f32 to vector<2x32xf32>
    %185 = arith.select %183, %175, %184 : vector<2x32xi1>, vector<2x32xf32>
    %186 = vector.extract_strided_slice %90 {offsets = [2, 0, 0], sizes = [1, 2, 128], strides = [1, 1, 1]} : vector<16x2x128xf32> to vector<1x2x128xf32>
    %187 = vector.shape_cast %186 : vector<1x2x128xf32> to vector<2x128xf32>
    %188 = arith.truncf %178 : vector<2x32xf32> to vector<2x32xbf16>
    %cst_36 = arith.constant dense<0.000000e+00> : vector<2x128xf32>
    %189 = tpu.matmul %188, %11, %cst_36 {dimension_numbers = #tpu.dot_dimension_numbers<[1], [0], [0], [1], [0, 0, 1, 1], [], []>} : vector<2x32xbf16>, vector<32x128xbf16>, vector<2x128xf32> -> vector<2x128xf32>
    %190 = arith.addf %187, %189 : vector<2x128xf32>
    %191 = vector.extract_strided_slice %190 {offsets = [0, 0], sizes = [2, 96], strides = [1, 1]} : vector<2x128xf32> to vector<2x96xf32>
    %192 = arith.negf %191 : vector<2x96xf32>
    %193 = math.exp %192 : vector<2x96xf32>
    %cst_37 = arith.constant 1.000000e+00 : f32
    %194 = vector.broadcast %cst_37 : f32 to vector<2x96xf32>
    %195 = arith.addf %194, %193 : vector<2x96xf32>
    %196 = arith.divf %194, %195 : vector<2x96xf32>
    %197 = vector.extract_strided_slice %196 {offsets = [0, 0], sizes = [2, 32], strides = [1, 1]} : vector<2x96xf32> to vector<2x32xf32>
    %198 = vector.extract_strided_slice %196 {offsets = [0, 32], sizes = [2, 32], strides = [1, 1]} : vector<2x96xf32> to vector<2x32xf32>
    %199 = vector.extract_strided_slice %196 {offsets = [0, 64], sizes = [2, 32], strides = [1, 1]} : vector<2x96xf32> to vector<2x32xf32>
    %200 = vector.extract_strided_slice %190 {offsets = [0, 96], sizes = [2, 32], strides = [1, 1]} : vector<2x128xf32> to vector<2x32xf32>
    %201 = math.tanh %200 : vector<2x32xf32>
    %202 = arith.mulf %198, %181 : vector<2x32xf32>
    %203 = arith.mulf %197, %201 : vector<2x32xf32>
    %204 = arith.addf %202, %203 : vector<2x32xf32>
    %205 = math.tanh %204 : vector<2x32xf32>
    %206 = arith.mulf %199, %205 : vector<2x32xf32>
    %207 = vector.shape_cast %97 : vector<2x1xi1> to vector<2x1xi1>
    %208 = vector.broadcast %207 : vector<2x1xi1> to vector<2x32xi1>
    %209 = arith.select %208, %206, %178 : vector<2x32xi1>, vector<2x32xf32>
    %210 = vector.shape_cast %97 : vector<2x1xi1> to vector<2x1xi1>
    %211 = vector.broadcast %210 : vector<2x1xi1> to vector<2x32xi1>
    %212 = arith.select %211, %204, %181 : vector<2x32xi1>, vector<2x32xf32>
    %cst_38 = arith.constant 0.000000e+00 : f32
    %213 = vector.shape_cast %97 : vector<2x1xi1> to vector<2x1xi1>
    %214 = vector.broadcast %213 : vector<2x1xi1> to vector<2x32xi1>
    %215 = vector.broadcast %cst_38 : f32 to vector<2x32xf32>
    %216 = arith.select %214, %206, %215 : vector<2x32xi1>, vector<2x32xf32>
    %217 = vector.extract_strided_slice %90 {offsets = [3, 0, 0], sizes = [1, 2, 128], strides = [1, 1, 1]} : vector<16x2x128xf32> to vector<1x2x128xf32>
    %218 = vector.shape_cast %217 : vector<1x2x128xf32> to vector<2x128xf32>
    %219 = arith.truncf %209 : vector<2x32xf32> to vector<2x32xbf16>
    %cst_39 = arith.constant dense<0.000000e+00> : vector<2x128xf32>
    %220 = tpu.matmul %219, %11, %cst_39 {dimension_numbers = #tpu.dot_dimension_numbers<[1], [0], [0], [1], [0, 0, 1, 1], [], []>} : vector<2x32xbf16>, vector<32x128xbf16>, vector<2x128xf32> -> vector<2x128xf32>
    %221 = arith.addf %218, %220 : vector<2x128xf32>
    %222 = vector.extract_strided_slice %221 {offsets = [0, 0], sizes = [2, 96], strides = [1, 1]} : vector<2x128xf32> to vector<2x96xf32>
    %223 = arith.negf %222 : vector<2x96xf32>
    %224 = math.exp %223 : vector<2x96xf32>
    %cst_40 = arith.constant 1.000000e+00 : f32
    %225 = vector.broadcast %cst_40 : f32 to vector<2x96xf32>
    %226 = arith.addf %225, %224 : vector<2x96xf32>
    %227 = arith.divf %225, %226 : vector<2x96xf32>
    %228 = vector.extract_strided_slice %227 {offsets = [0, 0], sizes = [2, 32], strides = [1, 1]} : vector<2x96xf32> to vector<2x32xf32>
    %229 = vector.extract_strided_slice %227 {offsets = [0, 32], sizes = [2, 32], strides = [1, 1]} : vector<2x96xf32> to vector<2x32xf32>
    %230 = vector.extract_strided_slice %227 {offsets = [0, 64], sizes = [2, 32], strides = [1, 1]} : vector<2x96xf32> to vector<2x32xf32>
    %231 = vector.extract_strided_slice %221 {offsets = [0, 96], sizes = [2, 32], strides = [1, 1]} : vector<2x128xf32> to vector<2x32xf32>
    %232 = math.tanh %231 : vector<2x32xf32>
    %233 = arith.mulf %229, %212 : vector<2x32xf32>
    %234 = arith.mulf %228, %232 : vector<2x32xf32>
    %235 = arith.addf %233, %234 : vector<2x32xf32>
    %236 = math.tanh %235 : vector<2x32xf32>
    %237 = arith.mulf %230, %236 : vector<2x32xf32>
    %238 = vector.shape_cast %99 : vector<2x1xi1> to vector<2x1xi1>
    %239 = vector.broadcast %238 : vector<2x1xi1> to vector<2x32xi1>
    %240 = arith.select %239, %237, %209 : vector<2x32xi1>, vector<2x32xf32>
    %241 = vector.shape_cast %99 : vector<2x1xi1> to vector<2x1xi1>
    %242 = vector.broadcast %241 : vector<2x1xi1> to vector<2x32xi1>
    %243 = arith.select %242, %235, %212 : vector<2x32xi1>, vector<2x32xf32>
    %cst_41 = arith.constant 0.000000e+00 : f32
    %244 = vector.shape_cast %99 : vector<2x1xi1> to vector<2x1xi1>
    %245 = vector.broadcast %244 : vector<2x1xi1> to vector<2x32xi1>
    %246 = vector.broadcast %cst_41 : f32 to vector<2x32xf32>
    %247 = arith.select %245, %237, %246 : vector<2x32xi1>, vector<2x32xf32>
    %248 = vector.extract_strided_slice %90 {offsets = [4, 0, 0], sizes = [1, 2, 128], strides = [1, 1, 1]} : vector<16x2x128xf32> to vector<1x2x128xf32>
    %249 = vector.shape_cast %248 : vector<1x2x128xf32> to vector<2x128xf32>
    %250 = arith.truncf %240 : vector<2x32xf32> to vector<2x32xbf16>
    %cst_42 = arith.constant dense<0.000000e+00> : vector<2x128xf32>
    %251 = tpu.matmul %250, %11, %cst_42 {dimension_numbers = #tpu.dot_dimension_numbers<[1], [0], [0], [1], [0, 0, 1, 1], [], []>} : vector<2x32xbf16>, vector<32x128xbf16>, vector<2x128xf32> -> vector<2x128xf32>
    %252 = arith.addf %249, %251 : vector<2x128xf32>
    %253 = vector.extract_strided_slice %252 {offsets = [0, 0], sizes = [2, 96], strides = [1, 1]} : vector<2x128xf32> to vector<2x96xf32>
    %254 = arith.negf %253 : vector<2x96xf32>
    %255 = math.exp %254 : vector<2x96xf32>
    %cst_43 = arith.constant 1.000000e+00 : f32
    %256 = vector.broadcast %cst_43 : f32 to vector<2x96xf32>
    %257 = arith.addf %256, %255 : vector<2x96xf32>
    %258 = arith.divf %256, %257 : vector<2x96xf32>
    %259 = vector.extract_strided_slice %258 {offsets = [0, 0], sizes = [2, 32], strides = [1, 1]} : vector<2x96xf32> to vector<2x32xf32>
    %260 = vector.extract_strided_slice %258 {offsets = [0, 32], sizes = [2, 32], strides = [1, 1]} : vector<2x96xf32> to vector<2x32xf32>
    %261 = vector.extract_strided_slice %258 {offsets = [0, 64], sizes = [2, 32], strides = [1, 1]} : vector<2x96xf32> to vector<2x32xf32>
    %262 = vector.extract_strided_slice %252 {offsets = [0, 96], sizes = [2, 32], strides = [1, 1]} : vector<2x128xf32> to vector<2x32xf32>
    %263 = math.tanh %262 : vector<2x32xf32>
    %264 = arith.mulf %260, %243 : vector<2x32xf32>
    %265 = arith.mulf %259, %263 : vector<2x32xf32>
    %266 = arith.addf %264, %265 : vector<2x32xf32>
    %267 = math.tanh %266 : vector<2x32xf32>
    %268 = arith.mulf %261, %267 : vector<2x32xf32>
    %269 = vector.shape_cast %101 : vector<2x1xi1> to vector<2x1xi1>
    %270 = vector.broadcast %269 : vector<2x1xi1> to vector<2x32xi1>
    %271 = arith.select %270, %268, %240 : vector<2x32xi1>, vector<2x32xf32>
    %272 = vector.shape_cast %101 : vector<2x1xi1> to vector<2x1xi1>
    %273 = vector.broadcast %272 : vector<2x1xi1> to vector<2x32xi1>
    %274 = arith.select %273, %266, %243 : vector<2x32xi1>, vector<2x32xf32>
    %cst_44 = arith.constant 0.000000e+00 : f32
    %275 = vector.shape_cast %101 : vector<2x1xi1> to vector<2x1xi1>
    %276 = vector.broadcast %275 : vector<2x1xi1> to vector<2x32xi1>
    %277 = vector.broadcast %cst_44 : f32 to vector<2x32xf32>
    %278 = arith.select %276, %268, %277 : vector<2x32xi1>, vector<2x32xf32>
    %279 = vector.extract_strided_slice %90 {offsets = [5, 0, 0], sizes = [1, 2, 128], strides = [1, 1, 1]} : vector<16x2x128xf32> to vector<1x2x128xf32>
    %280 = vector.shape_cast %279 : vector<1x2x128xf32> to vector<2x128xf32>
    %281 = arith.truncf %271 : vector<2x32xf32> to vector<2x32xbf16>
    %cst_45 = arith.constant dense<0.000000e+00> : vector<2x128xf32>
    %282 = tpu.matmul %281, %11, %cst_45 {dimension_numbers = #tpu.dot_dimension_numbers<[1], [0], [0], [1], [0, 0, 1, 1], [], []>} : vector<2x32xbf16>, vector<32x128xbf16>, vector<2x128xf32> -> vector<2x128xf32>
    %283 = arith.addf %280, %282 : vector<2x128xf32>
    %284 = vector.extract_strided_slice %283 {offsets = [0, 0], sizes = [2, 96], strides = [1, 1]} : vector<2x128xf32> to vector<2x96xf32>
    %285 = arith.negf %284 : vector<2x96xf32>
    %286 = math.exp %285 : vector<2x96xf32>
    %cst_46 = arith.constant 1.000000e+00 : f32
    %287 = vector.broadcast %cst_46 : f32 to vector<2x96xf32>
    %288 = arith.addf %287, %286 : vector<2x96xf32>
    %289 = arith.divf %287, %288 : vector<2x96xf32>
    %290 = vector.extract_strided_slice %289 {offsets = [0, 0], sizes = [2, 32], strides = [1, 1]} : vector<2x96xf32> to vector<2x32xf32>
    %291 = vector.extract_strided_slice %289 {offsets = [0, 32], sizes = [2, 32], strides = [1, 1]} : vector<2x96xf32> to vector<2x32xf32>
    %292 = vector.extract_strided_slice %289 {offsets = [0, 64], sizes = [2, 32], strides = [1, 1]} : vector<2x96xf32> to vector<2x32xf32>
    %293 = vector.extract_strided_slice %283 {offsets = [0, 96], sizes = [2, 32], strides = [1, 1]} : vector<2x128xf32> to vector<2x32xf32>
    %294 = math.tanh %293 : vector<2x32xf32>
    %295 = arith.mulf %291, %274 : vector<2x32xf32>
    %296 = arith.mulf %290, %294 : vector<2x32xf32>
    %297 = arith.addf %295, %296 : vector<2x32xf32>
    %298 = math.tanh %297 : vector<2x32xf32>
    %299 = arith.mulf %292, %298 : vector<2x32xf32>
    %300 = vector.shape_cast %103 : vector<2x1xi1> to vector<2x1xi1>
    %301 = vector.broadcast %300 : vector<2x1xi1> to vector<2x32xi1>
    %302 = arith.select %301, %299, %271 : vector<2x32xi1>, vector<2x32xf32>
    %303 = vector.shape_cast %103 : vector<2x1xi1> to vector<2x1xi1>
    %304 = vector.broadcast %303 : vector<2x1xi1> to vector<2x32xi1>
    %305 = arith.select %304, %297, %274 : vector<2x32xi1>, vector<2x32xf32>
    %cst_47 = arith.constant 0.000000e+00 : f32
    %306 = vector.shape_cast %103 : vector<2x1xi1> to vector<2x1xi1>
    %307 = vector.broadcast %306 : vector<2x1xi1> to vector<2x32xi1>
    %308 = vector.broadcast %cst_47 : f32 to vector<2x32xf32>
    %309 = arith.select %307, %299, %308 : vector<2x32xi1>, vector<2x32xf32>
    %310 = vector.extract_strided_slice %90 {offsets = [6, 0, 0], sizes = [1, 2, 128], strides = [1, 1, 1]} : vector<16x2x128xf32> to vector<1x2x128xf32>
    %311 = vector.shape_cast %310 : vector<1x2x128xf32> to vector<2x128xf32>
    %312 = arith.truncf %302 : vector<2x32xf32> to vector<2x32xbf16>
    %cst_48 = arith.constant dense<0.000000e+00> : vector<2x128xf32>
    %313 = tpu.matmul %312, %11, %cst_48 {dimension_numbers = #tpu.dot_dimension_numbers<[1], [0], [0], [1], [0, 0, 1, 1], [], []>} : vector<2x32xbf16>, vector<32x128xbf16>, vector<2x128xf32> -> vector<2x128xf32>
    %314 = arith.addf %311, %313 : vector<2x128xf32>
    %315 = vector.extract_strided_slice %314 {offsets = [0, 0], sizes = [2, 96], strides = [1, 1]} : vector<2x128xf32> to vector<2x96xf32>
    %316 = arith.negf %315 : vector<2x96xf32>
    %317 = math.exp %316 : vector<2x96xf32>
    %cst_49 = arith.constant 1.000000e+00 : f32
    %318 = vector.broadcast %cst_49 : f32 to vector<2x96xf32>
    %319 = arith.addf %318, %317 : vector<2x96xf32>
    %320 = arith.divf %318, %319 : vector<2x96xf32>
    %321 = vector.extract_strided_slice %320 {offsets = [0, 0], sizes = [2, 32], strides = [1, 1]} : vector<2x96xf32> to vector<2x32xf32>
    %322 = vector.extract_strided_slice %320 {offsets = [0, 32], sizes = [2, 32], strides = [1, 1]} : vector<2x96xf32> to vector<2x32xf32>
    %323 = vector.extract_strided_slice %320 {offsets = [0, 64], sizes = [2, 32], strides = [1, 1]} : vector<2x96xf32> to vector<2x32xf32>
    %324 = vector.extract_strided_slice %314 {offsets = [0, 96], sizes = [2, 32], strides = [1, 1]} : vector<2x128xf32> to vector<2x32xf32>
    %325 = math.tanh %324 : vector<2x32xf32>
    %326 = arith.mulf %322, %305 : vector<2x32xf32>
    %327 = arith.mulf %321, %325 : vector<2x32xf32>
    %328 = arith.addf %326, %327 : vector<2x32xf32>
    %329 = math.tanh %328 : vector<2x32xf32>
    %330 = arith.mulf %323, %329 : vector<2x32xf32>
    %331 = vector.shape_cast %105 : vector<2x1xi1> to vector<2x1xi1>
    %332 = vector.broadcast %331 : vector<2x1xi1> to vector<2x32xi1>
    %333 = arith.select %332, %330, %302 : vector<2x32xi1>, vector<2x32xf32>
    %334 = vector.shape_cast %105 : vector<2x1xi1> to vector<2x1xi1>
    %335 = vector.broadcast %334 : vector<2x1xi1> to vector<2x32xi1>
    %336 = arith.select %335, %328, %305 : vector<2x32xi1>, vector<2x32xf32>
    %cst_50 = arith.constant 0.000000e+00 : f32
    %337 = vector.shape_cast %105 : vector<2x1xi1> to vector<2x1xi1>
    %338 = vector.broadcast %337 : vector<2x1xi1> to vector<2x32xi1>
    %339 = vector.broadcast %cst_50 : f32 to vector<2x32xf32>
    %340 = arith.select %338, %330, %339 : vector<2x32xi1>, vector<2x32xf32>
    %341 = vector.extract_strided_slice %90 {offsets = [7, 0, 0], sizes = [1, 2, 128], strides = [1, 1, 1]} : vector<16x2x128xf32> to vector<1x2x128xf32>
    %342 = vector.shape_cast %341 : vector<1x2x128xf32> to vector<2x128xf32>
    %343 = arith.truncf %333 : vector<2x32xf32> to vector<2x32xbf16>
    %cst_51 = arith.constant dense<0.000000e+00> : vector<2x128xf32>
    %344 = tpu.matmul %343, %11, %cst_51 {dimension_numbers = #tpu.dot_dimension_numbers<[1], [0], [0], [1], [0, 0, 1, 1], [], []>} : vector<2x32xbf16>, vector<32x128xbf16>, vector<2x128xf32> -> vector<2x128xf32>
    %345 = arith.addf %342, %344 : vector<2x128xf32>
    %346 = vector.extract_strided_slice %345 {offsets = [0, 0], sizes = [2, 96], strides = [1, 1]} : vector<2x128xf32> to vector<2x96xf32>
    %347 = arith.negf %346 : vector<2x96xf32>
    %348 = math.exp %347 : vector<2x96xf32>
    %cst_52 = arith.constant 1.000000e+00 : f32
    %349 = vector.broadcast %cst_52 : f32 to vector<2x96xf32>
    %350 = arith.addf %349, %348 : vector<2x96xf32>
    %351 = arith.divf %349, %350 : vector<2x96xf32>
    %352 = vector.extract_strided_slice %351 {offsets = [0, 0], sizes = [2, 32], strides = [1, 1]} : vector<2x96xf32> to vector<2x32xf32>
    %353 = vector.extract_strided_slice %351 {offsets = [0, 32], sizes = [2, 32], strides = [1, 1]} : vector<2x96xf32> to vector<2x32xf32>
    %354 = vector.extract_strided_slice %351 {offsets = [0, 64], sizes = [2, 32], strides = [1, 1]} : vector<2x96xf32> to vector<2x32xf32>
    %355 = vector.extract_strided_slice %345 {offsets = [0, 96], sizes = [2, 32], strides = [1, 1]} : vector<2x128xf32> to vector<2x32xf32>
    %356 = math.tanh %355 : vector<2x32xf32>
    %357 = arith.mulf %353, %336 : vector<2x32xf32>
    %358 = arith.mulf %352, %356 : vector<2x32xf32>
    %359 = arith.addf %357, %358 : vector<2x32xf32>
    %360 = math.tanh %359 : vector<2x32xf32>
    %361 = arith.mulf %354, %360 : vector<2x32xf32>
    %362 = vector.shape_cast %107 : vector<2x1xi1> to vector<2x1xi1>
    %363 = vector.broadcast %362 : vector<2x1xi1> to vector<2x32xi1>
    %364 = arith.select %363, %361, %333 : vector<2x32xi1>, vector<2x32xf32>
    %365 = vector.shape_cast %107 : vector<2x1xi1> to vector<2x1xi1>
    %366 = vector.broadcast %365 : vector<2x1xi1> to vector<2x32xi1>
    %367 = arith.select %366, %359, %336 : vector<2x32xi1>, vector<2x32xf32>
    %cst_53 = arith.constant 0.000000e+00 : f32
    %368 = vector.shape_cast %107 : vector<2x1xi1> to vector<2x1xi1>
    %369 = vector.broadcast %368 : vector<2x1xi1> to vector<2x32xi1>
    %370 = vector.broadcast %cst_53 : f32 to vector<2x32xf32>
    %371 = arith.select %369, %361, %370 : vector<2x32xi1>, vector<2x32xf32>
    %372 = vector.extract_strided_slice %90 {offsets = [8, 0, 0], sizes = [1, 2, 128], strides = [1, 1, 1]} : vector<16x2x128xf32> to vector<1x2x128xf32>
    %373 = vector.shape_cast %372 : vector<1x2x128xf32> to vector<2x128xf32>
    %374 = arith.truncf %364 : vector<2x32xf32> to vector<2x32xbf16>
    %cst_54 = arith.constant dense<0.000000e+00> : vector<2x128xf32>
    %375 = tpu.matmul %374, %11, %cst_54 {dimension_numbers = #tpu.dot_dimension_numbers<[1], [0], [0], [1], [0, 0, 1, 1], [], []>} : vector<2x32xbf16>, vector<32x128xbf16>, vector<2x128xf32> -> vector<2x128xf32>
    %376 = arith.addf %373, %375 : vector<2x128xf32>
    %377 = vector.extract_strided_slice %376 {offsets = [0, 0], sizes = [2, 96], strides = [1, 1]} : vector<2x128xf32> to vector<2x96xf32>
    %378 = arith.negf %377 : vector<2x96xf32>
    %379 = math.exp %378 : vector<2x96xf32>
    %cst_55 = arith.constant 1.000000e+00 : f32
    %380 = vector.broadcast %cst_55 : f32 to vector<2x96xf32>
    %381 = arith.addf %380, %379 : vector<2x96xf32>
    %382 = arith.divf %380, %381 : vector<2x96xf32>
    %383 = vector.extract_strided_slice %382 {offsets = [0, 0], sizes = [2, 32], strides = [1, 1]} : vector<2x96xf32> to vector<2x32xf32>
    %384 = vector.extract_strided_slice %382 {offsets = [0, 32], sizes = [2, 32], strides = [1, 1]} : vector<2x96xf32> to vector<2x32xf32>
    %385 = vector.extract_strided_slice %382 {offsets = [0, 64], sizes = [2, 32], strides = [1, 1]} : vector<2x96xf32> to vector<2x32xf32>
    %386 = vector.extract_strided_slice %376 {offsets = [0, 96], sizes = [2, 32], strides = [1, 1]} : vector<2x128xf32> to vector<2x32xf32>
    %387 = math.tanh %386 : vector<2x32xf32>
    %388 = arith.mulf %384, %367 : vector<2x32xf32>
    %389 = arith.mulf %383, %387 : vector<2x32xf32>
    %390 = arith.addf %388, %389 : vector<2x32xf32>
    %391 = math.tanh %390 : vector<2x32xf32>
    %392 = arith.mulf %385, %391 : vector<2x32xf32>
    %393 = vector.shape_cast %109 : vector<2x1xi1> to vector<2x1xi1>
    %394 = vector.broadcast %393 : vector<2x1xi1> to vector<2x32xi1>
    %395 = arith.select %394, %392, %364 : vector<2x32xi1>, vector<2x32xf32>
    %396 = vector.shape_cast %109 : vector<2x1xi1> to vector<2x1xi1>
    %397 = vector.broadcast %396 : vector<2x1xi1> to vector<2x32xi1>
    %398 = arith.select %397, %390, %367 : vector<2x32xi1>, vector<2x32xf32>
    %cst_56 = arith.constant 0.000000e+00 : f32
    %399 = vector.shape_cast %109 : vector<2x1xi1> to vector<2x1xi1>
    %400 = vector.broadcast %399 : vector<2x1xi1> to vector<2x32xi1>
    %401 = vector.broadcast %cst_56 : f32 to vector<2x32xf32>
    %402 = arith.select %400, %392, %401 : vector<2x32xi1>, vector<2x32xf32>
    %403 = vector.extract_strided_slice %90 {offsets = [9, 0, 0], sizes = [1, 2, 128], strides = [1, 1, 1]} : vector<16x2x128xf32> to vector<1x2x128xf32>
    %404 = vector.shape_cast %403 : vector<1x2x128xf32> to vector<2x128xf32>
    %405 = arith.truncf %395 : vector<2x32xf32> to vector<2x32xbf16>
    %cst_57 = arith.constant dense<0.000000e+00> : vector<2x128xf32>
    %406 = tpu.matmul %405, %11, %cst_57 {dimension_numbers = #tpu.dot_dimension_numbers<[1], [0], [0], [1], [0, 0, 1, 1], [], []>} : vector<2x32xbf16>, vector<32x128xbf16>, vector<2x128xf32> -> vector<2x128xf32>
    %407 = arith.addf %404, %406 : vector<2x128xf32>
    %408 = vector.extract_strided_slice %407 {offsets = [0, 0], sizes = [2, 96], strides = [1, 1]} : vector<2x128xf32> to vector<2x96xf32>
    %409 = arith.negf %408 : vector<2x96xf32>
    %410 = math.exp %409 : vector<2x96xf32>
    %cst_58 = arith.constant 1.000000e+00 : f32
    %411 = vector.broadcast %cst_58 : f32 to vector<2x96xf32>
    %412 = arith.addf %411, %410 : vector<2x96xf32>
    %413 = arith.divf %411, %412 : vector<2x96xf32>
    %414 = vector.extract_strided_slice %413 {offsets = [0, 0], sizes = [2, 32], strides = [1, 1]} : vector<2x96xf32> to vector<2x32xf32>
    %415 = vector.extract_strided_slice %413 {offsets = [0, 32], sizes = [2, 32], strides = [1, 1]} : vector<2x96xf32> to vector<2x32xf32>
    %416 = vector.extract_strided_slice %413 {offsets = [0, 64], sizes = [2, 32], strides = [1, 1]} : vector<2x96xf32> to vector<2x32xf32>
    %417 = vector.extract_strided_slice %407 {offsets = [0, 96], sizes = [2, 32], strides = [1, 1]} : vector<2x128xf32> to vector<2x32xf32>
    %418 = math.tanh %417 : vector<2x32xf32>
    %419 = arith.mulf %415, %398 : vector<2x32xf32>
    %420 = arith.mulf %414, %418 : vector<2x32xf32>
    %421 = arith.addf %419, %420 : vector<2x32xf32>
    %422 = math.tanh %421 : vector<2x32xf32>
    %423 = arith.mulf %416, %422 : vector<2x32xf32>
    %424 = vector.shape_cast %111 : vector<2x1xi1> to vector<2x1xi1>
    %425 = vector.broadcast %424 : vector<2x1xi1> to vector<2x32xi1>
    %426 = arith.select %425, %423, %395 : vector<2x32xi1>, vector<2x32xf32>
    %427 = vector.shape_cast %111 : vector<2x1xi1> to vector<2x1xi1>
    %428 = vector.broadcast %427 : vector<2x1xi1> to vector<2x32xi1>
    %429 = arith.select %428, %421, %398 : vector<2x32xi1>, vector<2x32xf32>
    %cst_59 = arith.constant 0.000000e+00 : f32
    %430 = vector.shape_cast %111 : vector<2x1xi1> to vector<2x1xi1>
    %431 = vector.broadcast %430 : vector<2x1xi1> to vector<2x32xi1>
    %432 = vector.broadcast %cst_59 : f32 to vector<2x32xf32>
    %433 = arith.select %431, %423, %432 : vector<2x32xi1>, vector<2x32xf32>
    %434 = vector.extract_strided_slice %90 {offsets = [10, 0, 0], sizes = [1, 2, 128], strides = [1, 1, 1]} : vector<16x2x128xf32> to vector<1x2x128xf32>
    %435 = vector.shape_cast %434 : vector<1x2x128xf32> to vector<2x128xf32>
    %436 = arith.truncf %426 : vector<2x32xf32> to vector<2x32xbf16>
    %cst_60 = arith.constant dense<0.000000e+00> : vector<2x128xf32>
    %437 = tpu.matmul %436, %11, %cst_60 {dimension_numbers = #tpu.dot_dimension_numbers<[1], [0], [0], [1], [0, 0, 1, 1], [], []>} : vector<2x32xbf16>, vector<32x128xbf16>, vector<2x128xf32> -> vector<2x128xf32>
    %438 = arith.addf %435, %437 : vector<2x128xf32>
    %439 = vector.extract_strided_slice %438 {offsets = [0, 0], sizes = [2, 96], strides = [1, 1]} : vector<2x128xf32> to vector<2x96xf32>
    %440 = arith.negf %439 : vector<2x96xf32>
    %441 = math.exp %440 : vector<2x96xf32>
    %cst_61 = arith.constant 1.000000e+00 : f32
    %442 = vector.broadcast %cst_61 : f32 to vector<2x96xf32>
    %443 = arith.addf %442, %441 : vector<2x96xf32>
    %444 = arith.divf %442, %443 : vector<2x96xf32>
    %445 = vector.extract_strided_slice %444 {offsets = [0, 0], sizes = [2, 32], strides = [1, 1]} : vector<2x96xf32> to vector<2x32xf32>
    %446 = vector.extract_strided_slice %444 {offsets = [0, 32], sizes = [2, 32], strides = [1, 1]} : vector<2x96xf32> to vector<2x32xf32>
    %447 = vector.extract_strided_slice %444 {offsets = [0, 64], sizes = [2, 32], strides = [1, 1]} : vector<2x96xf32> to vector<2x32xf32>
    %448 = vector.extract_strided_slice %438 {offsets = [0, 96], sizes = [2, 32], strides = [1, 1]} : vector<2x128xf32> to vector<2x32xf32>
    %449 = math.tanh %448 : vector<2x32xf32>
    %450 = arith.mulf %446, %429 : vector<2x32xf32>
    %451 = arith.mulf %445, %449 : vector<2x32xf32>
    %452 = arith.addf %450, %451 : vector<2x32xf32>
    %453 = math.tanh %452 : vector<2x32xf32>
    %454 = arith.mulf %447, %453 : vector<2x32xf32>
    %455 = vector.shape_cast %113 : vector<2x1xi1> to vector<2x1xi1>
    %456 = vector.broadcast %455 : vector<2x1xi1> to vector<2x32xi1>
    %457 = arith.select %456, %454, %426 : vector<2x32xi1>, vector<2x32xf32>
    %458 = vector.shape_cast %113 : vector<2x1xi1> to vector<2x1xi1>
    %459 = vector.broadcast %458 : vector<2x1xi1> to vector<2x32xi1>
    %460 = arith.select %459, %452, %429 : vector<2x32xi1>, vector<2x32xf32>
    %cst_62 = arith.constant 0.000000e+00 : f32
    %461 = vector.shape_cast %113 : vector<2x1xi1> to vector<2x1xi1>
    %462 = vector.broadcast %461 : vector<2x1xi1> to vector<2x32xi1>
    %463 = vector.broadcast %cst_62 : f32 to vector<2x32xf32>
    %464 = arith.select %462, %454, %463 : vector<2x32xi1>, vector<2x32xf32>
    %465 = vector.extract_strided_slice %90 {offsets = [11, 0, 0], sizes = [1, 2, 128], strides = [1, 1, 1]} : vector<16x2x128xf32> to vector<1x2x128xf32>
    %466 = vector.shape_cast %465 : vector<1x2x128xf32> to vector<2x128xf32>
    %467 = arith.truncf %457 : vector<2x32xf32> to vector<2x32xbf16>
    %cst_63 = arith.constant dense<0.000000e+00> : vector<2x128xf32>
    %468 = tpu.matmul %467, %11, %cst_63 {dimension_numbers = #tpu.dot_dimension_numbers<[1], [0], [0], [1], [0, 0, 1, 1], [], []>} : vector<2x32xbf16>, vector<32x128xbf16>, vector<2x128xf32> -> vector<2x128xf32>
    %469 = arith.addf %466, %468 : vector<2x128xf32>
    %470 = vector.extract_strided_slice %469 {offsets = [0, 0], sizes = [2, 96], strides = [1, 1]} : vector<2x128xf32> to vector<2x96xf32>
    %471 = arith.negf %470 : vector<2x96xf32>
    %472 = math.exp %471 : vector<2x96xf32>
    %cst_64 = arith.constant 1.000000e+00 : f32
    %473 = vector.broadcast %cst_64 : f32 to vector<2x96xf32>
    %474 = arith.addf %473, %472 : vector<2x96xf32>
    %475 = arith.divf %473, %474 : vector<2x96xf32>
    %476 = vector.extract_strided_slice %475 {offsets = [0, 0], sizes = [2, 32], strides = [1, 1]} : vector<2x96xf32> to vector<2x32xf32>
    %477 = vector.extract_strided_slice %475 {offsets = [0, 32], sizes = [2, 32], strides = [1, 1]} : vector<2x96xf32> to vector<2x32xf32>
    %478 = vector.extract_strided_slice %475 {offsets = [0, 64], sizes = [2, 32], strides = [1, 1]} : vector<2x96xf32> to vector<2x32xf32>
    %479 = vector.extract_strided_slice %469 {offsets = [0, 96], sizes = [2, 32], strides = [1, 1]} : vector<2x128xf32> to vector<2x32xf32>
    %480 = math.tanh %479 : vector<2x32xf32>
    %481 = arith.mulf %477, %460 : vector<2x32xf32>
    %482 = arith.mulf %476, %480 : vector<2x32xf32>
    %483 = arith.addf %481, %482 : vector<2x32xf32>
    %484 = math.tanh %483 : vector<2x32xf32>
    %485 = arith.mulf %478, %484 : vector<2x32xf32>
    %486 = vector.shape_cast %115 : vector<2x1xi1> to vector<2x1xi1>
    %487 = vector.broadcast %486 : vector<2x1xi1> to vector<2x32xi1>
    %488 = arith.select %487, %485, %457 : vector<2x32xi1>, vector<2x32xf32>
    %489 = vector.shape_cast %115 : vector<2x1xi1> to vector<2x1xi1>
    %490 = vector.broadcast %489 : vector<2x1xi1> to vector<2x32xi1>
    %491 = arith.select %490, %483, %460 : vector<2x32xi1>, vector<2x32xf32>
    %cst_65 = arith.constant 0.000000e+00 : f32
    %492 = vector.shape_cast %115 : vector<2x1xi1> to vector<2x1xi1>
    %493 = vector.broadcast %492 : vector<2x1xi1> to vector<2x32xi1>
    %494 = vector.broadcast %cst_65 : f32 to vector<2x32xf32>
    %495 = arith.select %493, %485, %494 : vector<2x32xi1>, vector<2x32xf32>
    %496 = vector.extract_strided_slice %90 {offsets = [12, 0, 0], sizes = [1, 2, 128], strides = [1, 1, 1]} : vector<16x2x128xf32> to vector<1x2x128xf32>
    %497 = vector.shape_cast %496 : vector<1x2x128xf32> to vector<2x128xf32>
    %498 = arith.truncf %488 : vector<2x32xf32> to vector<2x32xbf16>
    %cst_66 = arith.constant dense<0.000000e+00> : vector<2x128xf32>
    %499 = tpu.matmul %498, %11, %cst_66 {dimension_numbers = #tpu.dot_dimension_numbers<[1], [0], [0], [1], [0, 0, 1, 1], [], []>} : vector<2x32xbf16>, vector<32x128xbf16>, vector<2x128xf32> -> vector<2x128xf32>
    %500 = arith.addf %497, %499 : vector<2x128xf32>
    %501 = vector.extract_strided_slice %500 {offsets = [0, 0], sizes = [2, 96], strides = [1, 1]} : vector<2x128xf32> to vector<2x96xf32>
    %502 = arith.negf %501 : vector<2x96xf32>
    %503 = math.exp %502 : vector<2x96xf32>
    %cst_67 = arith.constant 1.000000e+00 : f32
    %504 = vector.broadcast %cst_67 : f32 to vector<2x96xf32>
    %505 = arith.addf %504, %503 : vector<2x96xf32>
    %506 = arith.divf %504, %505 : vector<2x96xf32>
    %507 = vector.extract_strided_slice %506 {offsets = [0, 0], sizes = [2, 32], strides = [1, 1]} : vector<2x96xf32> to vector<2x32xf32>
    %508 = vector.extract_strided_slice %506 {offsets = [0, 32], sizes = [2, 32], strides = [1, 1]} : vector<2x96xf32> to vector<2x32xf32>
    %509 = vector.extract_strided_slice %506 {offsets = [0, 64], sizes = [2, 32], strides = [1, 1]} : vector<2x96xf32> to vector<2x32xf32>
    %510 = vector.extract_strided_slice %500 {offsets = [0, 96], sizes = [2, 32], strides = [1, 1]} : vector<2x128xf32> to vector<2x32xf32>
    %511 = math.tanh %510 : vector<2x32xf32>
    %512 = arith.mulf %508, %491 : vector<2x32xf32>
    %513 = arith.mulf %507, %511 : vector<2x32xf32>
    %514 = arith.addf %512, %513 : vector<2x32xf32>
    %515 = math.tanh %514 : vector<2x32xf32>
    %516 = arith.mulf %509, %515 : vector<2x32xf32>
    %517 = vector.shape_cast %117 : vector<2x1xi1> to vector<2x1xi1>
    %518 = vector.broadcast %517 : vector<2x1xi1> to vector<2x32xi1>
    %519 = arith.select %518, %516, %488 : vector<2x32xi1>, vector<2x32xf32>
    %520 = vector.shape_cast %117 : vector<2x1xi1> to vector<2x1xi1>
    %521 = vector.broadcast %520 : vector<2x1xi1> to vector<2x32xi1>
    %522 = arith.select %521, %514, %491 : vector<2x32xi1>, vector<2x32xf32>
    %cst_68 = arith.constant 0.000000e+00 : f32
    %523 = vector.shape_cast %117 : vector<2x1xi1> to vector<2x1xi1>
    %524 = vector.broadcast %523 : vector<2x1xi1> to vector<2x32xi1>
    %525 = vector.broadcast %cst_68 : f32 to vector<2x32xf32>
    %526 = arith.select %524, %516, %525 : vector<2x32xi1>, vector<2x32xf32>
    %527 = vector.extract_strided_slice %90 {offsets = [13, 0, 0], sizes = [1, 2, 128], strides = [1, 1, 1]} : vector<16x2x128xf32> to vector<1x2x128xf32>
    %528 = vector.shape_cast %527 : vector<1x2x128xf32> to vector<2x128xf32>
    %529 = arith.truncf %519 : vector<2x32xf32> to vector<2x32xbf16>
    %cst_69 = arith.constant dense<0.000000e+00> : vector<2x128xf32>
    %530 = tpu.matmul %529, %11, %cst_69 {dimension_numbers = #tpu.dot_dimension_numbers<[1], [0], [0], [1], [0, 0, 1, 1], [], []>} : vector<2x32xbf16>, vector<32x128xbf16>, vector<2x128xf32> -> vector<2x128xf32>
    %531 = arith.addf %528, %530 : vector<2x128xf32>
    %532 = vector.extract_strided_slice %531 {offsets = [0, 0], sizes = [2, 96], strides = [1, 1]} : vector<2x128xf32> to vector<2x96xf32>
    %533 = arith.negf %532 : vector<2x96xf32>
    %534 = math.exp %533 : vector<2x96xf32>
    %cst_70 = arith.constant 1.000000e+00 : f32
    %535 = vector.broadcast %cst_70 : f32 to vector<2x96xf32>
    %536 = arith.addf %535, %534 : vector<2x96xf32>
    %537 = arith.divf %535, %536 : vector<2x96xf32>
    %538 = vector.extract_strided_slice %537 {offsets = [0, 0], sizes = [2, 32], strides = [1, 1]} : vector<2x96xf32> to vector<2x32xf32>
    %539 = vector.extract_strided_slice %537 {offsets = [0, 32], sizes = [2, 32], strides = [1, 1]} : vector<2x96xf32> to vector<2x32xf32>
    %540 = vector.extract_strided_slice %537 {offsets = [0, 64], sizes = [2, 32], strides = [1, 1]} : vector<2x96xf32> to vector<2x32xf32>
    %541 = vector.extract_strided_slice %531 {offsets = [0, 96], sizes = [2, 32], strides = [1, 1]} : vector<2x128xf32> to vector<2x32xf32>
    %542 = math.tanh %541 : vector<2x32xf32>
    %543 = arith.mulf %539, %522 : vector<2x32xf32>
    %544 = arith.mulf %538, %542 : vector<2x32xf32>
    %545 = arith.addf %543, %544 : vector<2x32xf32>
    %546 = math.tanh %545 : vector<2x32xf32>
    %547 = arith.mulf %540, %546 : vector<2x32xf32>
    %548 = vector.shape_cast %119 : vector<2x1xi1> to vector<2x1xi1>
    %549 = vector.broadcast %548 : vector<2x1xi1> to vector<2x32xi1>
    %550 = arith.select %549, %547, %519 : vector<2x32xi1>, vector<2x32xf32>
    %551 = vector.shape_cast %119 : vector<2x1xi1> to vector<2x1xi1>
    %552 = vector.broadcast %551 : vector<2x1xi1> to vector<2x32xi1>
    %553 = arith.select %552, %545, %522 : vector<2x32xi1>, vector<2x32xf32>
    %cst_71 = arith.constant 0.000000e+00 : f32
    %554 = vector.shape_cast %119 : vector<2x1xi1> to vector<2x1xi1>
    %555 = vector.broadcast %554 : vector<2x1xi1> to vector<2x32xi1>
    %556 = vector.broadcast %cst_71 : f32 to vector<2x32xf32>
    %557 = arith.select %555, %547, %556 : vector<2x32xi1>, vector<2x32xf32>
    %558 = vector.extract_strided_slice %90 {offsets = [14, 0, 0], sizes = [1, 2, 128], strides = [1, 1, 1]} : vector<16x2x128xf32> to vector<1x2x128xf32>
    %559 = vector.shape_cast %558 : vector<1x2x128xf32> to vector<2x128xf32>
    %560 = arith.truncf %550 : vector<2x32xf32> to vector<2x32xbf16>
    %cst_72 = arith.constant dense<0.000000e+00> : vector<2x128xf32>
    %561 = tpu.matmul %560, %11, %cst_72 {dimension_numbers = #tpu.dot_dimension_numbers<[1], [0], [0], [1], [0, 0, 1, 1], [], []>} : vector<2x32xbf16>, vector<32x128xbf16>, vector<2x128xf32> -> vector<2x128xf32>
    %562 = arith.addf %559, %561 : vector<2x128xf32>
    %563 = vector.extract_strided_slice %562 {offsets = [0, 0], sizes = [2, 96], strides = [1, 1]} : vector<2x128xf32> to vector<2x96xf32>
    %564 = arith.negf %563 : vector<2x96xf32>
    %565 = math.exp %564 : vector<2x96xf32>
    %cst_73 = arith.constant 1.000000e+00 : f32
    %566 = vector.broadcast %cst_73 : f32 to vector<2x96xf32>
    %567 = arith.addf %566, %565 : vector<2x96xf32>
    %568 = arith.divf %566, %567 : vector<2x96xf32>
    %569 = vector.extract_strided_slice %568 {offsets = [0, 0], sizes = [2, 32], strides = [1, 1]} : vector<2x96xf32> to vector<2x32xf32>
    %570 = vector.extract_strided_slice %568 {offsets = [0, 32], sizes = [2, 32], strides = [1, 1]} : vector<2x96xf32> to vector<2x32xf32>
    %571 = vector.extract_strided_slice %568 {offsets = [0, 64], sizes = [2, 32], strides = [1, 1]} : vector<2x96xf32> to vector<2x32xf32>
    %572 = vector.extract_strided_slice %562 {offsets = [0, 96], sizes = [2, 32], strides = [1, 1]} : vector<2x128xf32> to vector<2x32xf32>
    %573 = math.tanh %572 : vector<2x32xf32>
    %574 = arith.mulf %570, %553 : vector<2x32xf32>
    %575 = arith.mulf %569, %573 : vector<2x32xf32>
    %576 = arith.addf %574, %575 : vector<2x32xf32>
    %577 = math.tanh %576 : vector<2x32xf32>
    %578 = arith.mulf %571, %577 : vector<2x32xf32>
    %579 = vector.shape_cast %121 : vector<2x1xi1> to vector<2x1xi1>
    %580 = vector.broadcast %579 : vector<2x1xi1> to vector<2x32xi1>
    %581 = arith.select %580, %578, %550 : vector<2x32xi1>, vector<2x32xf32>
    %582 = vector.shape_cast %121 : vector<2x1xi1> to vector<2x1xi1>
    %583 = vector.broadcast %582 : vector<2x1xi1> to vector<2x32xi1>
    %584 = arith.select %583, %576, %553 : vector<2x32xi1>, vector<2x32xf32>
    %cst_74 = arith.constant 0.000000e+00 : f32
    %585 = vector.shape_cast %121 : vector<2x1xi1> to vector<2x1xi1>
    %586 = vector.broadcast %585 : vector<2x1xi1> to vector<2x32xi1>
    %587 = vector.broadcast %cst_74 : f32 to vector<2x32xf32>
    %588 = arith.select %586, %578, %587 : vector<2x32xi1>, vector<2x32xf32>
    %589 = vector.extract_strided_slice %90 {offsets = [15, 0, 0], sizes = [1, 2, 128], strides = [1, 1, 1]} : vector<16x2x128xf32> to vector<1x2x128xf32>
    %590 = vector.shape_cast %589 : vector<1x2x128xf32> to vector<2x128xf32>
    %591 = arith.truncf %581 : vector<2x32xf32> to vector<2x32xbf16>
    %cst_75 = arith.constant dense<0.000000e+00> : vector<2x128xf32>
    %592 = tpu.matmul %591, %11, %cst_75 {dimension_numbers = #tpu.dot_dimension_numbers<[1], [0], [0], [1], [0, 0, 1, 1], [], []>} : vector<2x32xbf16>, vector<32x128xbf16>, vector<2x128xf32> -> vector<2x128xf32>
    %593 = arith.addf %590, %592 : vector<2x128xf32>
    %594 = vector.extract_strided_slice %593 {offsets = [0, 0], sizes = [2, 96], strides = [1, 1]} : vector<2x128xf32> to vector<2x96xf32>
    %595 = arith.negf %594 : vector<2x96xf32>
    %596 = math.exp %595 : vector<2x96xf32>
    %cst_76 = arith.constant 1.000000e+00 : f32
    %597 = vector.broadcast %cst_76 : f32 to vector<2x96xf32>
    %598 = arith.addf %597, %596 : vector<2x96xf32>
    %599 = arith.divf %597, %598 : vector<2x96xf32>
    %600 = vector.extract_strided_slice %599 {offsets = [0, 0], sizes = [2, 32], strides = [1, 1]} : vector<2x96xf32> to vector<2x32xf32>
    %601 = vector.extract_strided_slice %599 {offsets = [0, 32], sizes = [2, 32], strides = [1, 1]} : vector<2x96xf32> to vector<2x32xf32>
    %602 = vector.extract_strided_slice %599 {offsets = [0, 64], sizes = [2, 32], strides = [1, 1]} : vector<2x96xf32> to vector<2x32xf32>
    %603 = vector.extract_strided_slice %593 {offsets = [0, 96], sizes = [2, 32], strides = [1, 1]} : vector<2x128xf32> to vector<2x32xf32>
    %604 = math.tanh %603 : vector<2x32xf32>
    %605 = arith.mulf %601, %584 : vector<2x32xf32>
    %606 = arith.mulf %600, %604 : vector<2x32xf32>
    %607 = arith.addf %605, %606 : vector<2x32xf32>
    %608 = math.tanh %607 : vector<2x32xf32>
    %609 = arith.mulf %602, %608 : vector<2x32xf32>
    %cst_77 = arith.constant 0.000000e+00 : f32
    %610 = vector.shape_cast %123 : vector<2x1xi1> to vector<2x1xi1>
    %611 = vector.broadcast %610 : vector<2x1xi1> to vector<2x32xi1>
    %612 = vector.broadcast %cst_77 : f32 to vector<2x32xf32>
    %613 = arith.select %611, %609, %612 : vector<2x32xi1>, vector<2x32xf32>
    %614 = tpu.concatenate %154, %185, %216, %247, %278, %309, %340, %371, %402, %433, %464, %495, %526, %557, %588, %613 in 0 : vector<2x32xf32>, vector<2x32xf32>, vector<2x32xf32>, vector<2x32xf32>, vector<2x32xf32>, vector<2x32xf32>, vector<2x32xf32>, vector<2x32xf32>, vector<2x32xf32>, vector<2x32xf32>, vector<2x32xf32>, vector<2x32xf32>, vector<2x32xf32>, vector<2x32xf32>, vector<2x32xf32>, vector<2x32xf32> -> vector<32x32xf32>
    %615 = arith.truncf %614 : vector<32x32xf32> to vector<32x32xbf16>
    %cst_78 = arith.constant dense<0.000000e+00> : vector<32x128xf32>
    %616 = tpu.matmul %615, %12, %cst_78 {dimension_numbers = #tpu.dot_dimension_numbers<[1], [0], [0], [1], [0, 0, 1, 1], [], []>} : vector<32x32xbf16>, vector<32x128xbf16>, vector<32x128xf32> -> vector<32x128xf32>
    %617 = vector.broadcast %2 : vector<1x128xf32> to vector<32x128xf32>
    %618 = arith.addf %616, %617 : vector<32x128xf32>
    %cst_79 = arith.constant dense<0xFF800000> : vector<32xf32>
    %619 = vector.multi_reduction <maximumf>, %618, %cst_79 [1] : vector<32x128xf32> to vector<32xf32>
    %620 = vector.shape_cast %619 : vector<32xf32> to vector<32x1xf32>
    %621 = vector.broadcast %620 : vector<32x1xf32> to vector<32x128xf32>
    %622 = arith.subf %618, %621 : vector<32x128xf32>
    %623 = math.exp %622 : vector<32x128xf32>
    %624 = vector.broadcast %620 : vector<32x1xf32> to vector<32x128xf32>
    %625 = arith.subf %618, %624 : vector<32x128xf32>
    %cst_80 = arith.constant dense<0.000000e+00> : vector<32xf32>
    %626 = vector.multi_reduction <add>, %623, %cst_80 [1] : vector<32x128xf32> to vector<32xf32>
    %627 = vector.shape_cast %626 : vector<32xf32> to vector<32x1xf32>
    %628 = math.log %627 : vector<32x1xf32>
    %629 = vector.broadcast %628 : vector<32x1xf32> to vector<32x128xf32>
    %630 = arith.subf %625, %629 : vector<32x128xf32>
    %c0_81 = arith.constant 0 : index
    %c0_82 = arith.constant 0 : index
    %631 = vector.load %arg6[%c0_81, %c0_82] : memref<32x128xf32, #tpu.memory_space<vmem>>, vector<32x128xf32>
    tpu.vector_store %arg6[%c0_81, %c0_82], %630 {strides = array<i32>} : memref<32x128xf32, #tpu.memory_space<vmem>>, vector<32x128xf32>,
    return
  }
}

</mosaic_0001>

<llo_original>
// kernel: cnn_lstm_forward.1
$region0: #{cnn_lstm_forward.1}
  #allocation0 [shape = 'u32[]', space=smem, size = 0x4, offset = 0x4, fixed_abs, tag = 'smem constant byte address 0x4 - core index']
  #allocation1 [shape = 'u32[72,128]{1,0:T(1,128)}', space=vmem, size = 0x9000, scoped, tag = 'internal scratch']
  %s0 = inlined_call_operand.vmem [shape: f32[16,2,8], index: 0, kind: input, shape index: {}]
  %s1 = inlined_call_operand.vmem [shape: s32[2,1], index: 1, kind: input, shape index: {}]
  %s2 = inlined_call_operand.vmem [shape: bf16[24,16], index: 2, kind: input, shape index: {}]
  %s3 = inlined_call_operand.vmem [shape: bf16[48,16], index: 3, kind: input, shape index: {}]
  %s4 = inlined_call_operand.vmem [shape: bf16[80,128], index: 4, kind: input, shape index: {}]
  %s5 = inlined_call_operand.vmem [shape: f32[10,128], index: 5, kind: input, shape index: {}]
  %s6 = inlined_call_operand.vmem [shape: f32[32,128], index: 6, kind: output, shape index: {}]
  %s7 = sld [smem:[#allocation0]]
  $region34: #{cnn_lstm_forward.1} parent=0
    _
  %s9 = ssub.s32 1, %s7
  %s10 = scalar_select 0, %s9, %s7
  // Predicated region
  $region2: #{cnn_lstm_forward.1} parent=0 // pred_check
    _
  $region3: #{cnn_lstm_forward.1} parent=0 // pred_check_branch
    %12 = sbr.rel (0) target = $region5
  $region4: #{cnn_lstm_forward.1} parent=0 // pred_region
    _
  $region5: #{cnn_lstm_forward.1} parent=0 // pred_fallthru
    _
  // Predicated region
  $region6: #{cnn_lstm_forward.1} parent=0 // pred_check
    _
  $region7: #{cnn_lstm_forward.1} parent=0 // pred_check_branch
    %14 = sbr.rel (0) target = $region9
  $region8: #{cnn_lstm_forward.1} parent=0 // pred_region
    _
  $region9: #{cnn_lstm_forward.1} parent=0 // pred_fallthru
    _
  // Predicated region
  $region10: #{cnn_lstm_forward.1} parent=0 // pred_check
    _
  $region11: #{cnn_lstm_forward.1} parent=0 // pred_check_branch
    %16 = sbr.rel (0) target = $region13
  $region12: #{cnn_lstm_forward.1} parent=0 // pred_region
    _
  $region13: #{cnn_lstm_forward.1} parent=0 // pred_fallthru
    _
  // Predicated region
  $region14: #{cnn_lstm_forward.1} parent=0 // pred_check
    _
  $region15: #{cnn_lstm_forward.1} parent=0 // pred_check_branch
    %18 = sbr.rel (0) target = $region17
  $region16: #{cnn_lstm_forward.1} parent=0 // pred_region
    _
  $region17: #{cnn_lstm_forward.1} parent=0 // pred_fallthru
    _
  // Predicated region
  $region18: #{cnn_lstm_forward.1} parent=0 // pred_check
    _
  $region19: #{cnn_lstm_forward.1} parent=0 // pred_check_branch
    %20 = sbr.rel (0) target = $region21
  $region20: #{cnn_lstm_forward.1} parent=0 // pred_region
    _
  $region21: #{cnn_lstm_forward.1} parent=0 // pred_fallthru
    _
  // Predicated region
  $region22: #{cnn_lstm_forward.1} parent=0 // pred_check
    _
  $region23: #{cnn_lstm_forward.1} parent=0 // pred_check_branch
    %22 = sbr.rel (0) target = $region25
  $region24: #{cnn_lstm_forward.1} parent=0 // pred_region
    _
  $region25: #{cnn_lstm_forward.1} parent=0 // pred_fallthru
    _
  %v24 = vld [vmem:[%s5] sm:$0xff]
  %v25 = vld [vmem:[%s5 + $0x8] sm:$0x3]
  %v26 = vld [vmem:[%s4] sm:$0xf]
  %v27 = vld [vmem:[%s4 + $0x4] sm:$0xf]
  %v28 = vld [vmem:[%s4 + $0x8] sm:$0xf]
  %v29 = vld [vmem:[%s4 + $0xc] sm:$0xf]
  %v30 = vld [vmem:[%s4 + $0x10] sm:$0xf]
  %v31 = vld [vmem:[%s4 + $0x14] sm:$0xf]
  %v32 = vld [vmem:[%s4 + $0x18] sm:$0xf]
  %v33 = vld [vmem:[%s4 + $0x1c] sm:$0xf]
  %v34 = vld [vmem:[%s4 + $0x20] sm:$0xf]
  %v35 = vld [vmem:[%s4 + $0x24] sm:$0xf]
  %v36 = vld [vmem:[%s0] sm:$0x3]
  %v37 = vld [vmem:[%s0 + $0x2] sm:$0x3]
  %v38 = vld [vmem:[%s0 + $0x4] sm:$0x3]
  %v39 = vld [vmem:[%s0 + $0x6] sm:$0x3]
  %v40 = vld [vmem:[%s0 + $0x8] sm:$0x3]
  %v41 = vld [vmem:[%s0 + $0xa] sm:$0x3]
  %v42 = vld [vmem:[%s0 + $0xc] sm:$0x3]
  %v43 = vld [vmem:[%s0 + $0xe] sm:$0x3]
  %v44 = vld [vmem:[%s0 + $0x10] sm:$0x3]
  %v45 = vld [vmem:[%s0 + $0x12] sm:$0x3]
  %v46 = vld [vmem:[%s0 + $0x14] sm:$0x3]
  %v47 = vld [vmem:[%s0 + $0x16] sm:$0x3]
  %v48 = vld [vmem:[%s0 + $0x18] sm:$0x3]
  %v49 = vld [vmem:[%s0 + $0x1a] sm:$0x3]
  %v50 = vld [vmem:[%s0 + $0x1c] sm:$0x3]
  %v51 = vld [vmem:[%s0 + $0x1e] sm:$0x3]
  %v52 = vpack.c.bf16 %v36, %v36
  %v53 = vpack.c.bf16 %v37, %v37
  %v54 = vpack.c.bf16 %v38, %v38
  %v55 = vpack.c.bf16 %v39, %v39
  %v56 = vpack.c.bf16 %v40, %v40
  %v57 = vpack.c.bf16 %v41, %v41
  %v58 = vpack.c.bf16 %v42, %v42
  %v59 = vpack.c.bf16 %v43, %v43
  %v60 = vpack.c.bf16 %v44, %v44
  %v61 = vpack.c.bf16 %v45, %v45
  %v62 = vpack.c.bf16 %v46, %v46
  %v63 = vpack.c.bf16 %v47, %v47
  %v64 = vpack.c.bf16 %v48, %v48
  %v65 = vpack.c.bf16 %v49, %v49
  %v66 = vpack.c.bf16 %v50, %v50
  %v67 = vpack.c.bf16 %v51, %v51
  %v68 = vld [vmem:[%s2] sm:$0xf]
  %v69 = vld [vmem:[%s2 + $0x4] sm:$0xf]
  %v70 = vld [vmem:[%s2 + $0x8] sm:$0xf]
  %v87 = vunpack.c.l.b16 %v52
  %v88 = vunpack.c.l.b16 %v53
  %v89 = vunpack.c.l.b16 %v54
  %v90 = vunpack.c.l.b16 %v55
  %v91 = vunpack.c.l.b16 %v56
  %v92 = vunpack.c.l.b16 %v57
  %v93 = vunpack.c.l.b16 %v58
  %v94 = vunpack.c.l.b16 %v59
  %v95 = vunpack.c.l.b16 %v60
  %v96 = vunpack.c.l.b16 %v61
  %v97 = vunpack.c.l.b16 %v62
  %v98 = vunpack.c.l.b16 %v63
  %v99 = vunpack.c.l.b16 %v64
  %v100 = vunpack.c.l.b16 %v65
  %v101 = vunpack.c.l.b16 %v66
  %v102 = vunpack.c.l.b16 %v67
  %v103 = vpack.c.b16 %v87, %v87
  %v104 = vpack.c.b16 %v88, %v88
  %v105 = vpack.c.b16 %v89, %v89
  %v106 = vpack.c.b16 %v90, %v90
  %v107 = vpack.c.b16 %v91, %v91
  %v108 = vpack.c.b16 %v92, %v92
  %v109 = vpack.c.b16 %v93, %v93
  %v110 = vpack.c.b16 %v94, %v94
  %v111 = vpack.c.b16 %v95, %v95
  %v112 = vpack.c.b16 %v96, %v96
  %v113 = vpack.c.b16 %v97, %v97
  %v114 = vpack.c.b16 %v98, %v98
  %v115 = vpack.c.b16 %v99, %v99
  %v116 = vpack.c.b16 %v100, %v100
  %v117 = vpack.c.b16 %v101, %v101
  %v118 = vpack.c.b16 %v102, %v102
  %119 = vrot.lane.b32.xlu0 %v103, 8
  %v120 = vpop.permute.xlu0 %119
  %121 = vrot.lane.b32.xlu0 %v104, 8
  %v122 = vpop.permute.xlu0 %121
  %123 = vrot.lane.b32.xlu0 %v105, 8
  %v124 = vpop.permute.xlu0 %123
  %125 = vrot.lane.b32.xlu0 %v106, 8
  %v126 = vpop.permute.xlu0 %125
  %127 = vrot.lane.b32.xlu0 %v107, 8
  %v128 = vpop.permute.xlu0 %127
  %129 = vrot.lane.b32.xlu0 %v108, 8
  %v130 = vpop.permute.xlu0 %129
  %131 = vrot.lane.b32.xlu0 %v109, 8
  %v132 = vpop.permute.xlu0 %131
  %133 = vrot.lane.b32.xlu0 %v110, 8
  %v134 = vpop.permute.xlu0 %133
  %135 = vrot.lane.b32.xlu0 %v111, 8
  %v136 = vpop.permute.xlu0 %135
  %137 = vrot.lane.b32.xlu0 %v112, 8
  %v138 = vpop.permute.xlu0 %137
  %139 = vrot.lane.b32.xlu0 %v113, 8
  %v140 = vpop.permute.xlu0 %139
  %141 = vrot.lane.b32.xlu0 %v114, 8
  %v142 = vpop.permute.xlu0 %141
  %143 = vrot.lane.b32.xlu0 %v115, 8
  %v144 = vpop.permute.xlu0 %143
  %145 = vrot.lane.b32.xlu0 %v116, 8
  %v146 = vpop.permute.xlu0 %145
  %147 = vrot.lane.b32.xlu0 %v117, 8
  %v148 = vpop.permute.xlu0 %147
  %149 = vrot.lane.b32.xlu0 %v118, 8
  %v150 = vpop.permute.xlu0 %149
  %v152 = vunpack.c.l.b16 0
  %v153 = vpack.c.b16 %v152, %v152
  %154 = vrot.lane.b32.xlu0 %v104, 16
  %v155 = vpop.permute.xlu0 %154
  %156 = vrot.lane.b32.xlu0 %v105, 16
  %v157 = vpop.permute.xlu0 %156
  %158 = vrot.lane.b32.xlu0 %v106, 16
  %v159 = vpop.permute.xlu0 %158
  %160 = vrot.lane.b32.xlu0 %v107, 16
  %v161 = vpop.permute.xlu0 %160
  %162 = vrot.lane.b32.xlu0 %v108, 16
  %v163 = vpop.permute.xlu0 %162
  %164 = vrot.lane.b32.xlu0 %v109, 16
  %v165 = vpop.permute.xlu0 %164
  %166 = vrot.lane.b32.xlu0 %v110, 16
  %v167 = vpop.permute.xlu0 %166
  %168 = vrot.lane.b32.xlu0 %v111, 16
  %v169 = vpop.permute.xlu0 %168
  %170 = vrot.lane.b32.xlu0 %v112, 16
  %v171 = vpop.permute.xlu0 %170
  %172 = vrot.lane.b32.xlu0 %v113, 16
  %v173 = vpop.permute.xlu0 %172
  %174 = vrot.lane.b32.xlu0 %v114, 16
  %v175 = vpop.permute.xlu0 %174
  %176 = vrot.lane.b32.xlu0 %v115, 16
  %v177 = vpop.permute.xlu0 %176
  %178 = vrot.lane.b32.xlu0 %v116, 16
  %v179 = vpop.permute.xlu0 %178
  %180 = vrot.lane.b32.xlu0 %v117, 16
  %v181 = vpop.permute.xlu0 %180
  %182 = vrot.lane.b32.xlu0 %v118, 16
  %v183 = vpop.permute.xlu0 %182
  %184 = vrot.lane.b32.xlu0 %v153, 16
  %v185 = vpop.permute.xlu0 %184
  %vm186 = vcmask 64512
  %v189 = vsel %vm186, 0, %v120
  %v192 = vsel %vm186, %v52, %v122
  %v195 = vsel %vm186, %v53, %v124
  %v198 = vsel %vm186, %v54, %v126
  %v201 = vsel %vm186, %v55, %v128
  %v204 = vsel %vm186, %v56, %v130
  %v207 = vsel %vm186, %v57, %v132
  %v210 = vsel %vm186, %v58, %v134
  %v213 = vsel %vm186, %v59, %v136
  %v216 = vsel %vm186, %v60, %v138
  %v219 = vsel %vm186, %v61, %v140
  %v222 = vsel %vm186, %v62, %v142
  %v225 = vsel %vm186, %v63, %v144
  %v228 = vsel %vm186, %v64, %v146
  %v231 = vsel %vm186, %v65, %v148
  %v234 = vsel %vm186, %v66, %v150
  %vm235 = vcmask 130048
  %v237 = vsel %vm235, %v189, %v155
  %v239 = vsel %vm235, %v192, %v157
  %v241 = vsel %vm235, %v195, %v159
  %v243 = vsel %vm235, %v198, %v161
  %v245 = vsel %vm235, %v201, %v163
  %v247 = vsel %vm235, %v204, %v165
  %v249 = vsel %vm235, %v207, %v167
  %v251 = vsel %vm235, %v210, %v169
  %v253 = vsel %vm235, %v213, %v171
  %v255 = vsel %vm235, %v216, %v173
  %v257 = vsel %vm235, %v219, %v175
  %v259 = vsel %vm235, %v222, %v177
  %v261 = vsel %vm235, %v225, %v179
  %v263 = vsel %vm235, %v228, %v181
  %v265 = vsel %vm235, %v231, %v183
  %v267 = vsel %vm235, %v234, %v185
  %268 = vst [vmem:[#allocation1] ss:$9 sm:$0xff] %v237
  %s269 = scalar_lea.vmem [#allocation1], 1
  %270 = vst [vmem:[%s269] ss:$9 sm:$0xff] %v239
  %s271 = scalar_lea.vmem [#allocation1], 2
  %272 = vst [vmem:[%s271] ss:$9 sm:$0xff] %v241
  %s273 = scalar_lea.vmem [#allocation1], 3
  %274 = vst [vmem:[%s273] ss:$9 sm:$0xff] %v243
  %s275 = scalar_lea.vmem [#allocation1], 4
  %276 = vst [vmem:[%s275] ss:$9 sm:$0xff] %v245
  %s277 = scalar_lea.vmem [#allocation1], 5
  %278 = vst [vmem:[%s277] ss:$9 sm:$0xff] %v247
  %s279 = scalar_lea.vmem [#allocation1], 6
  %280 = vst [vmem:[%s279] ss:$9 sm:$0xff] %v249
  %s281 = scalar_lea.vmem [#allocation1], 7
  %282 = vst [vmem:[%s281] ss:$9 sm:$0xff] %v251
  %v283 = vld [vmem:[#allocation1] sm:$0xff]
  %284 = vst [vmem:[#allocation1] ss:$9 sm:$0xff] %v253
  %285 = vst [vmem:[%s269] ss:$9 sm:$0xff] %v255
  %286 = vst [vmem:[%s271] ss:$9 sm:$0xff] %v257
  %287 = vst [vmem:[%s273] ss:$9 sm:$0xff] %v259
  %288 = vst [vmem:[%s275] ss:$9 sm:$0xff] %v261
  %289 = vst [vmem:[%s277] ss:$9 sm:$0xff] %v263
  %290 = vst [vmem:[%s279] ss:$9 sm:$0xff] %v265
  %291 = vst [vmem:[%s281] ss:$9 sm:$0xff] %v267
  %v292 = vld [vmem:[#allocation1] sm:$0xff]
  %v296 = vunpack.c.l.b16 %v68
  %v297 = vunpack.c.l.b16 %v69
  %v298 = vunpack.c.l.b16 %v70
  %v299 = vpack.c.b16 %v297, %v296
  %v300 = vpack.c.b16 %v298, %v298
  %vm302 = vcmask 195584
  %v303 = vsel %vm302, %v283, 0
  %v305 = vsel %vm302, %v292, 0
  %vm307 = vcmask 1043456
  %v309 = vsel %vm307, %v300, 0
  %311 = vmatpush.bf16.msra.mxu0 0
  %312 = vmatpush.bf16.msra.mxu0 0
  %313 = vmatpush.bf16.msra.mxu0 0
  %314 = vmatpush.bf16.msra.mxu0 0
  %315 = vmatpush.bf16.msra.mxu0 0
  %316 = vmatpush.bf16.msra.mxu0 0
  %317 = vmatpush.bf16.msra.mxu0 %v309
  %318 = vmatpush.bf16.msra.mxu0 %v299
  %319 = vmatmul.bf16.gmra.mxu0 %v303
  %v320 = vpop.f32.mrf.mxu0
  %v321 = vadd.f32 0.0, %v320
  %v322 = vpop.f32.mrf.mxu0
  %v323 = vadd.f32 0.0, %v322
  %324 = vmatmul.bf16.gmra.mxu0 %v305
  %v325 = vpop.f32.mrf.mxu0
  %v326 = vadd.f32 0.0, %v325
  %v327 = vpop.f32.mrf.mxu0
  %v328 = vadd.f32 0.0, %v327
  %329 = vdwg.mxu0
  %v334 = vrot.slane %v321, 2
  %v335 = vrot.slane %v321, 4
  %v336 = vrot.slane %v321, 6
  %v337 = vrot.slane %v323, 2
  %v338 = vrot.slane %v323, 4
  %v339 = vrot.slane %v323, 6
  %v340 = vrot.slane %v326, 2
  %v341 = vrot.slane %v326, 4
  %v342 = vrot.slane %v326, 6
  %v343 = vrot.slane %v328, 2
  %v344 = vrot.slane %v328, 4
  %v345 = vrot.slane %v328, 6
  %vm358 = vcmask 123904
  %v359 = vsel %vm358, %v321, 0.0
  %v360 = vsel %vm358, %v334, 0.0
  %v361 = vadd.f32 %v359, %v360
  %v362 = vsel %vm358, %v335, 0.0
  %v363 = vadd.f32 %v361, %v362
  %v364 = vsel %vm358, %v336, 0.0
  %v365 = vadd.f32 %v363, %v364
  %v366 = vsel %vm358, %v323, 0.0
  %v367 = vadd.f32 %v365, %v366
  %v368 = vsel %vm358, %v337, 0.0
  %v369 = vadd.f32 %v367, %v368
  %v370 = vsel %vm358, %v338, 0.0
  %v371 = vadd.f32 %v369, %v370
  %v372 = vsel %vm358, %v339, 0.0
  %v373 = vadd.f32 %v371, %v372
  %v374 = vsel %vm358, %v326, 0.0
  %v375 = vadd.f32 %v373, %v374
  %v376 = vsel %vm358, %v340, 0.0
  %v377 = vadd.f32 %v375, %v376
  %v378 = vsel %vm358, %v341, 0.0
  %v379 = vadd.f32 %v377, %v378
  %v380 = vsel %vm358, %v342, 0.0
  %v381 = vadd.f32 %v379, %v380
  %v382 = vsel %vm358, %v328, 0.0
  %v383 = vadd.f32 %v381, %v382
  %v384 = vsel %vm358, %v343, 0.0
  %v385 = vadd.f32 %v383, %v384
  %v386 = vsel %vm358, %v344, 0.0
  %v387 = vadd.f32 %v385, %v386
  %v388 = vsel %vm358, %v345, 0.0
  %v389 = vadd.f32 %v387, %v388
  %v390 = vrot.slane %v389, 4
  %v391 = vadd.f32 %v389, %v390
  %v392 = vrot.slane %v391, 2
  %v393 = vadd.f32 %v391, %v392
  %v394 = vrot.slane %v393, 1
  %v395 = vadd.f32 %v393, %v394
  %v396 = vrcp.pop 32.0
  %v397 = vmul.f32 32.0, %v396
  %v398 = vsub.f32 1.0, %v397
  %v399 = vmul.f32 %v396, %v398
  %v400 = vadd.f32 %v396, %v399
  %vm401 = vweird.f32 %v396
  %v402 = vsel %vm401, %v396, %v400
  %v403 = vmul.f32 %v395, %v402
  %v404 = vsub.f32 %v321, %v403
  %v405 = vsub.f32 %v334, %v403
  %v406 = vsub.f32 %v335, %v403
  %v407 = vsub.f32 %v336, %v403
  %v408 = vsub.f32 %v323, %v403
  %v409 = vsub.f32 %v337, %v403
  %v410 = vsub.f32 %v338, %v403
  %v411 = vsub.f32 %v339, %v403
  %v412 = vsub.f32 %v326, %v403
  %v413 = vsub.f32 %v340, %v403
  %v414 = vsub.f32 %v341, %v403
  %v415 = vsub.f32 %v342, %v403
  %v416 = vsub.f32 %v328, %v403
  %v417 = vsub.f32 %v343, %v403
  %v418 = vsub.f32 %v344, %v403
  %v419 = vsub.f32 %v345, %v403
  %v420 = vmul.f32 %v404, %v404
  %v421 = vmul.f32 %v405, %v405
  %v422 = vmul.f32 %v406, %v406
  %v423 = vmul.f32 %v407, %v407
  %v424 = vmul.f32 %v408, %v408
  %v425 = vmul.f32 %v409, %v409
  %v426 = vmul.f32 %v410, %v410
  %v427 = vmul.f32 %v411, %v411
  %v428 = vmul.f32 %v412, %v412
  %v429 = vmul.f32 %v413, %v413
  %v430 = vmul.f32 %v414, %v414
  %v431 = vmul.f32 %v415, %v415
  %v432 = vmul.f32 %v416, %v416
  %v433 = vmul.f32 %v417, %v417
  %v434 = vmul.f32 %v418, %v418
  %v435 = vmul.f32 %v419, %v419
  %v436 = vsel %vm358, %v420, 0.0
  %v437 = vsel %vm358, %v421, 0.0
  %v438 = vadd.f32 %v436, %v437
  %v439 = vsel %vm358, %v422, 0.0
  %v440 = vadd.f32 %v438, %v439
  %v441 = vsel %vm358, %v423, 0.0
  %v442 = vadd.f32 %v440, %v441
  %v443 = vsel %vm358, %v424, 0.0
  %v444 = vadd.f32 %v442, %v443
  %v445 = vsel %vm358, %v425, 0.0
  %v446 = vadd.f32 %v444, %v445
  %v447 = vsel %vm358, %v426, 0.0
  %v448 = vadd.f32 %v446, %v447
  %v449 = vsel %vm358, %v427, 0.0
  %v450 = vadd.f32 %v448, %v449
  %v451 = vsel %vm358, %v428, 0.0
  %v452 = vadd.f32 %v450, %v451
  %v453 = vsel %vm358, %v429, 0.0
  %v454 = vadd.f32 %v452, %v453
  %v455 = vsel %vm358, %v430, 0.0
  %v456 = vadd.f32 %v454, %v455
  %v457 = vsel %vm358, %v431, 0.0
  %v458 = vadd.f32 %v456, %v457
  %v459 = vsel %vm358, %v432, 0.0
  %v460 = vadd.f32 %v458, %v459
  %v461 = vsel %vm358, %v433, 0.0
  %v462 = vadd.f32 %v460, %v461
  %v463 = vsel %vm358, %v434, 0.0
  %v464 = vadd.f32 %v462, %v463
  %v465 = vsel %vm358, %v435, 0.0
  %v466 = vadd.f32 %v464, %v465
  %v467 = vrot.slane %v466, 4
  %v468 = vadd.f32 %v466, %v467
  %v469 = vrot.slane %v468, 2
  %v470 = vadd.f32 %v468, %v469
  %v471 = vrot.slane %v470, 1
  %v472 = vadd.f32 %v470, %v471
  %v473 = vmul.f32 %v472, %v402
  %v474 = vadd.f32 %v473, 1e-05
  %v475 = vrsqrt.pop %v474
  %v476 = vmul.f32 %v475, %v474
  %v477 = vmul.f32 %v476, %v475
  %v478 = vmul.f32 0.5, %v477
  %v479 = vsub.f32 1.5, %v478
  %v480 = vmul.f32 %v475, %v479
  %vm481 = vweird.f32 %v474
  %vm482 = vweird.f32 %v475
  %vm483 = vmor %vm481, %vm482
  %v484 = vsel %vm483, %v475, %v480
  %v485 = vmul.f32 %v404, %v484
  %v486 = vmul.f32 %v405, %v484
  %v487 = vmul.f32 %v406, %v484
  %v488 = vmul.f32 %v407, %v484
  %v489 = vmul.f32 %v408, %v484
  %v490 = vmul.f32 %v409, %v484
  %v491 = vmul.f32 %v410, %v484
  %v492 = vmul.f32 %v411, %v484
  %v493 = vmul.f32 %v412, %v484
  %v494 = vmul.f32 %v413, %v484
  %v495 = vmul.f32 %v414, %v484
  %v496 = vmul.f32 %v415, %v484
  %v497 = vmul.f32 %v416, %v484
  %v498 = vmul.f32 %v417, %v484
  %v499 = vmul.f32 %v418, %v484
  %v500 = vmul.f32 %v419, %v484
  %v501 = vperm.slane %v24, 2
  %v502 = vmul.f32 %v485, %v501
  %v503 = vmul.f32 %v486, %v501
  %v504 = vmul.f32 %v487, %v501
  %v505 = vmul.f32 %v488, %v501
  %v506 = vmul.f32 %v489, %v501
  %v507 = vmul.f32 %v490, %v501
  %v508 = vmul.f32 %v491, %v501
  %v509 = vmul.f32 %v492, %v501
  %v510 = vmul.f32 %v493, %v501
  %v511 = vmul.f32 %v494, %v501
  %v512 = vmul.f32 %v495, %v501
  %v513 = vmul.f32 %v496, %v501
  %v514 = vmul.f32 %v497, %v501
  %v515 = vmul.f32 %v498, %v501
  %v516 = vmul.f32 %v499, %v501
  %v517 = vmul.f32 %v500, %v501
  %v518 = vperm.slane %v24, 3
  %v519 = vadd.f32 %v502, %v518
  %v520 = vadd.f32 %v503, %v518
  %v521 = vadd.f32 %v504, %v518
  %v522 = vadd.f32 %v505, %v518
  %v523 = vadd.f32 %v506, %v518
  %v524 = vadd.f32 %v507, %v518
  %v525 = vadd.f32 %v508, %v518
  %v526 = vadd.f32 %v509, %v518
  %v527 = vadd.f32 %v510, %v518
  %v528 = vadd.f32 %v511, %v518
  %v529 = vadd.f32 %v512, %v518
  %v530 = vadd.f32 %v513, %v518
  %v531 = vadd.f32 %v514, %v518
  %v532 = vadd.f32 %v515, %v518
  %v533 = vadd.f32 %v516, %v518
  %v534 = vadd.f32 %v517, %v518
  %v535 = vmax.f32 %v519, 0.0
  %v536 = vmax.f32 %v520, 0.0
  %v537 = vmax.f32 %v521, 0.0
  %v538 = vmax.f32 %v522, 0.0
  %v539 = vmax.f32 %v523, 0.0
  %v540 = vmax.f32 %v524, 0.0
  %v541 = vmax.f32 %v525, 0.0
  %v542 = vmax.f32 %v526, 0.0
  %v543 = vmax.f32 %v527, 0.0
  %v544 = vmax.f32 %v528, 0.0
  %v545 = vmax.f32 %v529, 0.0
  %v546 = vmax.f32 %v530, 0.0
  %v547 = vmax.f32 %v531, 0.0
  %v548 = vmax.f32 %v532, 0.0
  %v549 = vmax.f32 %v533, 0.0
  %v550 = vmax.f32 %v534, 0.0
  %v551 = vpack.c.bf16 %v535, %v535
  %v552 = vpack.c.bf16 %v536, %v536
  %v553 = vpack.c.bf16 %v537, %v537
  %v554 = vpack.c.bf16 %v538, %v538
  %v555 = vpack.c.bf16 %v539, %v539
  %v556 = vpack.c.bf16 %v540, %v540
  %v557 = vpack.c.bf16 %v541, %v541
  %v558 = vpack.c.bf16 %v542, %v542
  %v559 = vpack.c.bf16 %v543, %v543
  %v560 = vpack.c.bf16 %v544, %v544
  %v561 = vpack.c.bf16 %v545, %v545
  %v562 = vpack.c.bf16 %v546, %v546
  %v563 = vpack.c.bf16 %v547, %v547
  %v564 = vpack.c.bf16 %v548, %v548
  %v565 = vpack.c.bf16 %v549, %v549
  %v566 = vpack.c.bf16 %v550, %v550
  %v567 = vld [vmem:[%s3] sm:$0xf]
  %v568 = vld [vmem:[%s3 + $0x4] sm:$0xf]
  %v569 = vld [vmem:[%s3 + $0x8] sm:$0xf]
  %v570 = vld [vmem:[%s3 + $0xc] sm:$0xf]
  %v571 = vld [vmem:[%s3 + $0x10] sm:$0xf]
  %v572 = vld [vmem:[%s3 + $0x14] sm:$0xf]
  %v589 = vunpack.c.l.b16 %v551
  %v590 = vunpack.c.l.b16 %v552
  %v591 = vunpack.c.l.b16 %v553
  %v592 = vunpack.c.l.b16 %v554
  %v593 = vunpack.c.l.b16 %v555
  %v594 = vunpack.c.l.b16 %v556
  %v595 = vunpack.c.l.b16 %v557
  %v596 = vunpack.c.l.b16 %v558
  %v597 = vunpack.c.l.b16 %v559
  %v598 = vunpack.c.l.b16 %v560
  %v599 = vunpack.c.l.b16 %v561
  %v600 = vunpack.c.l.b16 %v562
  %v601 = vunpack.c.l.b16 %v563
  %v602 = vunpack.c.l.b16 %v564
  %v603 = vunpack.c.l.b16 %v565
  %v604 = vunpack.c.l.b16 %v566
  %v605 = vpack.c.b16 %v589, %v589
  %v606 = vpack.c.b16 %v590, %v590
  %v607 = vpack.c.b16 %v591, %v591
  %v608 = vpack.c.b16 %v592, %v592
  %v609 = vpack.c.b16 %v593, %v593
  %v610 = vpack.c.b16 %v594, %v594
  %v611 = vpack.c.b16 %v595, %v595
  %v612 = vpack.c.b16 %v596, %v596
  %v613 = vpack.c.b16 %v597, %v597
  %v614 = vpack.c.b16 %v598, %v598
  %v615 = vpack.c.b16 %v599, %v599
  %v616 = vpack.c.b16 %v600, %v600
  %v617 = vpack.c.b16 %v601, %v601
  %v618 = vpack.c.b16 %v602, %v602
  %v619 = vpack.c.b16 %v603, %v603
  %v620 = vpack.c.b16 %v604, %v604
  %621 = vrot.lane.b32.xlu0 %v605, 16
  %v622 = vpop.permute.xlu0 %621
  %623 = vrot.lane.b32.xlu0 %v606, 16
  %v624 = vpop.permute.xlu0 %623
  %625 = vrot.lane.b32.xlu0 %v607, 16
  %v626 = vpop.permute.xlu0 %625
  %627 = vrot.lane.b32.xlu0 %v608, 16
  %v628 = vpop.permute.xlu0 %627
  %629 = vrot.lane.b32.xlu0 %v609, 16
  %v630 = vpop.permute.xlu0 %629
  %631 = vrot.lane.b32.xlu0 %v610, 16
  %v632 = vpop.permute.xlu0 %631
  %633 = vrot.lane.b32.xlu0 %v611, 16
  %v634 = vpop.permute.xlu0 %633
  %635 = vrot.lane.b32.xlu0 %v612, 16
  %v636 = vpop.permute.xlu0 %635
  %637 = vrot.lane.b32.xlu0 %v613, 16
  %v638 = vpop.permute.xlu0 %637
  %639 = vrot.lane.b32.xlu0 %v614, 16
  %v640 = vpop.permute.xlu0 %639
  %641 = vrot.lane.b32.xlu0 %v615, 16
  %v642 = vpop.permute.xlu0 %641
  %643 = vrot.lane.b32.xlu0 %v616, 16
  %v644 = vpop.permute.xlu0 %643
  %645 = vrot.lane.b32.xlu0 %v617, 16
  %v646 = vpop.permute.xlu0 %645
  %647 = vrot.lane.b32.xlu0 %v618, 16
  %v648 = vpop.permute.xlu0 %647
  %649 = vrot.lane.b32.xlu0 %v619, 16
  %v650 = vpop.permute.xlu0 %649
  %651 = vrot.lane.b32.xlu0 %v620, 16
  %v652 = vpop.permute.xlu0 %651
  %653 = vrot.lane.b32.xlu0 %v606, 32
  %v654 = vpop.permute.xlu0 %653
  %655 = vrot.lane.b32.xlu0 %v607, 32
  %v656 = vpop.permute.xlu0 %655
  %657 = vrot.lane.b32.xlu0 %v608, 32
  %v658 = vpop.permute.xlu0 %657
  %659 = vrot.lane.b32.xlu0 %v609, 32
  %v660 = vpop.permute.xlu0 %659
  %661 = vrot.lane.b32.xlu0 %v610, 32
  %v662 = vpop.permute.xlu0 %661
  %663 = vrot.lane.b32.xlu0 %v611, 32
  %v664 = vpop.permute.xlu0 %663
  %665 = vrot.lane.b32.xlu0 %v612, 32
  %v666 = vpop.permute.xlu0 %665
  %667 = vrot.lane.b32.xlu0 %v613, 32
  %v668 = vpop.permute.xlu0 %667
  %669 = vrot.lane.b32.xlu0 %v614, 32
  %v670 = vpop.permute.xlu0 %669
  %671 = vrot.lane.b32.xlu0 %v615, 32
  %v672 = vpop.permute.xlu0 %671
  %673 = vrot.lane.b32.xlu0 %v616, 32
  %v674 = vpop.permute.xlu0 %673
  %675 = vrot.lane.b32.xlu0 %v617, 32
  %v676 = vpop.permute.xlu0 %675
  %677 = vrot.lane.b32.xlu0 %v618, 32
  %v678 = vpop.permute.xlu0 %677
  %679 = vrot.lane.b32.xlu0 %v619, 32
  %v680 = vpop.permute.xlu0 %679
  %681 = vrot.lane.b32.xlu0 %v620, 32
  %v682 = vpop.permute.xlu0 %681
  %683 = vrot.lane.b32.xlu0 %v153, 32
  %v684 = vpop.permute.xlu0 %683
  %v686 = vsel %vm235, 0, %v622
  %v689 = vsel %vm235, %v551, %v624
  %v692 = vsel %vm235, %v552, %v626
  %v695 = vsel %vm235, %v553, %v628
  %v698 = vsel %vm235, %v554, %v630
  %v701 = vsel %vm235, %v555, %v632
  %v704 = vsel %vm235, %v556, %v634
  %v707 = vsel %vm235, %v557, %v636
  %v710 = vsel %vm235, %v558, %v638
  %v713 = vsel %vm235, %v559, %v640
  %v716 = vsel %vm235, %v560, %v642
  %v719 = vsel %vm235, %v561, %v644
  %v722 = vsel %vm235, %v562, %v646
  %v725 = vsel %vm235, %v563, %v648
  %v728 = vsel %vm235, %v564, %v650
  %v731 = vsel %vm235, %v565, %v652
  %vm732 = vcmask 261120
  %v734 = vsel %vm732, %v686, %v654
  %v736 = vsel %vm732, %v689, %v656
  %v738 = vsel %vm732, %v692, %v658
  %v740 = vsel %vm732, %v695, %v660
  %v742 = vsel %vm732, %v698, %v662
  %v744 = vsel %vm732, %v701, %v664
  %v746 = vsel %vm732, %v704, %v666
  %v748 = vsel %vm732, %v707, %v668
  %v750 = vsel %vm732, %v710, %v670
  %v752 = vsel %vm732, %v713, %v672
  %v754 = vsel %vm732, %v716, %v674
  %v756 = vsel %vm732, %v719, %v676
  %v758 = vsel %vm732, %v722, %v678
  %v760 = vsel %vm732, %v725, %v680
  %v762 = vsel %vm732, %v728, %v682
  %v764 = vsel %vm732, %v731, %v684
  %765 = vst [vmem:[#allocation1] ss:$9 sm:$0xff] %v734
  %s766 = scalar_lea.vmem [#allocation1], 1
  %767 = vst [vmem:[%s766] ss:$9 sm:$0xff] %v736
  %s768 = scalar_lea.vmem [#allocation1], 2
  %769 = vst [vmem:[%s768] ss:$9 sm:$0xff] %v738
  %s770 = scalar_lea.vmem [#allocation1], 3
  %771 = vst [vmem:[%s770] ss:$9 sm:$0xff] %v740
  %s772 = scalar_lea.vmem [#allocation1], 4
  %773 = vst [vmem:[%s772] ss:$9 sm:$0xff] %v742
  %s774 = scalar_lea.vmem [#allocation1], 5
  %775 = vst [vmem:[%s774] ss:$9 sm:$0xff] %v744
  %s776 = scalar_lea.vmem [#allocation1], 6
  %777 = vst [vmem:[%s776] ss:$9 sm:$0xff] %v746
  %s778 = scalar_lea.vmem [#allocation1], 7
  %779 = vst [vmem:[%s778] ss:$9 sm:$0xff] %v748
  %v780 = vld [vmem:[#allocation1] sm:$0xff]
  %781 = vst [vmem:[#allocation1] ss:$9 sm:$0xff] %v750
  %782 = vst [vmem:[%s766] ss:$9 sm:$0xff] %v752
  %783 = vst [vmem:[%s768] ss:$9 sm:$0xff] %v754
  %784 = vst [vmem:[%s770] ss:$9 sm:$0xff] %v756
  %785 = vst [vmem:[%s772] ss:$9 sm:$0xff] %v758
  %786 = vst [vmem:[%s774] ss:$9 sm:$0xff] %v760
  %787 = vst [vmem:[%s776] ss:$9 sm:$0xff] %v762
  %788 = vst [vmem:[%s778] ss:$9 sm:$0xff] %v764
  %v789 = vld [vmem:[#allocation1] sm:$0xff]
  %v796 = vunpack.c.l.b16 %v567
  %v797 = vunpack.c.l.b16 %v568
  %v798 = vunpack.c.l.b16 %v569
  %v799 = vunpack.c.l.b16 %v570
  %v800 = vunpack.c.l.b16 %v571
  %v801 = vunpack.c.l.b16 %v572
  %v802 = vpack.c.b16 %v797, %v796
  %v803 = vpack.c.b16 %v799, %v798
  %v804 = vpack.c.b16 %v801, %v800
  %vm808 = vcmask 392192
  %v809 = vsel %vm808, %v780, 0
  %v811 = vsel %vm808, %v789, 0
  %813 = vmatpush.bf16.msra.mxu0 0
  %814 = vmatpush.bf16.msra.mxu0 0
  %815 = vmatpush.bf16.msra.mxu0 0
  %816 = vmatpush.bf16.msra.mxu0 0
  %817 = vmatpush.bf16.msra.mxu0 0
  %818 = vmatpush.bf16.msra.mxu0 %v804
  %819 = vmatpush.bf16.msra.mxu0 %v803
  %820 = vmatpush.bf16.msra.mxu0 %v802
  %821 = vmatmul.bf16.gmra.mxu0 %v809
  %v822 = vpop.f32.mrf.mxu0
  %v823 = vadd.f32 0.0, %v822
  %v824 = vpop.f32.mrf.mxu0
  %v825 = vadd.f32 0.0, %v824
  %826 = vmatmul.bf16.gmra.mxu0 %v811
  %v827 = vpop.f32.mrf.mxu0
  %v828 = vadd.f32 0.0, %v827
  %v829 = vpop.f32.mrf.mxu0
  %v830 = vadd.f32 0.0, %v829
  %831 = vdwg.mxu0
  %v836 = vrot.slane %v823, 2
  %v837 = vrot.slane %v823, 4
  %v838 = vrot.slane %v823, 6
  %v839 = vrot.slane %v825, 2
  %v840 = vrot.slane %v825, 4
  %v841 = vrot.slane %v825, 6
  %v842 = vrot.slane %v828, 2
  %v843 = vrot.slane %v828, 4
  %v844 = vrot.slane %v828, 6
  %v845 = vrot.slane %v830, 2
  %v846 = vrot.slane %v830, 4
  %v847 = vrot.slane %v830, 6
  %v860 = vsel %vm358, %v823, 0.0
  %v861 = vsel %vm358, %v836, 0.0
  %v862 = vadd.f32 %v860, %v861
  %v863 = vsel %vm358, %v837, 0.0
  %v864 = vadd.f32 %v862, %v863
  %v865 = vsel %vm358, %v838, 0.0
  %v866 = vadd.f32 %v864, %v865
  %v867 = vsel %vm358, %v825, 0.0
  %v868 = vadd.f32 %v866, %v867
  %v869 = vsel %vm358, %v839, 0.0
  %v870 = vadd.f32 %v868, %v869
  %v871 = vsel %vm358, %v840, 0.0
  %v872 = vadd.f32 %v870, %v871
  %v873 = vsel %vm358, %v841, 0.0
  %v874 = vadd.f32 %v872, %v873
  %v875 = vsel %vm358, %v828, 0.0
  %v876 = vadd.f32 %v874, %v875
  %v877 = vsel %vm358, %v842, 0.0
  %v878 = vadd.f32 %v876, %v877
  %v879 = vsel %vm358, %v843, 0.0
  %v880 = vadd.f32 %v878, %v879
  %v881 = vsel %vm358, %v844, 0.0
  %v882 = vadd.f32 %v880, %v881
  %v883 = vsel %vm358, %v830, 0.0
  %v884 = vadd.f32 %v882, %v883
  %v885 = vsel %vm358, %v845, 0.0
  %v886 = vadd.f32 %v884, %v885
  %v887 = vsel %vm358, %v846, 0.0
  %v888 = vadd.f32 %v886, %v887
  %v889 = vsel %vm358, %v847, 0.0
  %v890 = vadd.f32 %v888, %v889
  %v891 = vrot.slane %v890, 4
  %v892 = vadd.f32 %v890, %v891
  %v893 = vrot.slane %v892, 2
  %v894 = vadd.f32 %v892, %v893
  %v895 = vrot.slane %v894, 1
  %v896 = vadd.f32 %v894, %v895
  %v897 = vmul.f32 %v896, %v402
  %v898 = vsub.f32 %v823, %v897
  %v899 = vsub.f32 %v836, %v897
  %v900 = vsub.f32 %v837, %v897
  %v901 = vsub.f32 %v838, %v897
  %v902 = vsub.f32 %v825, %v897
  %v903 = vsub.f32 %v839, %v897
  %v904 = vsub.f32 %v840, %v897
  %v905 = vsub.f32 %v841, %v897
  %v906 = vsub.f32 %v828, %v897
  %v907 = vsub.f32 %v842, %v897
  %v908 = vsub.f32 %v843, %v897
  %v909 = vsub.f32 %v844, %v897
  %v910 = vsub.f32 %v830, %v897
  %v911 = vsub.f32 %v845, %v897
  %v912 = vsub.f32 %v846, %v897
  %v913 = vsub.f32 %v847, %v897
  %v914 = vmul.f32 %v898, %v898
  %v915 = vmul.f32 %v899, %v899
  %v916 = vmul.f32 %v900, %v900
  %v917 = vmul.f32 %v901, %v901
  %v918 = vmul.f32 %v902, %v902
  %v919 = vmul.f32 %v903, %v903
  %v920 = vmul.f32 %v904, %v904
  %v921 = vmul.f32 %v905, %v905
  %v922 = vmul.f32 %v906, %v906
  %v923 = vmul.f32 %v907, %v907
  %v924 = vmul.f32 %v908, %v908
  %v925 = vmul.f32 %v909, %v909
  %v926 = vmul.f32 %v910, %v910
  %v927 = vmul.f32 %v911, %v911
  %v928 = vmul.f32 %v912, %v912
  %v929 = vmul.f32 %v913, %v913
  %v930 = vsel %vm358, %v914, 0.0
  %v931 = vsel %vm358, %v915, 0.0
  %v932 = vadd.f32 %v930, %v931
  %v933 = vsel %vm358, %v916, 0.0
  %v934 = vadd.f32 %v932, %v933
  %v935 = vsel %vm358, %v917, 0.0
  %v936 = vadd.f32 %v934, %v935
  %v937 = vsel %vm358, %v918, 0.0
  %v938 = vadd.f32 %v936, %v937
  %v939 = vsel %vm358, %v919, 0.0
  %v940 = vadd.f32 %v938, %v939
  %v941 = vsel %vm358, %v920, 0.0
  %v942 = vadd.f32 %v940, %v941
  %v943 = vsel %vm358, %v921, 0.0
  %v944 = vadd.f32 %v942, %v943
  %v945 = vsel %vm358, %v922, 0.0
  %v946 = vadd.f32 %v944, %v945
  %v947 = vsel %vm358, %v923, 0.0
  %v948 = vadd.f32 %v946, %v947
  %v949 = vsel %vm358, %v924, 0.0
  %v950 = vadd.f32 %v948, %v949
  %v951 = vsel %vm358, %v925, 0.0
  %v952 = vadd.f32 %v950, %v951
  %v953 = vsel %vm358, %v926, 0.0
  %v954 = vadd.f32 %v952, %v953
  %v955 = vsel %vm358, %v927, 0.0
  %v956 = vadd.f32 %v954, %v955
  %v957 = vsel %vm358, %v928, 0.0
  %v958 = vadd.f32 %v956, %v957
  %v959 = vsel %vm358, %v929, 0.0
  %v960 = vadd.f32 %v958, %v959
  %v961 = vrot.slane %v960, 4
  %v962 = vadd.f32 %v960, %v961
  %v963 = vrot.slane %v962, 2
  %v964 = vadd.f32 %v962, %v963
  %v965 = vrot.slane %v964, 1
  %v966 = vadd.f32 %v964, %v965
  %v967 = vmul.f32 %v966, %v402
  %v968 = vadd.f32 %v967, 1e-05
  %v969 = vrsqrt.pop %v968
  %v970 = vmul.f32 %v969, %v968
  %v971 = vmul.f32 %v970, %v969
  %v972 = vmul.f32 0.5, %v971
  %v973 = vsub.f32 1.5, %v972
  %v974 = vmul.f32 %v969, %v973
  %vm975 = vweird.f32 %v968
  %vm976 = vweird.f32 %v969
  %vm977 = vmor %vm975, %vm976
  %v978 = vsel %vm977, %v969, %v974
  %v979 = vmul.f32 %v898, %v978
  %v980 = vmul.f32 %v899, %v978
  %v981 = vmul.f32 %v900, %v978
  %v982 = vmul.f32 %v901, %v978
  %v983 = vmul.f32 %v902, %v978
  %v984 = vmul.f32 %v903, %v978
  %v985 = vmul.f32 %v904, %v978
  %v986 = vmul.f32 %v905, %v978
  %v987 = vmul.f32 %v906, %v978
  %v988 = vmul.f32 %v907, %v978
  %v989 = vmul.f32 %v908, %v978
  %v990 = vmul.f32 %v909, %v978
  %v991 = vmul.f32 %v910, %v978
  %v992 = vmul.f32 %v911, %v978
  %v993 = vmul.f32 %v912, %v978
  %v994 = vmul.f32 %v913, %v978
  %v995 = vperm.slane %v24, 4
  %v996 = vmul.f32 %v979, %v995
  %v997 = vmul.f32 %v980, %v995
  %v998 = vmul.f32 %v981, %v995
  %v999 = vmul.f32 %v982, %v995
  %v1000 = vmul.f32 %v983, %v995
  %v1001 = vmul.f32 %v984, %v995
  %v1002 = vmul.f32 %v985, %v995
  %v1003 = vmul.f32 %v986, %v995
  %v1004 = vmul.f32 %v987, %v995
  %v1005 = vmul.f32 %v988, %v995
  %v1006 = vmul.f32 %v989, %v995
  %v1007 = vmul.f32 %v990, %v995
  %v1008 = vmul.f32 %v991, %v995
  %v1009 = vmul.f32 %v992, %v995
  %v1010 = vmul.f32 %v993, %v995
  %v1011 = vmul.f32 %v994, %v995
  %v1012 = vperm.slane %v24, 5
  %v1013 = vadd.f32 %v996, %v1012
  %v1014 = vadd.f32 %v997, %v1012
  %v1015 = vadd.f32 %v998, %v1012
  %v1016 = vadd.f32 %v999, %v1012
  %v1017 = vadd.f32 %v1000, %v1012
  %v1018 = vadd.f32 %v1001, %v1012
  %v1019 = vadd.f32 %v1002, %v1012
  %v1020 = vadd.f32 %v1003, %v1012
  %v1021 = vadd.f32 %v1004, %v1012
  %v1022 = vadd.f32 %v1005, %v1012
  %v1023 = vadd.f32 %v1006, %v1012
  %v1024 = vadd.f32 %v1007, %v1012
  %v1025 = vadd.f32 %v1008, %v1012
  %v1026 = vadd.f32 %v1009, %v1012
  %v1027 = vadd.f32 %v1010, %v1012
  %v1028 = vadd.f32 %v1011, %v1012
  %v1029 = vmax.f32 %v1013, 0.0
  %v1030 = vmax.f32 %v1014, 0.0
  %v1031 = vmax.f32 %v1015, 0.0
  %v1032 = vmax.f32 %v1016, 0.0
  %v1033 = vmax.f32 %v1017, 0.0
  %v1034 = vmax.f32 %v1018, 0.0
  %v1035 = vmax.f32 %v1019, 0.0
  %v1036 = vmax.f32 %v1020, 0.0
  %v1037 = vmax.f32 %v1021, 0.0
  %v1038 = vmax.f32 %v1022, 0.0
  %v1039 = vmax.f32 %v1023, 0.0
  %v1040 = vmax.f32 %v1024, 0.0
  %v1041 = vmax.f32 %v1025, 0.0
  %v1042 = vmax.f32 %v1026, 0.0
  %v1043 = vmax.f32 %v1027, 0.0
  %v1044 = vmax.f32 %v1028, 0.0
  %v1045 = vpack.c.bf16 %v1029, %v1029
  %v1046 = vpack.c.bf16 %v1030, %v1030
  %v1047 = vpack.c.bf16 %v1031, %v1031
  %v1048 = vpack.c.bf16 %v1032, %v1032
  %v1049 = vpack.c.bf16 %v1033, %v1033
  %v1050 = vpack.c.bf16 %v1034, %v1034
  %v1051 = vpack.c.bf16 %v1035, %v1035
  %v1052 = vpack.c.bf16 %v1036, %v1036
  %v1053 = vpack.c.bf16 %v1037, %v1037
  %v1054 = vpack.c.bf16 %v1038, %v1038
  %v1055 = vpack.c.bf16 %v1039, %v1039
  %v1056 = vpack.c.bf16 %v1040, %v1040
  %v1057 = vpack.c.bf16 %v1041, %v1041
  %v1058 = vpack.c.bf16 %v1042, %v1042
  %v1059 = vpack.c.bf16 %v1043, %v1043
  %v1060 = vpack.c.bf16 %v1044, %v1044
  %v1061 = vperm.slane %v24, 0
  %1063 = vst [vmem:[#allocation1] ss:$9 sm:$0xff] %v1045
  %s1065 = scalar_lea.vmem [#allocation1], 1
  %1066 = vst [vmem:[%s1065] ss:$9 sm:$0xff] %v1046
  %s1068 = scalar_lea.vmem [#allocation1], 2
  %1069 = vst [vmem:[%s1068] ss:$9 sm:$0xff] %v1047
  %s1071 = scalar_lea.vmem [#allocation1], 3
  %1072 = vst [vmem:[%s1071] ss:$9 sm:$0xff] %v1048
  %s1074 = scalar_lea.vmem [#allocation1], 4
  %1075 = vst [vmem:[%s1074] ss:$9 sm:$0xff] %v1049
  %s1077 = scalar_lea.vmem [#allocation1], 5
  %1078 = vst [vmem:[%s1077] ss:$9 sm:$0xff] %v1050
  %s1080 = scalar_lea.vmem [#allocation1], 6
  %1081 = vst [vmem:[%s1080] ss:$9 sm:$0xff] %v1051
  %s1083 = scalar_lea.vmem [#allocation1], 7
  %1084 = vst [vmem:[%s1083] ss:$9 sm:$0xff] %v1052
  %v1085 = vld [vmem:[#allocation1] sm:$0xff]
  %1087 = vst [vmem:[#allocation1] ss:$9 sm:$0xff] %v1053
  %1089 = vst [vmem:[%s1065] ss:$9 sm:$0xff] %v1054
  %1091 = vst [vmem:[%s1068] ss:$9 sm:$0xff] %v1055
  %1093 = vst [vmem:[%s1071] ss:$9 sm:$0xff] %v1056
  %1095 = vst [vmem:[%s1074] ss:$9 sm:$0xff] %v1057
  %1097 = vst [vmem:[%s1077] ss:$9 sm:$0xff] %v1058
  %1099 = vst [vmem:[%s1080] ss:$9 sm:$0xff] %v1059
  %1101 = vst [vmem:[%s1083] ss:$9 sm:$0xff] %v1060
  %v1102 = vld [vmem:[#allocation1] sm:$0xff]
  %v1105 = vunpack.c.l.b16 %v26
  %v1106 = vunpack.c.l.b16 %v27
  %v1107 = vpack.c.b16 %v1106, %v1105
  %1110 = vst [vmem:[#allocation1] ss:$4 sm:$0xff] %v1061
  %s1111 = scalar_lea.vmem [#allocation1], 1
  %1112 = vst [vmem:[%s1111] ss:$4 sm:$0xff] %v1061
  %s1113 = scalar_lea.vmem [#allocation1], 2
  %1114 = vst [vmem:[%s1113] ss:$4 sm:$0xff] %v1061
  %s1115 = scalar_lea.vmem [#allocation1], 3
  %1116 = vst [vmem:[%s1115] ss:$4 sm:$0xff] %v1061
  %s1117 = scalar_lea.vmem [#allocation1], 32
  %1118 = vst [vmem:[%s1117] ss:$4 sm:$0xff] %v1061
  %s1119 = scalar_lea.vmem [#allocation1], 33
  %1120 = vst [vmem:[%s1119] ss:$4 sm:$0xff] %v1061
  %s1121 = scalar_lea.vmem [#allocation1], 34
  %1122 = vst [vmem:[%s1121] ss:$4 sm:$0xff] %v1061
  %s1123 = scalar_lea.vmem [#allocation1], 35
  %1124 = vst [vmem:[%s1123] ss:$4 sm:$0xff] %v1061
  %v1125 = vld.sshfl [vmem:[#allocation1] sm:$0xff pattern:$0x73625140]
  %v1126 = vld.sshfl [vmem:[#allocation1 + $0x20] sm:$0xff pattern:$0x73625140]
  %1127 = vst [vmem:[#allocation1] ss:$4 sm:$0xff] %v1061
  %1128 = vst [vmem:[%s1111] ss:$4 sm:$0xff] %v1061
  %1129 = vst [vmem:[%s1113] ss:$4 sm:$0xff] %v1061
  %1130 = vst [vmem:[%s1115] ss:$4 sm:$0xff] %v1061
  %1131 = vst [vmem:[%s1117] ss:$4 sm:$0xff] %v1061
  %1132 = vst [vmem:[%s1119] ss:$4 sm:$0xff] %v1061
  %1133 = vst [vmem:[%s1121] ss:$4 sm:$0xff] %v1061
  %1134 = vst [vmem:[%s1123] ss:$4 sm:$0xff] %v1061
  %v1135 = vld.sshfl [vmem:[#allocation1] sm:$0xff pattern:$0x73625140]
  %v1136 = vld.sshfl [vmem:[#allocation1 + $0x20] sm:$0xff pattern:$0x73625140]
  %v1141 = vsel %vm235, %v1085, 0
  %v1143 = vsel %vm235, %v1102, 0
  %1145 = vmatpush.bf16.msra.mxu0 0
  %1146 = vmatpush.bf16.msra.mxu0 0
  %1147 = vmatpush.bf16.msra.mxu0 0
  %1148 = vmatpush.bf16.msra.mxu0 0
  %1149 = vmatpush.bf16.msra.mxu0 0
  %1150 = vmatpush.bf16.msra.mxu0 0
  %1151 = vmatpush.bf16.msra.mxu0 0
  %1152 = vmatpush.bf16.msra.mxu0 %v1107
  %1153 = vmatmul.bf16.gmra.mxu0 %v1141
  %v1154 = vpop.f32.mrf.mxu0
  %v1155 = vadd.f32 %v1125, %v1154
  %v1156 = vpop.f32.mrf.mxu0
  %v1157 = vadd.f32 %v1126, %v1156
  %1158 = vmatmul.bf16.gmra.mxu0 %v1143
  %v1159 = vpop.f32.mrf.mxu0
  %v1160 = vadd.f32 %v1135, %v1159
  %v1161 = vpop.f32.mrf.mxu0
  %v1162 = vadd.f32 %v1136, %v1161
  %1163 = vdwg.mxu0
  %v1168 = vrot.slane %v1155, 2
  %v1169 = vrot.slane %v1155, 4
  %v1170 = vrot.slane %v1155, 6
  %v1171 = vrot.slane %v1157, 2
  %v1172 = vrot.slane %v1157, 4
  %v1173 = vrot.slane %v1157, 6
  %v1174 = vrot.slane %v1160, 2
  %v1175 = vrot.slane %v1160, 4
  %v1176 = vrot.slane %v1160, 6
  %v1177 = vrot.slane %v1162, 2
  %v1178 = vrot.slane %v1162, 4
  %v1179 = vrot.slane %v1162, 6
  %v1192 = vld [vmem:[%s1] sm:$0x3]
  %vm1193 = vcmp.gt.s32.totalorder %v1192, 0
  %vm1194 = vcmp.gt.s32.totalorder %v1192, 1
  %vm1195 = vcmp.gt.s32.totalorder %v1192, 2
  %vm1196 = vcmp.gt.s32.totalorder %v1192, 3
  %vm1197 = vcmp.gt.s32.totalorder %v1192, 4
  %vm1198 = vcmp.gt.s32.totalorder %v1192, 5
  %vm1199 = vcmp.gt.s32.totalorder %v1192, 6
  %vm1200 = vcmp.gt.s32.totalorder %v1192, 7
  %vm1201 = vcmp.gt.s32.totalorder %v1192, 8
  %vm1202 = vcmp.gt.s32.totalorder %v1192, 9
  %vm1203 = vcmp.gt.s32.totalorder %v1192, 10
  %vm1204 = vcmp.gt.s32.totalorder %v1192, 11
  %vm1205 = vcmp.gt.s32.totalorder %v1192, 12
  %vm1206 = vcmp.gt.s32.totalorder %v1192, 13
  %vm1207 = vcmp.gt.s32.totalorder %v1192, 14
  %vm1208 = vcmp.gt.s32.totalorder %v1192, 15
  %v1209 = vpack.c.bf16 %v24, %v24
  %v1211 = vrot.slane %v1209, 3
  %v1216 = vunpack.c.l.b16 %v28
  %v1217 = vunpack.c.l.b16 %v29
  %v1218 = vunpack.c.l.b16 %v30
  %v1219 = vunpack.c.l.b16 %v31
  %v1220 = vpack.c.b16 %v1217, %v1216
  %v1221 = vpack.c.b16 %v1219, %v1218
  %v1225 = vsel %vm732, %v1211, 0
  %1227 = vmatpush.bf16.msra.mxu0 0
  %1228 = vmatpush.bf16.msra.mxu0 0
  %1229 = vmatpush.bf16.msra.mxu0 0
  %1230 = vmatpush.bf16.msra.mxu0 0
  %1231 = vmatpush.bf16.msra.mxu0 0
  %1232 = vmatpush.bf16.msra.mxu0 0
  %1233 = vmatpush.bf16.msra.mxu0 %v1221
  %1234 = vmatpush.bf16.msra.mxu0 %v1220
  %1235 = vmatmul.bf16.gmra.mxu0 %v1225
  %v1236 = vpop.f32.mrf.mxu0
  %v1237 = vadd.f32 0.0, %v1236
  %v1238 = vpop.f32.mrf.mxu0
  %1239 = vdwg.mxu0
  %v1240 = vadd.f32 %v1155, %v1237
  %v1241 = vxor.u32 %v1240, 2147483648
  %v1242 = vmul.f32 %v1241, 1.442695
  %v1243 = vpow.pop %v1242
  %v1244 = vadd.f32 %v1243, 1.0
  %v1245 = vrcp.pop %v1244
  %v1246 = vmul.f32 %v1244, %v1245
  %v1247 = vsub.f32 1.0, %v1246
  %v1248 = vmul.f32 %v1245, %v1247
  %v1249 = vadd.f32 %v1245, %v1248
  %vm1250 = vweird.f32 %v1244
  %vm1251 = vweird.f32 %v1245
  %vm1252 = vmor %vm1250, %vm1251
  %v1253 = vsel %vm1252, %v1245, %v1249
  %v1254 = vand.u32 2147483647, %v1244
  %vm1255 = vcmp.eq.f32.partialorder %v1254, 8.507059e+37
  %v1256 = vand.u32 %v1244, 2147483648
  %v1257 = vor.u32 1.1754944e-38, %v1256
  %v1258 = vsel %vm1255, %v1257, %v1253
  %v1259 = vmul.f32 1.0, %v1258
  %v1260 = vtanh.pop %v1240
  %1262 = vrot.lane.b32.xlu0 %v25, 32
  %v1263 = vpop.permute.xlu0 %1262
  %v1265 = vmul.f32 %v1259, %v1263
  %1267 = vrot.lane.b32.xlu0 %v1260, 32
  %v1268 = vpop.permute.xlu0 %1267
  %v1270 = vmul.f32 %v1259, %v1268
  %1272 = vrot.lane.b32.xlu0 %v1270, 32
  %v1273 = vpop.permute.xlu0 %1272
  %v1275 = vadd.f32 %v1265, %v1273
  %v1276 = vtanh.pop %v1275
  %1278 = vrot.lane.b32.xlu0 %v1276, 32
  %v1279 = vpop.permute.xlu0 %1278
  %v1281 = vmul.f32 %v1259, %v1279
  %v1282 = vsel %vm1193, 1, 0
  %1283 = vset.pattern.permute.xlu0 0
  %1284 = vperm.xlu0 %1283, %v1282
  %v1285 = vpop.permute.xlu0 %1284
  %vm1286 = vcmp.eq.s32.totalorder %v1285, 1
  %1288 = vst [vmem:[#allocation1] ss:$4 sm:$0xff] %v1281
  %v1289 = vld.sshfl [vmem:[#allocation1] sm:$0xff pattern:$0x73625140]
  %1290 = vrot.lane.b32.xlu0 %v1289, 64
  %v1291 = vpop.permute.xlu0 %1290
  %v1294 = vrot.slane %v24, 6
  %v1296 = vsel %vm1286, %v1291, %v1294
  %1298 = vst [vmem:[#allocation1] ss:$4 sm:$0xff] %v1275
  %v1299 = vld.sshfl [vmem:[#allocation1] sm:$0xff pattern:$0x73625140]
  %1300 = vrot.lane.b32.xlu0 %v1299, 96
  %v1301 = vpop.permute.xlu0 %1300
  %v1303 = vsel %vm1286, %v1301, %v25
  %1304 = vst [vmem:[#allocation1] ss:$4 sm:$0xff] %v1281
  %v1305 = vld.sshfl [vmem:[#allocation1] sm:$0xff pattern:$0x73625140]
  %1306 = vrot.lane.b32.xlu0 %v1305, 64
  %v1307 = vpop.permute.xlu0 %1306
  %v1309 = vsel %vm1286, %v1307, 0.0
  %v1310 = vpack.c.bf16 %v1296, %v1296
  %v1312 = vsel %vm732, %v1310, 0
  %1314 = vmatpush.bf16.msra.mxu0 0
  %1315 = vmatpush.bf16.msra.mxu0 0
  %1316 = vmatpush.bf16.msra.mxu0 0
  %1317 = vmatpush.bf16.msra.mxu0 0
  %1318 = vmatpush.bf16.msra.mxu0 0
  %1319 = vmatpush.bf16.msra.mxu0 0
  %1320 = vmatpush.bf16.msra.mxu0 %v1221
  %1321 = vmatpush.bf16.msra.mxu0 %v1220
  %1322 = vmatmul.bf16.gmra.mxu0 %v1312
  %v1323 = vpop.f32.mrf.mxu0
  %v1324 = vadd.f32 0.0, %v1323
  %v1325 = vpop.f32.mrf.mxu0
  %1326 = vdwg.mxu0
  %v1327 = vadd.f32 %v1168, %v1324
  %v1328 = vxor.u32 %v1327, 2147483648
  %v1329 = vmul.f32 %v1328, 1.442695
  %v1330 = vpow.pop %v1329
  %v1331 = vadd.f32 %v1330, 1.0
  %v1332 = vrcp.pop %v1331
  %v1333 = vmul.f32 %v1331, %v1332
  %v1334 = vsub.f32 1.0, %v1333
  %v1335 = vmul.f32 %v1332, %v1334
  %v1336 = vadd.f32 %v1332, %v1335
  %vm1337 = vweird.f32 %v1331
  %vm1338 = vweird.f32 %v1332
  %vm1339 = vmor %vm1337, %vm1338
  %v1340 = vsel %vm1339, %v1332, %v1336
  %v1341 = vand.u32 2147483647, %v1331
  %vm1342 = vcmp.eq.f32.partialorder %v1341, 8.507059e+37
  %v1343 = vand.u32 %v1331, 2147483648
  %v1344 = vor.u32 1.1754944e-38, %v1343
  %v1345 = vsel %vm1342, %v1344, %v1340
  %v1346 = vmul.f32 1.0, %v1345
  %v1347 = vtanh.pop %v1327
  %1349 = vrot.lane.b32.xlu0 %v1303, 32
  %v1350 = vpop.permute.xlu0 %1349
  %v1352 = vmul.f32 %v1346, %v1350
  %1354 = vrot.lane.b32.xlu0 %v1347, 32
  %v1355 = vpop.permute.xlu0 %1354
  %v1357 = vmul.f32 %v1346, %v1355
  %1359 = vrot.lane.b32.xlu0 %v1357, 32
  %v1360 = vpop.permute.xlu0 %1359
  %v1362 = vadd.f32 %v1352, %v1360
  %v1363 = vtanh.pop %v1362
  %1365 = vrot.lane.b32.xlu0 %v1363, 32
  %v1366 = vpop.permute.xlu0 %1365
  %v1368 = vmul.f32 %v1346, %v1366
  %v1369 = vsel %vm1194, 1, 0
  %1370 = vset.pattern.permute.xlu0 0
  %1371 = vperm.xlu0 %1370, %v1369
  %v1372 = vpop.permute.xlu0 %1371
  %vm1373 = vcmp.eq.s32.totalorder %v1372, 1
  %1375 = vst [vmem:[#allocation1] ss:$4 sm:$0xff] %v1368
  %v1376 = vld.sshfl [vmem:[#allocation1] sm:$0xff pattern:$0x73625140]
  %1377 = vrot.lane.b32.xlu0 %v1376, 64
  %v1378 = vpop.permute.xlu0 %1377
  %v1380 = vsel %vm1373, %v1378, %v1296
  %1382 = vst [vmem:[#allocation1] ss:$4 sm:$0xff] %v1362
  %v1383 = vld.sshfl [vmem:[#allocation1] sm:$0xff pattern:$0x73625140]
  %1384 = vrot.lane.b32.xlu0 %v1383, 96
  %v1385 = vpop.permute.xlu0 %1384
  %v1387 = vsel %vm1373, %v1385, %v1303
  %1388 = vst [vmem:[#allocation1] ss:$4 sm:$0xff] %v1368
  %v1389 = vld.sshfl [vmem:[#allocation1] sm:$0xff pattern:$0x73625140]
  %1390 = vrot.lane.b32.xlu0 %v1389, 64
  %v1391 = vpop.permute.xlu0 %1390
  %v1393 = vsel %vm1373, %v1391, 0.0
  %v1394 = vpack.c.bf16 %v1380, %v1380
  %v1396 = vsel %vm732, %v1394, 0
  %1398 = vmatpush.bf16.msra.mxu0 0
  %1399 = vmatpush.bf16.msra.mxu0 0
  %1400 = vmatpush.bf16.msra.mxu0 0
  %1401 = vmatpush.bf16.msra.mxu0 0
  %1402 = vmatpush.bf16.msra.mxu0 0
  %1403 = vmatpush.bf16.msra.mxu0 0
  %1404 = vmatpush.bf16.msra.mxu0 %v1221
  %1405 = vmatpush.bf16.msra.mxu0 %v1220
  %1406 = vmatmul.bf16.gmra.mxu0 %v1396
  %v1407 = vpop.f32.mrf.mxu0
  %v1408 = vadd.f32 0.0, %v1407
  %v1409 = vpop.f32.mrf.mxu0
  %1410 = vdwg.mxu0
  %v1411 = vadd.f32 %v1169, %v1408
  %v1412 = vxor.u32 %v1411, 2147483648
  %v1413 = vmul.f32 %v1412, 1.442695
  %v1414 = vpow.pop %v1413
  %v1415 = vadd.f32 %v1414, 1.0
  %v1416 = vrcp.pop %v1415
  %v1417 = vmul.f32 %v1415, %v1416
  %v1418 = vsub.f32 1.0, %v1417
  %v1419 = vmul.f32 %v1416, %v1418
  %v1420 = vadd.f32 %v1416, %v1419
  %vm1421 = vweird.f32 %v1415
  %vm1422 = vweird.f32 %v1416
  %vm1423 = vmor %vm1421, %vm1422
  %v1424 = vsel %vm1423, %v1416, %v1420
  %v1425 = vand.u32 2147483647, %v1415
  %vm1426 = vcmp.eq.f32.partialorder %v1425, 8.507059e+37
  %v1427 = vand.u32 %v1415, 2147483648
  %v1428 = vor.u32 1.1754944e-38, %v1427
  %v1429 = vsel %vm1426, %v1428, %v1424
  %v1430 = vmul.f32 1.0, %v1429
  %v1431 = vtanh.pop %v1411
  %1433 = vrot.lane.b32.xlu0 %v1387, 32
  %v1434 = vpop.permute.xlu0 %1433
  %v1436 = vmul.f32 %v1430, %v1434
  %1438 = vrot.lane.b32.xlu0 %v1431, 32
  %v1439 = vpop.permute.xlu0 %1438
  %v1441 = vmul.f32 %v1430, %v1439
  %1443 = vrot.lane.b32.xlu0 %v1441, 32
  %v1444 = vpop.permute.xlu0 %1443
  %v1446 = vadd.f32 %v1436, %v1444
  %v1447 = vtanh.pop %v1446
  %1449 = vrot.lane.b32.xlu0 %v1447, 32
  %v1450 = vpop.permute.xlu0 %1449
  %v1452 = vmul.f32 %v1430, %v1450
  %v1453 = vsel %vm1195, 1, 0
  %1454 = vset.pattern.permute.xlu0 0
  %1455 = vperm.xlu0 %1454, %v1453
  %v1456 = vpop.permute.xlu0 %1455
  %vm1457 = vcmp.eq.s32.totalorder %v1456, 1
  %1459 = vst [vmem:[#allocation1] ss:$4 sm:$0xff] %v1452
  %v1460 = vld.sshfl [vmem:[#allocation1] sm:$0xff pattern:$0x73625140]
  %1461 = vrot.lane.b32.xlu0 %v1460, 64
  %v1462 = vpop.permute.xlu0 %1461
  %v1464 = vsel %vm1457, %v1462, %v1380
  %1466 = vst [vmem:[#allocation1] ss:$4 sm:$0xff] %v1446
  %v1467 = vld.sshfl [vmem:[#allocation1] sm:$0xff pattern:$0x73625140]
  %1468 = vrot.lane.b32.xlu0 %v1467, 96
  %v1469 = vpop.permute.xlu0 %1468
  %v1471 = vsel %vm1457, %v1469, %v1387
  %1472 = vst [vmem:[#allocation1] ss:$4 sm:$0xff] %v1452
  %v1473 = vld.sshfl [vmem:[#allocation1] sm:$0xff pattern:$0x73625140]
  %1474 = vrot.lane.b32.xlu0 %v1473, 64
  %v1475 = vpop.permute.xlu0 %1474
  %v1477 = vsel %vm1457, %v1475, 0.0
  %v1478 = vpack.c.bf16 %v1464, %v1464
  %v1480 = vsel %vm732, %v1478, 0
  %1482 = vmatpush.bf16.msra.mxu0 0
  %1483 = vmatpush.bf16.msra.mxu0 0
  %1484 = vmatpush.bf16.msra.mxu0 0
  %1485 = vmatpush.bf16.msra.mxu0 0
  %1486 = vmatpush.bf16.msra.mxu0 0
  %1487 = vmatpush.bf16.msra.mxu0 0
  %1488 = vmatpush.bf16.msra.mxu0 %v1221
  %1489 = vmatpush.bf16.msra.mxu0 %v1220
  %1490 = vmatmul.bf16.gmra.mxu0 %v1480
  %v1491 = vpop.f32.mrf.mxu0
  %v1492 = vadd.f32 0.0, %v1491
  %v1493 = vpop.f32.mrf.mxu0
  %1494 = vdwg.mxu0
  %v1495 = vadd.f32 %v1170, %v1492
  %v1496 = vxor.u32 %v1495, 2147483648
  %v1497 = vmul.f32 %v1496, 1.442695
  %v1498 = vpow.pop %v1497
  %v1499 = vadd.f32 %v1498, 1.0
  %v1500 = vrcp.pop %v1499
  %v1501 = vmul.f32 %v1499, %v1500
  %v1502 = vsub.f32 1.0, %v1501
  %v1503 = vmul.f32 %v1500, %v1502
  %v1504 = vadd.f32 %v1500, %v1503
  %vm1505 = vweird.f32 %v1499
  %vm1506 = vweird.f32 %v1500
  %vm1507 = vmor %vm1505, %vm1506
  %v1508 = vsel %vm1507, %v1500, %v1504
  %v1509 = vand.u32 2147483647, %v1499
  %vm1510 = vcmp.eq.f32.partialorder %v1509, 8.507059e+37
  %v1511 = vand.u32 %v1499, 2147483648
  %v1512 = vor.u32 1.1754944e-38, %v1511
  %v1513 = vsel %vm1510, %v1512, %v1508
  %v1514 = vmul.f32 1.0, %v1513
  %v1515 = vtanh.pop %v1495
  %1517 = vrot.lane.b32.xlu0 %v1471, 32
  %v1518 = vpop.permute.xlu0 %1517
  %v1520 = vmul.f32 %v1514, %v1518
  %1522 = vrot.lane.b32.xlu0 %v1515, 32
  %v1523 = vpop.permute.xlu0 %1522
  %v1525 = vmul.f32 %v1514, %v1523
  %1527 = vrot.lane.b32.xlu0 %v1525, 32
  %v1528 = vpop.permute.xlu0 %1527
  %v1530 = vadd.f32 %v1520, %v1528
  %v1531 = vtanh.pop %v1530
  %1533 = vrot.lane.b32.xlu0 %v1531, 32
  %v1534 = vpop.permute.xlu0 %1533
  %v1536 = vmul.f32 %v1514, %v1534
  %v1537 = vsel %vm1196, 1, 0
  %1538 = vset.pattern.permute.xlu0 0
  %1539 = vperm.xlu0 %1538, %v1537
  %v1540 = vpop.permute.xlu0 %1539
  %vm1541 = vcmp.eq.s32.totalorder %v1540, 1
  %1543 = vst [vmem:[#allocation1] ss:$4 sm:$0xff] %v1536
  %v1544 = vld.sshfl [vmem:[#allocation1] sm:$0xff pattern:$0x73625140]
  %1545 = vrot.lane.b32.xlu0 %v1544, 64
  %v1546 = vpop.permute.xlu0 %1545
  %v1548 = vsel %vm1541, %v1546, %v1464
  %1550 = vst [vmem:[#allocation1] ss:$4 sm:$0xff] %v1530
  %v1551 = vld.sshfl [vmem:[#allocation1] sm:$0xff pattern:$0x73625140]
  %1552 = vrot.lane.b32.xlu0 %v1551, 96
  %v1553 = vpop.permute.xlu0 %1552
  %v1555 = vsel %vm1541, %v1553, %v1471
  %1556 = vst [vmem:[#allocation1] ss:$4 sm:$0xff] %v1536
  %v1557 = vld.sshfl [vmem:[#allocation1] sm:$0xff pattern:$0x73625140]
  %1558 = vrot.lane.b32.xlu0 %v1557, 64
  %v1559 = vpop.permute.xlu0 %1558
  %v1561 = vsel %vm1541, %v1559, 0.0
  %v1562 = vpack.c.bf16 %v1548, %v1548
  %v1564 = vsel %vm732, %v1562, 0
  %1566 = vmatpush.bf16.msra.mxu0 0
  %1567 = vmatpush.bf16.msra.mxu0 0
  %1568 = vmatpush.bf16.msra.mxu0 0
  %1569 = vmatpush.bf16.msra.mxu0 0
  %1570 = vmatpush.bf16.msra.mxu0 0
  %1571 = vmatpush.bf16.msra.mxu0 0
  %1572 = vmatpush.bf16.msra.mxu0 %v1221
  %1573 = vmatpush.bf16.msra.mxu0 %v1220
  %1574 = vmatmul.bf16.gmra.mxu0 %v1564
  %v1575 = vpop.f32.mrf.mxu0
  %v1576 = vadd.f32 0.0, %v1575
  %v1577 = vpop.f32.mrf.mxu0
  %1578 = vdwg.mxu0
  %v1579 = vadd.f32 %v1157, %v1576
  %v1580 = vxor.u32 %v1579, 2147483648
  %v1581 = vmul.f32 %v1580, 1.442695
  %v1582 = vpow.pop %v1581
  %v1583 = vadd.f32 %v1582, 1.0
  %v1584 = vrcp.pop %v1583
  %v1585 = vmul.f32 %v1583, %v1584
  %v1586 = vsub.f32 1.0, %v1585
  %v1587 = vmul.f32 %v1584, %v1586
  %v1588 = vadd.f32 %v1584, %v1587
  %vm1589 = vweird.f32 %v1583
  %vm1590 = vweird.f32 %v1584
  %vm1591 = vmor %vm1589, %vm1590
  %v1592 = vsel %vm1591, %v1584, %v1588
  %v1593 = vand.u32 2147483647, %v1583
  %vm1594 = vcmp.eq.f32.partialorder %v1593, 8.507059e+37
  %v1595 = vand.u32 %v1583, 2147483648
  %v1596 = vor.u32 1.1754944e-38, %v1595
  %v1597 = vsel %vm1594, %v1596, %v1592
  %v1598 = vmul.f32 1.0, %v1597
  %v1599 = vtanh.pop %v1579
  %1601 = vrot.lane.b32.xlu0 %v1555, 32
  %v1602 = vpop.permute.xlu0 %1601
  %v1604 = vmul.f32 %v1598, %v1602
  %1606 = vrot.lane.b32.xlu0 %v1599, 32
  %v1607 = vpop.permute.xlu0 %1606
  %v1609 = vmul.f32 %v1598, %v1607
  %1611 = vrot.lane.b32.xlu0 %v1609, 32
  %v1612 = vpop.permute.xlu0 %1611
  %v1614 = vadd.f32 %v1604, %v1612
  %v1615 = vtanh.pop %v1614
  %1617 = vrot.lane.b32.xlu0 %v1615, 32
  %v1618 = vpop.permute.xlu0 %1617
  %v1620 = vmul.f32 %v1598, %v1618
  %v1621 = vsel %vm1197, 1, 0
  %1622 = vset.pattern.permute.xlu0 0
  %1623 = vperm.xlu0 %1622, %v1621
  %v1624 = vpop.permute.xlu0 %1623
  %vm1625 = vcmp.eq.s32.totalorder %v1624, 1
  %1627 = vst [vmem:[#allocation1] ss:$4 sm:$0xff] %v1620
  %v1628 = vld.sshfl [vmem:[#allocation1] sm:$0xff pattern:$0x73625140]
  %1629 = vrot.lane.b32.xlu0 %v1628, 64
  %v1630 = vpop.permute.xlu0 %1629
  %v1632 = vsel %vm1625, %v1630, %v1548
  %1634 = vst [vmem:[#allocation1] ss:$4 sm:$0xff] %v1614
  %v1635 = vld.sshfl [vmem:[#allocation1] sm:$0xff pattern:$0x73625140]
  %1636 = vrot.lane.b32.xlu0 %v1635, 96
  %v1637 = vpop.permute.xlu0 %1636
  %v1639 = vsel %vm1625, %v1637, %v1555
  %1640 = vst [vmem:[#allocation1] ss:$4 sm:$0xff] %v1620
  %v1641 = vld.sshfl [vmem:[#allocation1] sm:$0xff pattern:$0x73625140]
  %1642 = vrot.lane.b32.xlu0 %v1641, 64
  %v1643 = vpop.permute.xlu0 %1642
  %v1645 = vsel %vm1625, %v1643, 0.0
  %v1646 = vpack.c.bf16 %v1632, %v1632
  %v1648 = vsel %vm732, %v1646, 0
  %1650 = vmatpush.bf16.msra.mxu0 0
  %1651 = vmatpush.bf16.msra.mxu0 0
  %1652 = vmatpush.bf16.msra.mxu0 0
  %1653 = vmatpush.bf16.msra.mxu0 0
  %1654 = vmatpush.bf16.msra.mxu0 0
  %1655 = vmatpush.bf16.msra.mxu0 0
  %1656 = vmatpush.bf16.msra.mxu0 %v1221
  %1657 = vmatpush.bf16.msra.mxu0 %v1220
  %1658 = vmatmul.bf16.gmra.mxu0 %v1648
  %v1659 = vpop.f32.mrf.mxu0
  %v1660 = vadd.f32 0.0, %v1659
  %v1661 = vpop.f32.mrf.mxu0
  %1662 = vdwg.mxu0
  %v1663 = vadd.f32 %v1171, %v1660
  %v1664 = vxor.u32 %v1663, 2147483648
  %v1665 = vmul.f32 %v1664, 1.442695
  %v1666 = vpow.pop %v1665
  %v1667 = vadd.f32 %v1666, 1.0
  %v1668 = vrcp.pop %v1667
  %v1669 = vmul.f32 %v1667, %v1668
  %v1670 = vsub.f32 1.0, %v1669
  %v1671 = vmul.f32 %v1668, %v1670
  %v1672 = vadd.f32 %v1668, %v1671
  %vm1673 = vweird.f32 %v1667
  %vm1674 = vweird.f32 %v1668
  %vm1675 = vmor %vm1673, %vm1674
  %v1676 = vsel %vm1675, %v1668, %v1672
  %v1677 = vand.u32 2147483647, %v1667
  %vm1678 = vcmp.eq.f32.partialorder %v1677, 8.507059e+37
  %v1679 = vand.u32 %v1667, 2147483648
  %v1680 = vor.u32 1.1754944e-38, %v1679
  %v1681 = vsel %vm1678, %v1680, %v1676
  %v1682 = vmul.f32 1.0, %v1681
  %v1683 = vtanh.pop %v1663
  %1685 = vrot.lane.b32.xlu0 %v1639, 32
  %v1686 = vpop.permute.xlu0 %1685
  %v1688 = vmul.f32 %v1682, %v1686
  %1690 = vrot.lane.b32.xlu0 %v1683, 32
  %v1691 = vpop.permute.xlu0 %1690
  %v1693 = vmul.f32 %v1682, %v1691
  %1695 = vrot.lane.b32.xlu0 %v1693, 32
  %v1696 = vpop.permute.xlu0 %1695
  %v1698 = vadd.f32 %v1688, %v1696
  %v1699 = vtanh.pop %v1698
  %1701 = vrot.lane.b32.xlu0 %v1699, 32
  %v1702 = vpop.permute.xlu0 %1701
  %v1704 = vmul.f32 %v1682, %v1702
  %v1705 = vsel %vm1198, 1, 0
  %1706 = vset.pattern.permute.xlu0 0
  %1707 = vperm.xlu0 %1706, %v1705
  %v1708 = vpop.permute.xlu0 %1707
  %vm1709 = vcmp.eq.s32.totalorder %v1708, 1
  %1711 = vst [vmem:[#allocation1] ss:$4 sm:$0xff] %v1704
  %v1712 = vld.sshfl [vmem:[#allocation1] sm:$0xff pattern:$0x73625140]
  %1713 = vrot.lane.b32.xlu0 %v1712, 64
  %v1714 = vpop.permute.xlu0 %1713
  %v1716 = vsel %vm1709, %v1714, %v1632
  %1718 = vst [vmem:[#allocation1] ss:$4 sm:$0xff] %v1698
  %v1719 = vld.sshfl [vmem:[#allocation1] sm:$0xff pattern:$0x73625140]
  %1720 = vrot.lane.b32.xlu0 %v1719, 96
  %v1721 = vpop.permute.xlu0 %1720
  %v1723 = vsel %vm1709, %v1721, %v1639
  %1724 = vst [vmem:[#allocation1] ss:$4 sm:$0xff] %v1704
  %v1725 = vld.sshfl [vmem:[#allocation1] sm:$0xff pattern:$0x73625140]
  %1726 = vrot.lane.b32.xlu0 %v1725, 64
  %v1727 = vpop.permute.xlu0 %1726
  %v1729 = vsel %vm1709, %v1727, 0.0
  %v1730 = vpack.c.bf16 %v1716, %v1716
  %v1732 = vsel %vm732, %v1730, 0
  %1734 = vmatpush.bf16.msra.mxu0 0
  %1735 = vmatpush.bf16.msra.mxu0 0
  %1736 = vmatpush.bf16.msra.mxu0 0
  %1737 = vmatpush.bf16.msra.mxu0 0
  %1738 = vmatpush.bf16.msra.mxu0 0
  %1739 = vmatpush.bf16.msra.mxu0 0
  %1740 = vmatpush.bf16.msra.mxu0 %v1221
  %1741 = vmatpush.bf16.msra.mxu0 %v1220
  %1742 = vmatmul.bf16.gmra.mxu0 %v1732
  %v1743 = vpop.f32.mrf.mxu0
  %v1744 = vadd.f32 0.0, %v1743
  %v1745 = vpop.f32.mrf.mxu0
  %1746 = vdwg.mxu0
  %v1747 = vadd.f32 %v1172, %v1744
  %v1748 = vxor.u32 %v1747, 2147483648
  %v1749 = vmul.f32 %v1748, 1.442695
  %v1750 = vpow.pop %v1749
  %v1751 = vadd.f32 %v1750, 1.0
  %v1752 = vrcp.pop %v1751
  %v1753 = vmul.f32 %v1751, %v1752
  %v1754 = vsub.f32 1.0, %v1753
  %v1755 = vmul.f32 %v1752, %v1754
  %v1756 = vadd.f32 %v1752, %v1755
  %vm1757 = vweird.f32 %v1751
  %vm1758 = vweird.f32 %v1752
  %vm1759 = vmor %vm1757, %vm1758
  %v1760 = vsel %vm1759, %v1752, %v1756
  %v1761 = vand.u32 2147483647, %v1751
  %vm1762 = vcmp.eq.f32.partialorder %v1761, 8.507059e+37
  %v1763 = vand.u32 %v1751, 2147483648
  %v1764 = vor.u32 1.1754944e-38, %v1763
  %v1765 = vsel %vm1762, %v1764, %v1760
  %v1766 = vmul.f32 1.0, %v1765
  %v1767 = vtanh.pop %v1747
  %1769 = vrot.lane.b32.xlu0 %v1723, 32
  %v1770 = vpop.permute.xlu0 %1769
  %v1772 = vmul.f32 %v1766, %v1770
  %1774 = vrot.lane.b32.xlu0 %v1767, 32
  %v1775 = vpop.permute.xlu0 %1774
  %v1777 = vmul.f32 %v1766, %v1775
  %1779 = vrot.lane.b32.xlu0 %v1777, 32
  %v1780 = vpop.permute.xlu0 %1779
  %v1782 = vadd.f32 %v1772, %v1780
  %v1783 = vtanh.pop %v1782
  %1785 = vrot.lane.b32.xlu0 %v1783, 32
  %v1786 = vpop.permute.xlu0 %1785
  %v1788 = vmul.f32 %v1766, %v1786
  %v1789 = vsel %vm1199, 1, 0
  %1790 = vset.pattern.permute.xlu0 0
  %1791 = vperm.xlu0 %1790, %v1789
  %v1792 = vpop.permute.xlu0 %1791
  %vm1793 = vcmp.eq.s32.totalorder %v1792, 1
  %1795 = vst [vmem:[#allocation1] ss:$4 sm:$0xff] %v1788
  %v1796 = vld.sshfl [vmem:[#allocation1] sm:$0xff pattern:$0x73625140]
  %1797 = vrot.lane.b32.xlu0 %v1796, 64
  %v1798 = vpop.permute.xlu0 %1797
  %v1800 = vsel %vm1793, %v1798, %v1716
  %1802 = vst [vmem:[#allocation1] ss:$4 sm:$0xff] %v1782
  %v1803 = vld.sshfl [vmem:[#allocation1] sm:$0xff pattern:$0x73625140]
  %1804 = vrot.lane.b32.xlu0 %v1803, 96
  %v1805 = vpop.permute.xlu0 %1804
  %v1807 = vsel %vm1793, %v1805, %v1723
  %1808 = vst [vmem:[#allocation1] ss:$4 sm:$0xff] %v1788
  %v1809 = vld.sshfl [vmem:[#allocation1] sm:$0xff pattern:$0x73625140]
  %1810 = vrot.lane.b32.xlu0 %v1809, 64
  %v1811 = vpop.permute.xlu0 %1810
  %v1813 = vsel %vm1793, %v1811, 0.0
  %v1814 = vpack.c.bf16 %v1800, %v1800
  %v1816 = vsel %vm732, %v1814, 0
  %1818 = vmatpush.bf16.msra.mxu0 0
  %1819 = vmatpush.bf16.msra.mxu0 0
  %1820 = vmatpush.bf16.msra.mxu0 0
  %1821 = vmatpush.bf16.msra.mxu0 0
  %1822 = vmatpush.bf16.msra.mxu0 0
  %1823 = vmatpush.bf16.msra.mxu0 0
  %1824 = vmatpush.bf16.msra.mxu0 %v1221
  %1825 = vmatpush.bf16.msra.mxu0 %v1220
  %1826 = vmatmul.bf16.gmra.mxu0 %v1816
  %v1827 = vpop.f32.mrf.mxu0
  %v1828 = vadd.f32 0.0, %v1827
  %v1829 = vpop.f32.mrf.mxu0
  %1830 = vdwg.mxu0
  %v1831 = vadd.f32 %v1173, %v1828
  %v1832 = vxor.u32 %v1831, 2147483648
  %v1833 = vmul.f32 %v1832, 1.442695
  %v1834 = vpow.pop %v1833
  %v1835 = vadd.f32 %v1834, 1.0
  %v1836 = vrcp.pop %v1835
  %v1837 = vmul.f32 %v1835, %v1836
  %v1838 = vsub.f32 1.0, %v1837
  %v1839 = vmul.f32 %v1836, %v1838
  %v1840 = vadd.f32 %v1836, %v1839
  %vm1841 = vweird.f32 %v1835
  %vm1842 = vweird.f32 %v1836
  %vm1843 = vmor %vm1841, %vm1842
  %v1844 = vsel %vm1843, %v1836, %v1840
  %v1845 = vand.u32 2147483647, %v1835
  %vm1846 = vcmp.eq.f32.partialorder %v1845, 8.507059e+37
  %v1847 = vand.u32 %v1835, 2147483648
  %v1848 = vor.u32 1.1754944e-38, %v1847
  %v1849 = vsel %vm1846, %v1848, %v1844
  %v1850 = vmul.f32 1.0, %v1849
  %v1851 = vtanh.pop %v1831
  %1853 = vrot.lane.b32.xlu0 %v1807, 32
  %v1854 = vpop.permute.xlu0 %1853
  %v1856 = vmul.f32 %v1850, %v1854
  %1858 = vrot.lane.b32.xlu0 %v1851, 32
  %v1859 = vpop.permute.xlu0 %1858
  %v1861 = vmul.f32 %v1850, %v1859
  %1863 = vrot.lane.b32.xlu0 %v1861, 32
  %v1864 = vpop.permute.xlu0 %1863
  %v1866 = vadd.f32 %v1856, %v1864
  %v1867 = vtanh.pop %v1866
  %1869 = vrot.lane.b32.xlu0 %v1867, 32
  %v1870 = vpop.permute.xlu0 %1869
  %v1872 = vmul.f32 %v1850, %v1870
  %v1873 = vsel %vm1200, 1, 0
  %1874 = vset.pattern.permute.xlu0 0
  %1875 = vperm.xlu0 %1874, %v1873
  %v1876 = vpop.permute.xlu0 %1875
  %vm1877 = vcmp.eq.s32.totalorder %v1876, 1
  %1879 = vst [vmem:[#allocation1] ss:$4 sm:$0xff] %v1872
  %v1880 = vld.sshfl [vmem:[#allocation1] sm:$0xff pattern:$0x73625140]
  %1881 = vrot.lane.b32.xlu0 %v1880, 64
  %v1882 = vpop.permute.xlu0 %1881
  %v1884 = vsel %vm1877, %v1882, %v1800
  %1886 = vst [vmem:[#allocation1] ss:$4 sm:$0xff] %v1866
  %v1887 = vld.sshfl [vmem:[#allocation1] sm:$0xff pattern:$0x73625140]
  %1888 = vrot.lane.b32.xlu0 %v1887, 96
  %v1889 = vpop.permute.xlu0 %1888
  %v1891 = vsel %vm1877, %v1889, %v1807
  %1892 = vst [vmem:[#allocation1] ss:$4 sm:$0xff] %v1872
  %v1893 = vld.sshfl [vmem:[#allocation1] sm:$0xff pattern:$0x73625140]
  %1894 = vrot.lane.b32.xlu0 %v1893, 64
  %v1895 = vpop.permute.xlu0 %1894
  %v1897 = vsel %vm1877, %v1895, 0.0
  %v1898 = vpack.c.bf16 %v1884, %v1884
  %v1900 = vsel %vm732, %v1898, 0
  %1902 = vmatpush.bf16.msra.mxu0 0
  %1903 = vmatpush.bf16.msra.mxu0 0
  %1904 = vmatpush.bf16.msra.mxu0 0
  %1905 = vmatpush.bf16.msra.mxu0 0
  %1906 = vmatpush.bf16.msra.mxu0 0
  %1907 = vmatpush.bf16.msra.mxu0 0
  %1908 = vmatpush.bf16.msra.mxu0 %v1221
  %1909 = vmatpush.bf16.msra.mxu0 %v1220
  %1910 = vmatmul.bf16.gmra.mxu0 %v1900
  %v1911 = vpop.f32.mrf.mxu0
  %v1912 = vadd.f32 0.0, %v1911
  %v1913 = vpop.f32.mrf.mxu0
  %1914 = vdwg.mxu0
  %v1915 = vadd.f32 %v1160, %v1912
  %v1916 = vxor.u32 %v1915, 2147483648
  %v1917 = vmul.f32 %v1916, 1.442695
  %v1918 = vpow.pop %v1917
  %v1919 = vadd.f32 %v1918, 1.0
  %v1920 = vrcp.pop %v1919
  %v1921 = vmul.f32 %v1919, %v1920
  %v1922 = vsub.f32 1.0, %v1921
  %v1923 = vmul.f32 %v1920, %v1922
  %v1924 = vadd.f32 %v1920, %v1923
  %vm1925 = vweird.f32 %v1919
  %vm1926 = vweird.f32 %v1920
  %vm1927 = vmor %vm1925, %vm1926
  %v1928 = vsel %vm1927, %v1920, %v1924
  %v1929 = vand.u32 2147483647, %v1919
  %vm1930 = vcmp.eq.f32.partialorder %v1929, 8.507059e+37
  %v1931 = vand.u32 %v1919, 2147483648
  %v1932 = vor.u32 1.1754944e-38, %v1931
  %v1933 = vsel %vm1930, %v1932, %v1928
  %v1934 = vmul.f32 1.0, %v1933
  %v1935 = vtanh.pop %v1915
  %1937 = vrot.lane.b32.xlu0 %v1891, 32
  %v1938 = vpop.permute.xlu0 %1937
  %v1940 = vmul.f32 %v1934, %v1938
  %1942 = vrot.lane.b32.xlu0 %v1935, 32
  %v1943 = vpop.permute.xlu0 %1942
  %v1945 = vmul.f32 %v1934, %v1943
  %1947 = vrot.lane.b32.xlu0 %v1945, 32
  %v1948 = vpop.permute.xlu0 %1947
  %v1950 = vadd.f32 %v1940, %v1948
  %v1951 = vtanh.pop %v1950
  %1953 = vrot.lane.b32.xlu0 %v1951, 32
  %v1954 = vpop.permute.xlu0 %1953
  %v1956 = vmul.f32 %v1934, %v1954
  %v1957 = vsel %vm1201, 1, 0
  %1958 = vset.pattern.permute.xlu0 0
  %1959 = vperm.xlu0 %1958, %v1957
  %v1960 = vpop.permute.xlu0 %1959
  %vm1961 = vcmp.eq.s32.totalorder %v1960, 1
  %1963 = vst [vmem:[#allocation1] ss:$4 sm:$0xff] %v1956
  %v1964 = vld.sshfl [vmem:[#allocation1] sm:$0xff pattern:$0x73625140]
  %1965 = vrot.lane.b32.xlu0 %v1964, 64
  %v1966 = vpop.permute.xlu0 %1965
  %v1968 = vsel %vm1961, %v1966, %v1884
  %1970 = vst [vmem:[#allocation1] ss:$4 sm:$0xff] %v1950
  %v1971 = vld.sshfl [vmem:[#allocation1] sm:$0xff pattern:$0x73625140]
  %1972 = vrot.lane.b32.xlu0 %v1971, 96
  %v1973 = vpop.permute.xlu0 %1972
  %v1975 = vsel %vm1961, %v1973, %v1891
  %1976 = vst [vmem:[#allocation1] ss:$4 sm:$0xff] %v1956
  %v1977 = vld.sshfl [vmem:[#allocation1] sm:$0xff pattern:$0x73625140]
  %1978 = vrot.lane.b32.xlu0 %v1977, 64
  %v1979 = vpop.permute.xlu0 %1978
  %v1981 = vsel %vm1961, %v1979, 0.0
  %v1982 = vpack.c.bf16 %v1968, %v1968
  %v1984 = vsel %vm732, %v1982, 0
  %1986 = vmatpush.bf16.msra.mxu0 0
  %1987 = vmatpush.bf16.msra.mxu0 0
  %1988 = vmatpush.bf16.msra.mxu0 0
  %1989 = vmatpush.bf16.msra.mxu0 0
  %1990 = vmatpush.bf16.msra.mxu0 0
  %1991 = vmatpush.bf16.msra.mxu0 0
  %1992 = vmatpush.bf16.msra.mxu0 %v1221
  %1993 = vmatpush.bf16.msra.mxu0 %v1220
  %1994 = vmatmul.bf16.gmra.mxu0 %v1984
  %v1995 = vpop.f32.mrf.mxu0
  %v1996 = vadd.f32 0.0, %v1995
  %v1997 = vpop.f32.mrf.mxu0
  %1998 = vdwg.mxu0
  %v1999 = vadd.f32 %v1174, %v1996
  %v2000 = vxor.u32 %v1999, 2147483648
  %v2001 = vmul.f32 %v2000, 1.442695
  %v2002 = vpow.pop %v2001
  %v2003 = vadd.f32 %v2002, 1.0
  %v2004 = vrcp.pop %v2003
  %v2005 = vmul.f32 %v2003, %v2004
  %v2006 = vsub.f32 1.0, %v2005
  %v2007 = vmul.f32 %v2004, %v2006
  %v2008 = vadd.f32 %v2004, %v2007
  %vm2009 = vweird.f32 %v2003
  %vm2010 = vweird.f32 %v2004
  %vm2011 = vmor %vm2009, %vm2010
  %v2012 = vsel %vm2011, %v2004, %v2008
  %v2013 = vand.u32 2147483647, %v2003
  %vm2014 = vcmp.eq.f32.partialorder %v2013, 8.507059e+37
  %v2015 = vand.u32 %v2003, 2147483648
  %v2016 = vor.u32 1.1754944e-38, %v2015
  %v2017 = vsel %vm2014, %v2016, %v2012
  %v2018 = vmul.f32 1.0, %v2017
  %v2019 = vtanh.pop %v1999
  %2021 = vrot.lane.b32.xlu0 %v1975, 32
  %v2022 = vpop.permute.xlu0 %2021
  %v2024 = vmul.f32 %v2018, %v2022
  %2026 = vrot.lane.b32.xlu0 %v2019, 32
  %v2027 = vpop.permute.xlu0 %2026
  %v2029 = vmul.f32 %v2018, %v2027
  %2031 = vrot.lane.b32.xlu0 %v2029, 32
  %v2032 = vpop.permute.xlu0 %2031
  %v2034 = vadd.f32 %v2024, %v2032
  %v2035 = vtanh.pop %v2034
  %2037 = vrot.lane.b32.xlu0 %v2035, 32
  %v2038 = vpop.permute.xlu0 %2037
  %v2040 = vmul.f32 %v2018, %v2038
  %v2041 = vsel %vm1202, 1, 0
  %2042 = vset.pattern.permute.xlu0 0
  %2043 = vperm.xlu0 %2042, %v2041
  %v2044 = vpop.permute.xlu0 %2043
  %vm2045 = vcmp.eq.s32.totalorder %v2044, 1
  %2047 = vst [vmem:[#allocation1] ss:$4 sm:$0xff] %v2040
  %v2048 = vld.sshfl [vmem:[#allocation1] sm:$0xff pattern:$0x73625140]
  %2049 = vrot.lane.b32.xlu0 %v2048, 64
  %v2050 = vpop.permute.xlu0 %2049
  %v2052 = vsel %vm2045, %v2050, %v1968
  %2054 = vst [vmem:[#allocation1] ss:$4 sm:$0xff] %v2034
  %v2055 = vld.sshfl [vmem:[#allocation1] sm:$0xff pattern:$0x73625140]
  %2056 = vrot.lane.b32.xlu0 %v2055, 96
  %v2057 = vpop.permute.xlu0 %2056
  %v2059 = vsel %vm2045, %v2057, %v1975
  %2060 = vst [vmem:[#allocation1] ss:$4 sm:$0xff] %v2040
  %v2061 = vld.sshfl [vmem:[#allocation1] sm:$0xff pattern:$0x73625140]
  %2062 = vrot.lane.b32.xlu0 %v2061, 64
  %v2063 = vpop.permute.xlu0 %2062
  %v2065 = vsel %vm2045, %v2063, 0.0
  %v2066 = vpack.c.bf16 %v2052, %v2052
  %v2068 = vsel %vm732, %v2066, 0
  %2070 = vmatpush.bf16.msra.mxu0 0
  %2071 = vmatpush.bf16.msra.mxu0 0
  %2072 = vmatpush.bf16.msra.mxu0 0
  %2073 = vmatpush.bf16.msra.mxu0 0
  %2074 = vmatpush.bf16.msra.mxu0 0
  %2075 = vmatpush.bf16.msra.mxu0 0
  %2076 = vmatpush.bf16.msra.mxu0 %v1221
  %2077 = vmatpush.bf16.msra.mxu0 %v1220
  %2078 = vmatmul.bf16.gmra.mxu0 %v2068
  %v2079 = vpop.f32.mrf.mxu0
  %v2080 = vadd.f32 0.0, %v2079
  %v2081 = vpop.f32.mrf.mxu0
  %2082 = vdwg.mxu0
  %v2083 = vadd.f32 %v1175, %v2080
  %v2084 = vxor.u32 %v2083, 2147483648
  %v2085 = vmul.f32 %v2084, 1.442695
  %v2086 = vpow.pop %v2085
  %v2087 = vadd.f32 %v2086, 1.0
  %v2088 = vrcp.pop %v2087
  %v2089 = vmul.f32 %v2087, %v2088
  %v2090 = vsub.f32 1.0, %v2089
  %v2091 = vmul.f32 %v2088, %v2090
  %v2092 = vadd.f32 %v2088, %v2091
  %vm2093 = vweird.f32 %v2087
  %vm2094 = vweird.f32 %v2088
  %vm2095 = vmor %vm2093, %vm2094
  %v2096 = vsel %vm2095, %v2088, %v2092
  %v2097 = vand.u32 2147483647, %v2087
  %vm2098 = vcmp.eq.f32.partialorder %v2097, 8.507059e+37
  %v2099 = vand.u32 %v2087, 2147483648
  %v2100 = vor.u32 1.1754944e-38, %v2099
  %v2101 = vsel %vm2098, %v2100, %v2096
  %v2102 = vmul.f32 1.0, %v2101
  %v2103 = vtanh.pop %v2083
  %2105 = vrot.lane.b32.xlu0 %v2059, 32
  %v2106 = vpop.permute.xlu0 %2105
  %v2108 = vmul.f32 %v2102, %v2106
  %2110 = vrot.lane.b32.xlu0 %v2103, 32
  %v2111 = vpop.permute.xlu0 %2110
  %v2113 = vmul.f32 %v2102, %v2111
  %2115 = vrot.lane.b32.xlu0 %v2113, 32
  %v2116 = vpop.permute.xlu0 %2115
  %v2118 = vadd.f32 %v2108, %v2116
  %v2119 = vtanh.pop %v2118
  %2121 = vrot.lane.b32.xlu0 %v2119, 32
  %v2122 = vpop.permute.xlu0 %2121
  %v2124 = vmul.f32 %v2102, %v2122
  %v2125 = vsel %vm1203, 1, 0
  %2126 = vset.pattern.permute.xlu0 0
  %2127 = vperm.xlu0 %2126, %v2125
  %v2128 = vpop.permute.xlu0 %2127
  %vm2129 = vcmp.eq.s32.totalorder %v2128, 1
  %2131 = vst [vmem:[#allocation1] ss:$4 sm:$0xff] %v2124
  %v2132 = vld.sshfl [vmem:[#allocation1] sm:$0xff pattern:$0x73625140]
  %2133 = vrot.lane.b32.xlu0 %v2132, 64
  %v2134 = vpop.permute.xlu0 %2133
  %v2136 = vsel %vm2129, %v2134, %v2052
  %2138 = vst [vmem:[#allocation1] ss:$4 sm:$0xff] %v2118
  %v2139 = vld.sshfl [vmem:[#allocation1] sm:$0xff pattern:$0x73625140]
  %2140 = vrot.lane.b32.xlu0 %v2139, 96
  %v2141 = vpop.permute.xlu0 %2140
  %v2143 = vsel %vm2129, %v2141, %v2059
  %2144 = vst [vmem:[#allocation1] ss:$4 sm:$0xff] %v2124
  %v2145 = vld.sshfl [vmem:[#allocation1] sm:$0xff pattern:$0x73625140]
  %2146 = vrot.lane.b32.xlu0 %v2145, 64
  %v2147 = vpop.permute.xlu0 %2146
  %v2149 = vsel %vm2129, %v2147, 0.0
  %v2150 = vpack.c.bf16 %v2136, %v2136
  %v2152 = vsel %vm732, %v2150, 0
  %2154 = vmatpush.bf16.msra.mxu0 0
  %2155 = vmatpush.bf16.msra.mxu0 0
  %2156 = vmatpush.bf16.msra.mxu0 0
  %2157 = vmatpush.bf16.msra.mxu0 0
  %2158 = vmatpush.bf16.msra.mxu0 0
  %2159 = vmatpush.bf16.msra.mxu0 0
  %2160 = vmatpush.bf16.msra.mxu0 %v1221
  %2161 = vmatpush.bf16.msra.mxu0 %v1220
  %2162 = vmatmul.bf16.gmra.mxu0 %v2152
  %v2163 = vpop.f32.mrf.mxu0
  %v2164 = vadd.f32 0.0, %v2163
  %v2165 = vpop.f32.mrf.mxu0
  %2166 = vdwg.mxu0
  %v2167 = vadd.f32 %v1176, %v2164
  %v2168 = vxor.u32 %v2167, 2147483648
  %v2169 = vmul.f32 %v2168, 1.442695
  %v2170 = vpow.pop %v2169
  %v2171 = vadd.f32 %v2170, 1.0
  %v2172 = vrcp.pop %v2171
  %v2173 = vmul.f32 %v2171, %v2172
  %v2174 = vsub.f32 1.0, %v2173
  %v2175 = vmul.f32 %v2172, %v2174
  %v2176 = vadd.f32 %v2172, %v2175
  %vm2177 = vweird.f32 %v2171
  %vm2178 = vweird.f32 %v2172
  %vm2179 = vmor %vm2177, %vm2178
  %v2180 = vsel %vm2179, %v2172, %v2176
  %v2181 = vand.u32 2147483647, %v2171
  %vm2182 = vcmp.eq.f32.partialorder %v2181, 8.507059e+37
  %v2183 = vand.u32 %v2171, 2147483648
  %v2184 = vor.u32 1.1754944e-38, %v2183
  %v2185 = vsel %vm2182, %v2184, %v2180
  %v2186 = vmul.f32 1.0, %v2185
  %v2187 = vtanh.pop %v2167
  %2189 = vrot.lane.b32.xlu0 %v2143, 32
  %v2190 = vpop.permute.xlu0 %2189
  %v2192 = vmul.f32 %v2186, %v2190
  %2194 = vrot.lane.b32.xlu0 %v2187, 32
  %v2195 = vpop.permute.xlu0 %2194
  %v2197 = vmul.f32 %v2186, %v2195
  %2199 = vrot.lane.b32.xlu0 %v2197, 32
  %v2200 = vpop.permute.xlu0 %2199
  %v2202 = vadd.f32 %v2192, %v2200
  %v2203 = vtanh.pop %v2202
  %2205 = vrot.lane.b32.xlu0 %v2203, 32
  %v2206 = vpop.permute.xlu0 %2205
  %v2208 = vmul.f32 %v2186, %v2206
  %v2209 = vsel %vm1204, 1, 0
  %2210 = vset.pattern.permute.xlu0 0
  %2211 = vperm.xlu0 %2210, %v2209
  %v2212 = vpop.permute.xlu0 %2211
  %vm2213 = vcmp.eq.s32.totalorder %v2212, 1
  %2215 = vst [vmem:[#allocation1] ss:$4 sm:$0xff] %v2208
  %v2216 = vld.sshfl [vmem:[#allocation1] sm:$0xff pattern:$0x73625140]
  %2217 = vrot.lane.b32.xlu0 %v2216, 64
  %v2218 = vpop.permute.xlu0 %2217
  %v2220 = vsel %vm2213, %v2218, %v2136
  %2222 = vst [vmem:[#allocation1] ss:$4 sm:$0xff] %v2202
  %v2223 = vld.sshfl [vmem:[#allocation1] sm:$0xff pattern:$0x73625140]
  %2224 = vrot.lane.b32.xlu0 %v2223, 96
  %v2225 = vpop.permute.xlu0 %2224
  %v2227 = vsel %vm2213, %v2225, %v2143
  %2228 = vst [vmem:[#allocation1] ss:$4 sm:$0xff] %v2208
  %v2229 = vld.sshfl [vmem:[#allocation1] sm:$0xff pattern:$0x73625140]
  %2230 = vrot.lane.b32.xlu0 %v2229, 64
  %v2231 = vpop.permute.xlu0 %2230
  %v2233 = vsel %vm2213, %v2231, 0.0
  %v2234 = vpack.c.bf16 %v2220, %v2220
  %v2236 = vsel %vm732, %v2234, 0
  %2238 = vmatpush.bf16.msra.mxu0 0
  %2239 = vmatpush.bf16.msra.mxu0 0
  %2240 = vmatpush.bf16.msra.mxu0 0
  %2241 = vmatpush.bf16.msra.mxu0 0
  %2242 = vmatpush.bf16.msra.mxu0 0
  %2243 = vmatpush.bf16.msra.mxu0 0
  %2244 = vmatpush.bf16.msra.mxu0 %v1221
  %2245 = vmatpush.bf16.msra.mxu0 %v1220
  %2246 = vmatmul.bf16.gmra.mxu0 %v2236
  %v2247 = vpop.f32.mrf.mxu0
  %v2248 = vadd.f32 0.0, %v2247
  %v2249 = vpop.f32.mrf.mxu0
  %2250 = vdwg.mxu0
  %v2251 = vadd.f32 %v1162, %v2248
  %v2252 = vxor.u32 %v2251, 2147483648
  %v2253 = vmul.f32 %v2252, 1.442695
  %v2254 = vpow.pop %v2253
  %v2255 = vadd.f32 %v2254, 1.0
  %v2256 = vrcp.pop %v2255
  %v2257 = vmul.f32 %v2255, %v2256
  %v2258 = vsub.f32 1.0, %v2257
  %v2259 = vmul.f32 %v2256, %v2258
  %v2260 = vadd.f32 %v2256, %v2259
  %vm2261 = vweird.f32 %v2255
  %vm2262 = vweird.f32 %v2256
  %vm2263 = vmor %vm2261, %vm2262
  %v2264 = vsel %vm2263, %v2256, %v2260
  %v2265 = vand.u32 2147483647, %v2255
  %vm2266 = vcmp.eq.f32.partialorder %v2265, 8.507059e+37
  %v2267 = vand.u32 %v2255, 2147483648
  %v2268 = vor.u32 1.1754944e-38, %v2267
  %v2269 = vsel %vm2266, %v2268, %v2264
  %v2270 = vmul.f32 1.0, %v2269
  %v2271 = vtanh.pop %v2251
  %2273 = vrot.lane.b32.xlu0 %v2227, 32
  %v2274 = vpop.permute.xlu0 %2273
  %v2276 = vmul.f32 %v2270, %v2274
  %2278 = vrot.lane.b32.xlu0 %v2271, 32
  %v2279 = vpop.permute.xlu0 %2278
  %v2281 = vmul.f32 %v2270, %v2279
  %2283 = vrot.lane.b32.xlu0 %v2281, 32
  %v2284 = vpop.permute.xlu0 %2283
  %v2286 = vadd.f32 %v2276, %v2284
  %v2287 = vtanh.pop %v2286
  %2289 = vrot.lane.b32.xlu0 %v2287, 32
  %v2290 = vpop.permute.xlu0 %2289
  %v2292 = vmul.f32 %v2270, %v2290
  %v2293 = vsel %vm1205, 1, 0
  %2294 = vset.pattern.permute.xlu0 0
  %2295 = vperm.xlu0 %2294, %v2293
  %v2296 = vpop.permute.xlu0 %2295
  %vm2297 = vcmp.eq.s32.totalorder %v2296, 1
  %2299 = vst [vmem:[#allocation1] ss:$4 sm:$0xff] %v2292
  %v2300 = vld.sshfl [vmem:[#allocation1] sm:$0xff pattern:$0x73625140]
  %2301 = vrot.lane.b32.xlu0 %v2300, 64
  %v2302 = vpop.permute.xlu0 %2301
  %v2304 = vsel %vm2297, %v2302, %v2220
  %2306 = vst [vmem:[#allocation1] ss:$4 sm:$0xff] %v2286
  %v2307 = vld.sshfl [vmem:[#allocation1] sm:$0xff pattern:$0x73625140]
  %2308 = vrot.lane.b32.xlu0 %v2307, 96
  %v2309 = vpop.permute.xlu0 %2308
  %v2311 = vsel %vm2297, %v2309, %v2227
  %2312 = vst [vmem:[#allocation1] ss:$4 sm:$0xff] %v2292
  %v2313 = vld.sshfl [vmem:[#allocation1] sm:$0xff pattern:$0x73625140]
  %2314 = vrot.lane.b32.xlu0 %v2313, 64
  %v2315 = vpop.permute.xlu0 %2314
  %v2317 = vsel %vm2297, %v2315, 0.0
  %v2318 = vpack.c.bf16 %v2304, %v2304
  %v2320 = vsel %vm732, %v2318, 0
  %2322 = vmatpush.bf16.msra.mxu0 0
  %2323 = vmatpush.bf16.msra.mxu0 0
  %2324 = vmatpush.bf16.msra.mxu0 0
  %2325 = vmatpush.bf16.msra.mxu0 0
  %2326 = vmatpush.bf16.msra.mxu0 0
  %2327 = vmatpush.bf16.msra.mxu0 0
  %2328 = vmatpush.bf16.msra.mxu0 %v1221
  %2329 = vmatpush.bf16.msra.mxu0 %v1220
  %2330 = vmatmul.bf16.gmra.mxu0 %v2320
  %v2331 = vpop.f32.mrf.mxu0
  %v2332 = vadd.f32 0.0, %v2331
  %v2333 = vpop.f32.mrf.mxu0
  %2334 = vdwg.mxu0
  %v2335 = vadd.f32 %v1177, %v2332
  %v2336 = vxor.u32 %v2335, 2147483648
  %v2337 = vmul.f32 %v2336, 1.442695
  %v2338 = vpow.pop %v2337
  %v2339 = vadd.f32 %v2338, 1.0
  %v2340 = vrcp.pop %v2339
  %v2341 = vmul.f32 %v2339, %v2340
  %v2342 = vsub.f32 1.0, %v2341
  %v2343 = vmul.f32 %v2340, %v2342
  %v2344 = vadd.f32 %v2340, %v2343
  %vm2345 = vweird.f32 %v2339
  %vm2346 = vweird.f32 %v2340
  %vm2347 = vmor %vm2345, %vm2346
  %v2348 = vsel %vm2347, %v2340, %v2344
  %v2349 = vand.u32 2147483647, %v2339
  %vm2350 = vcmp.eq.f32.partialorder %v2349, 8.507059e+37
  %v2351 = vand.u32 %v2339, 2147483648
  %v2352 = vor.u32 1.1754944e-38, %v2351
  %v2353 = vsel %vm2350, %v2352, %v2348
  %v2354 = vmul.f32 1.0, %v2353
  %v2355 = vtanh.pop %v2335
  %2357 = vrot.lane.b32.xlu0 %v2311, 32
  %v2358 = vpop.permute.xlu0 %2357
  %v2360 = vmul.f32 %v2354, %v2358
  %2362 = vrot.lane.b32.xlu0 %v2355, 32
  %v2363 = vpop.permute.xlu0 %2362
  %v2365 = vmul.f32 %v2354, %v2363
  %2367 = vrot.lane.b32.xlu0 %v2365, 32
  %v2368 = vpop.permute.xlu0 %2367
  %v2370 = vadd.f32 %v2360, %v2368
  %v2371 = vtanh.pop %v2370
  %2373 = vrot.lane.b32.xlu0 %v2371, 32
  %v2374 = vpop.permute.xlu0 %2373
  %v2376 = vmul.f32 %v2354, %v2374
  %v2377 = vsel %vm1206, 1, 0
  %2378 = vset.pattern.permute.xlu0 0
  %2379 = vperm.xlu0 %2378, %v2377
  %v2380 = vpop.permute.xlu0 %2379
  %vm2381 = vcmp.eq.s32.totalorder %v2380, 1
  %2383 = vst [vmem:[#allocation1] ss:$4 sm:$0xff] %v2376
  %v2384 = vld.sshfl [vmem:[#allocation1] sm:$0xff pattern:$0x73625140]
  %2385 = vrot.lane.b32.xlu0 %v2384, 64
  %v2386 = vpop.permute.xlu0 %2385
  %v2388 = vsel %vm2381, %v2386, %v2304
  %2390 = vst [vmem:[#allocation1] ss:$4 sm:$0xff] %v2370
  %v2391 = vld.sshfl [vmem:[#allocation1] sm:$0xff pattern:$0x73625140]
  %2392 = vrot.lane.b32.xlu0 %v2391, 96
  %v2393 = vpop.permute.xlu0 %2392
  %v2395 = vsel %vm2381, %v2393, %v2311
  %2396 = vst [vmem:[#allocation1] ss:$4 sm:$0xff] %v2376
  %v2397 = vld.sshfl [vmem:[#allocation1] sm:$0xff pattern:$0x73625140]
  %2398 = vrot.lane.b32.xlu0 %v2397, 64
  %v2399 = vpop.permute.xlu0 %2398
  %v2401 = vsel %vm2381, %v2399, 0.0
  %v2402 = vpack.c.bf16 %v2388, %v2388
  %v2404 = vsel %vm732, %v2402, 0
  %2406 = vmatpush.bf16.msra.mxu0 0
  %2407 = vmatpush.bf16.msra.mxu0 0
  %2408 = vmatpush.bf16.msra.mxu0 0
  %2409 = vmatpush.bf16.msra.mxu0 0
  %2410 = vmatpush.bf16.msra.mxu0 0
  %2411 = vmatpush.bf16.msra.mxu0 0
  %2412 = vmatpush.bf16.msra.mxu0 %v1221
  %2413 = vmatpush.bf16.msra.mxu0 %v1220
  %2414 = vmatmul.bf16.gmra.mxu0 %v2404
  %v2415 = vpop.f32.mrf.mxu0
  %v2416 = vadd.f32 0.0, %v2415
  %v2417 = vpop.f32.mrf.mxu0
  %2418 = vdwg.mxu0
  %v2419 = vadd.f32 %v1178, %v2416
  %v2420 = vxor.u32 %v2419, 2147483648
  %v2421 = vmul.f32 %v2420, 1.442695
  %v2422 = vpow.pop %v2421
  %v2423 = vadd.f32 %v2422, 1.0
  %v2424 = vrcp.pop %v2423
  %v2425 = vmul.f32 %v2423, %v2424
  %v2426 = vsub.f32 1.0, %v2425
  %v2427 = vmul.f32 %v2424, %v2426
  %v2428 = vadd.f32 %v2424, %v2427
  %vm2429 = vweird.f32 %v2423
  %vm2430 = vweird.f32 %v2424
  %vm2431 = vmor %vm2429, %vm2430
  %v2432 = vsel %vm2431, %v2424, %v2428
  %v2433 = vand.u32 2147483647, %v2423
  %vm2434 = vcmp.eq.f32.partialorder %v2433, 8.507059e+37
  %v2435 = vand.u32 %v2423, 2147483648
  %v2436 = vor.u32 1.1754944e-38, %v2435
  %v2437 = vsel %vm2434, %v2436, %v2432
  %v2438 = vmul.f32 1.0, %v2437
  %v2439 = vtanh.pop %v2419
  %2441 = vrot.lane.b32.xlu0 %v2395, 32
  %v2442 = vpop.permute.xlu0 %2441
  %v2444 = vmul.f32 %v2438, %v2442
  %2446 = vrot.lane.b32.xlu0 %v2439, 32
  %v2447 = vpop.permute.xlu0 %2446
  %v2449 = vmul.f32 %v2438, %v2447
  %2451 = vrot.lane.b32.xlu0 %v2449, 32
  %v2452 = vpop.permute.xlu0 %2451
  %v2454 = vadd.f32 %v2444, %v2452
  %v2455 = vtanh.pop %v2454
  %2457 = vrot.lane.b32.xlu0 %v2455, 32
  %v2458 = vpop.permute.xlu0 %2457
  %v2460 = vmul.f32 %v2438, %v2458
  %v2461 = vsel %vm1207, 1, 0
  %2462 = vset.pattern.permute.xlu0 0
  %2463 = vperm.xlu0 %2462, %v2461
  %v2464 = vpop.permute.xlu0 %2463
  %vm2465 = vcmp.eq.s32.totalorder %v2464, 1
  %2467 = vst [vmem:[#allocation1] ss:$4 sm:$0xff] %v2460
  %v2468 = vld.sshfl [vmem:[#allocation1] sm:$0xff pattern:$0x73625140]
  %2469 = vrot.lane.b32.xlu0 %v2468, 64
  %v2470 = vpop.permute.xlu0 %2469
  %v2472 = vsel %vm2465, %v2470, %v2388
  %2474 = vst [vmem:[#allocation1] ss:$4 sm:$0xff] %v2454
  %v2475 = vld.sshfl [vmem:[#allocation1] sm:$0xff pattern:$0x73625140]
  %2476 = vrot.lane.b32.xlu0 %v2475, 96
  %v2477 = vpop.permute.xlu0 %2476
  %v2479 = vsel %vm2465, %v2477, %v2395
  %2480 = vst [vmem:[#allocation1] ss:$4 sm:$0xff] %v2460
  %v2481 = vld.sshfl [vmem:[#allocation1] sm:$0xff pattern:$0x73625140]
  %2482 = vrot.lane.b32.xlu0 %v2481, 64
  %v2483 = vpop.permute.xlu0 %2482
  %v2485 = vsel %vm2465, %v2483, 0.0
  %v2486 = vpack.c.bf16 %v2472, %v2472
  %v2488 = vsel %vm732, %v2486, 0
  %2490 = vmatpush.bf16.msra.mxu0 0
  %2491 = vmatpush.bf16.msra.mxu0 0
  %2492 = vmatpush.bf16.msra.mxu0 0
  %2493 = vmatpush.bf16.msra.mxu0 0
  %2494 = vmatpush.bf16.msra.mxu0 0
  %2495 = vmatpush.bf16.msra.mxu0 0
  %2496 = vmatpush.bf16.msra.mxu0 %v1221
  %2497 = vmatpush.bf16.msra.mxu0 %v1220
  %2498 = vmatmul.bf16.gmra.mxu0 %v2488
  %v2499 = vpop.f32.mrf.mxu0
  %v2500 = vadd.f32 0.0, %v2499
  %v2501 = vpop.f32.mrf.mxu0
  %2502 = vdwg.mxu0
  %v2503 = vadd.f32 %v1179, %v2500
  %v2504 = vxor.u32 %v2503, 2147483648
  %v2505 = vmul.f32 %v2504, 1.442695
  %v2506 = vpow.pop %v2505
  %v2507 = vadd.f32 %v2506, 1.0
  %v2508 = vrcp.pop %v2507
  %v2509 = vmul.f32 %v2507, %v2508
  %v2510 = vsub.f32 1.0, %v2509
  %v2511 = vmul.f32 %v2508, %v2510
  %v2512 = vadd.f32 %v2508, %v2511
  %vm2513 = vweird.f32 %v2507
  %vm2514 = vweird.f32 %v2508
  %vm2515 = vmor %vm2513, %vm2514
  %v2516 = vsel %vm2515, %v2508, %v2512
  %v2517 = vand.u32 2147483647, %v2507
  %vm2518 = vcmp.eq.f32.partialorder %v2517, 8.507059e+37
  %v2519 = vand.u32 %v2507, 2147483648
  %v2520 = vor.u32 1.1754944e-38, %v2519
  %v2521 = vsel %vm2518, %v2520, %v2516
  %v2522 = vmul.f32 1.0, %v2521
  %v2523 = vtanh.pop %v2503
  %2525 = vrot.lane.b32.xlu0 %v2479, 32
  %v2526 = vpop.permute.xlu0 %2525
  %v2528 = vmul.f32 %v2522, %v2526
  %2530 = vrot.lane.b32.xlu0 %v2523, 32
  %v2531 = vpop.permute.xlu0 %2530
  %v2533 = vmul.f32 %v2522, %v2531
  %2535 = vrot.lane.b32.xlu0 %v2533, 32
  %v2536 = vpop.permute.xlu0 %2535
  %v2538 = vadd.f32 %v2528, %v2536
  %v2539 = vtanh.pop %v2538
  %2541 = vrot.lane.b32.xlu0 %v2539, 32
  %v2542 = vpop.permute.xlu0 %2541
  %v2544 = vmul.f32 %v2522, %v2542
  %v2545 = vsel %vm1208, 1, 0
  %2546 = vset.pattern.permute.xlu0 0
  %2547 = vperm.xlu0 %2546, %v2545
  %v2548 = vpop.permute.xlu0 %2547
  %vm2549 = vcmp.eq.s32.totalorder %v2548, 1
  %2551 = vst [vmem:[#allocation1] ss:$4 sm:$0xff] %v2544
  %v2552 = vld.sshfl [vmem:[#allocation1] sm:$0xff pattern:$0x73625140]
  %2553 = vrot.lane.b32.xlu0 %v2552, 64
  %v2554 = vpop.permute.xlu0 %2553
  %v2556 = vsel %vm2549, %v2554, 0.0
  %v2558 = vrot.slane %v1393, 6
  %v2561 = vrot.slane %v1477, 4
  %v2564 = vrot.slane %v1561, 2
  %v2567 = vrot.slane %v1729, 6
  %v2570 = vrot.slane %v1813, 4
  %v2573 = vrot.slane %v1897, 2
  %v2576 = vrot.slane %v2065, 6
  %v2579 = vrot.slane %v2149, 4
  %v2582 = vrot.slane %v2233, 2
  %v2585 = vrot.slane %v2401, 6
  %v2588 = vrot.slane %v2485, 4
  %v2591 = vrot.slane %v2556, 2
  %vm2593 = vcmask 1041408
  %v2594 = vsel %vm2593, %v1309, %v2558
  %v2595 = vsel %vm307, %v2594, %v2561
  %vm2596 = vcmask 1045504
  %v2597 = vsel %vm2596, %v2595, %v2564
  %v2598 = vsel %vm2593, %v1645, %v2567
  %v2599 = vsel %vm307, %v2598, %v2570
  %v2600 = vsel %vm2596, %v2599, %v2573
  %v2601 = vsel %vm2593, %v1981, %v2576
  %v2602 = vsel %vm307, %v2601, %v2579
  %v2603 = vsel %vm2596, %v2602, %v2582
  %v2604 = vsel %vm2593, %v2317, %v2585
  %v2605 = vsel %vm307, %v2604, %v2588
  %v2606 = vsel %vm2596, %v2605, %v2591
  %v2607 = vpack.c.bf16 %v2600, %v2597
  %v2608 = vpack.c.bf16 %v2606, %v2603
  %v2609 = vperm.slane %v24, 1
  %v2614 = vunpack.c.l.b16 %v32
  %v2615 = vunpack.c.l.b16 %v33
  %v2616 = vunpack.c.l.b16 %v34
  %v2617 = vunpack.c.l.b16 %v35
  %v2618 = vpack.c.b16 %v2615, %v2614
  %v2619 = vpack.c.b16 %v2617, %v2616
  %v2623 = vsel %vm732, %v2607, 0
  %v2626 = vsel %vm732, %v2608, 0
  %2628 = vmatpush.bf16.msra.mxu0 0
  %2629 = vmatpush.bf16.msra.mxu0 0
  %2630 = vmatpush.bf16.msra.mxu0 0
  %2631 = vmatpush.bf16.msra.mxu0 0
  %2632 = vmatpush.bf16.msra.mxu0 0
  %2633 = vmatpush.bf16.msra.mxu0 0
  %2634 = vmatpush.bf16.msra.mxu0 %v2619
  %2635 = vmatpush.bf16.msra.mxu0 %v2618
  %2636 = vmatmul.bf16.gmra.mxu0 %v2623
  %v2637 = vpop.f32.mrf.mxu0
  %v2638 = vadd.f32 %v2609, %v2637
  %v2639 = vpop.f32.mrf.mxu0
  %v2640 = vadd.f32 %v2609, %v2639
  %2641 = vmatmul.bf16.gmra.mxu0 %v2626
  %v2642 = vpop.f32.mrf.mxu0
  %v2643 = vadd.f32 %v2609, %v2642
  %v2644 = vpop.f32.mrf.mxu0
  %v2645 = vadd.f32 %v2609, %v2644
  %2646 = vdwg.mxu0
  %2647 = vmax.xlane.f32.xlu0 %v2638
  %v2648 = vpop.xlane.xlu0 %2647
  %2649 = vmax.xlane.f32.xlu0 %v2640
  %v2650 = vpop.xlane.xlu0 %2649
  %2651 = vmax.xlane.f32.xlu0 %v2643
  %v2652 = vpop.xlane.xlu0 %2651
  %2653 = vmax.xlane.f32.xlu0 %v2645
  %v2654 = vpop.xlane.xlu0 %2653
  %v2655 = vsub.f32 %v2638, %v2648
  %v2656 = vsub.f32 %v2640, %v2650
  %v2657 = vsub.f32 %v2643, %v2652
  %v2658 = vsub.f32 %v2645, %v2654
  %v2659 = vmul.f32 %v2655, 1.442695
  %v2660 = vpow.pop %v2659
  %v2661 = vmul.f32 %v2656, 1.442695
  %v2662 = vpow.pop %v2661
  %v2663 = vmul.f32 %v2657, 1.442695
  %v2664 = vpow.pop %v2663
  %v2665 = vmul.f32 %v2658, 1.442695
  %v2666 = vpow.pop %v2665
  %2667 = vadd.xlane.f32.xlu0 %v2660
  %v2668 = vpop.xlane.xlu0 %2667
  %2669 = vadd.xlane.f32.xlu0 %v2662
  %v2670 = vpop.xlane.xlu0 %2669
  %2671 = vadd.xlane.f32.xlu0 %v2664
  %v2672 = vpop.xlane.xlu0 %2671
  %2673 = vadd.xlane.f32.xlu0 %v2666
  %v2674 = vpop.xlane.xlu0 %2673
  %v2675 = vlog2.pop %v2668
  %v2676 = vmul.f32 %v2675, 0.6931472
  %v2677 = vlog2.pop %v2670
  %v2678 = vmul.f32 %v2677, 0.6931472
  %v2679 = vlog2.pop %v2672
  %v2680 = vmul.f32 %v2679, 0.6931472
  %v2681 = vlog2.pop %v2674
  %v2682 = vmul.f32 %v2681, 0.6931472
  %v2683 = vsub.f32 %v2655, %v2676
  %v2684 = vsub.f32 %v2656, %v2678
  %v2685 = vsub.f32 %v2657, %v2680
  %v2686 = vsub.f32 %v2658, %v2682
  %2687 = vst [vmem:[%s6] sm:$0xff] %v2683
  %2688 = vst [vmem:[%s6 + $0x8] sm:$0xff] %v2684
  %2689 = vst [vmem:[%s6 + $0x10] sm:$0xff] %v2685
  %2690 = vst [vmem:[%s6 + $0x18] sm:$0xff] %v2686
  // Predicated region
  $region26: #{cnn_lstm_forward.1} parent=0 // pred_check
    _
  $region27: #{cnn_lstm_forward.1} parent=0 // pred_check_branch
    %2692 = sbr.rel (0) target = $region29
  $region28: #{cnn_lstm_forward.1} parent=0 // pred_region
    _
  $region29: #{cnn_lstm_forward.1} parent=0 // pred_fallthru
    _
  // Predicated region
  $region30: #{cnn_lstm_forward.1} parent=0 // pred_check
    _
  $region31: #{cnn_lstm_forward.1} parent=0 // pred_check_branch
    %2694 = sbr.rel (0) target = $region33
  $region32: #{cnn_lstm_forward.1} parent=0 // pred_region
    _
  $region33: #{cnn_lstm_forward.1} parent=0 // pred_fallthru
    _

</llo_original>
